<compile_context>
chip_gen: v7x
topology: tpu7x:2x2x1
jax: 0.10.0
libtpu: 0.0.40
codegen_flags: <defaults>
</compile_context>

<pallas_src>
import functools

import jax
import jax.numpy as jnp
from jax.experimental import pallas as pl
from jax.experimental.pallas import tpu as pltpu


# ------------------------------- small helpers ------------------------------- #

def _rup(x, m):
    return ((x + m - 1) // m) * m


def _cdiv(a, b):
    return -(-a // b)


def _tpu_generation():
    try:
        kind = jax.devices()[0].device_kind.lower()
    except Exception:
        return "unknown"
    if "v7" in kind or "7x" in kind:
        return "v7x"
    if "v6" in kind:
        return "v6e"
    if "v5" in kind:
        return "v5e"
    return "unknown"


def _vmem_capacity_bytes(gen):
    try:
        return int(pltpu.get_tpu_info().vmem_capacity_bytes)
    except Exception:
        # v7x has 64 MiB per TensorCore; v5e/v6e have 128 MiB.  Unknown -> conservative.
        return (64 << 20) if gen in ("v7x", "unknown") else (128 << 20)


def _vmem_need_bytes(th, w, cin, wp, cout, isz_c, isz_o):
    """Per-step VMEM estimate with Mosaic (8,128) tile padding and double-buffering."""
    sw = _rup(w, 8)
    x_blk = th * sw * _rup(cin, 128) * isz_c           # main input block
    halos = 2 * sw * _rup(cin, 128) * isz_c            # top + bottom halo rows
    o_blk = th * sw * _rup(cout, 128) * isz_o          # output block
    wts = (_rup(cin, 8) * wp + _rup(9 * wp, 8) * wp
           + _rup(wp, 8) * _rup(cout, 128)) * isz_c    # w1, w2(im2col), w3
    slab = (th + 2) * sw * wp * isz_c                  # conv1 slab scratch (single-buffered)
    col = th * sw * 9 * wp * isz_c                     # im2col scratch (single-buffered)
    # transient f32 accumulators / staged values (conservative)
    trans = (th * sw * (2 * wp + 9 * wp + _rup(cout, 128) + _rup(cin, 128)) * 4
             + (th + 2) * sw * (_rup(cin, 128) * isz_c + wp * 4))
    return 2 * (x_blk + halos + o_blk + wts) + slab + col + trans


def _pick_tile_h(n, h, w, cin, wp, cout, isz_c, isz_o, budget, min_steps):
    """Largest row tile TH <= H that fits the VMEM budget, then adjusted for megacore
    min_steps (v7x only) and snapped to a divisor of H when that costs < 2x."""
    th_fit = 1
    for th in range(h, 0, -1):
        if _vmem_need_bytes(th, w, cin, wp, cout, isz_c, isz_o) <= budget:
            th_fit = th
            break
    if n * _cdiv(h, th_fit) < min_steps:            # give both v7x TensorCores work
        th_fit = min(th_fit, max(1, _cdiv(h, _cdiv(min_steps, n))))
    best_div = max(d for d in range(1, th_fit + 1) if h % d == 0)
    if best_div * 2 >= th_fit:                       # prefer no-H-padding if close enough
        th_fit = best_div
    return th_fit


# ------------------------------- fused kernel -------------------------------- #

def _fused_bottleneck_kernel(x_ref, xt_ref, xb_ref, w1_ref, w2_ref, w3_ref,
                             o_ref, slab_ref, col_ref):
    """relu(conv1x1_3(relu(conv3x3(relu(conv1x1_1(x))))) + x) on one (batch, row-block) tile.

    x_ref  : (1, TH, W, Cin)   main input rows
    xt_ref : (1, 1,  W, Cin)   row directly above the block (clamped at the top edge)
    xb_ref : (1, 1,  W, Cin)   row directly below the block (clamped at the bottom edge)
    w1_ref : (Cin, Wp)         conv1 1x1 weight (width zero-padded to Wp = lane multiple)
    w2_ref : (9*Wp, Wp)        conv2 3x3 weight in im2col layout (tap-major, ky*3+kx)
    w3_ref : (Wp, Cout)        conv3 1x1 weight
    o_ref  : (1, TH, W, Cout)
    slab_ref: VMEM (TH+2, W, Wp)    conv1 output incl. halo rows (never hits HBM)
    col_ref : VMEM (TH, W, 9*Wp)    im2col patches (never hits HBM)
    """
    th = x_ref.shape[1]
    w = x_ref.shape[2]
    cin = x_ref.shape[3]
    wp = w1_ref.shape[1]
    cout = w3_ref.shape[1]
    cdt = slab_ref.dtype

    i = pl.program_id(1)
    nh = pl.num_programs(1)

    # ---- conv1 (1x1) + ReLU on main rows + both halo rows: ONE (TH+2)*W-row matmul ----
    x_mid = x_ref[0]                                                 # (TH, W, Cin)
    x_slab = jnp.concatenate([xt_ref[0], x_mid, xb_ref[0]], axis=0)  # (TH+2, W, Cin)
    t1 = jnp.dot(x_slab.reshape((th + 2) * w, cin), w1_ref[...],
                 preferred_element_type=jnp.float32)
    t1 = jnp.maximum(t1, 0.0).astype(cdt)
    slab_ref[...] = t1.reshape(th + 2, w, wp)        # aligned full-slab store (no +1 offset)

    # Image top/bottom zero padding: overwrite the (clamped) halo row at the edges only.
    @pl.when(i == 0)
    def _():
        slab_ref[0:1, :, :] = jnp.zeros((1, w, wp), cdt)

    @pl.when(i == nh - 1)
    def _():
        slab_ref[th + 1:th + 2, :, :] = jnp.zeros((1, w, wp), cdt)

    # ---- conv2 (3x3, stride=1, pad=1): build im2col once, then ONE big-K matmul ----
    zcol = jnp.zeros((th, 1, wp), cdt)
    for ky in range(3):
        rows = slab_ref[ky:ky + th, :, :]            # (TH, W, Wp); leading-dim slice = cheap
        for kx in range(3):
            t = ky * 3 + kx
            lo, hi = t * wp, (t + 1) * wp            # 128-aligned lane block for this tap
            if kx == 1:
                col_ref[:, :, lo:hi] = rows
            elif kx == 0:                            # needs image col c-1; zero at col 0
                col_ref[:, 0:1, lo:hi] = zcol
                col_ref[:, 1:w, lo:hi] = rows[:, 0:w - 1, :]
            else:                                    # kx == 2: image col c+1; zero at col W-1
                col_ref[:, 0:w - 1, lo:hi] = rows[:, 1:w, :]
                col_ref[:, w - 1:w, lo:hi] = zcol

    patches = col_ref[...].reshape(th * w, 9 * wp)
    t2 = jnp.dot(patches, w2_ref[...], preferred_element_type=jnp.float32)
    t2 = jnp.maximum(t2, 0.0).astype(cdt)

    # ---- conv3 (1x1) + identity residual + ReLU (SpikeResModule default path) ----
    out = jnp.dot(t2, w3_ref[...], preferred_element_type=jnp.float32)
    out = out + x_mid.reshape(th * w, cin).astype(jnp.float32)       # Cin == Cout here
    out = jnp.maximum(out, 0.0)
    o_ref[...] = out.reshape(1, th, w, cout).astype(o_ref.dtype)


# -------------------------------- entry points -------------------------------- #

@functools.partial(jax.jit, static_argnames=("compute_dtype",))
def spike_bottleneck_forward_nhwc(x_nhwc, w1_oihw, w2_oihw, w3_oihw, *,
                                  compute_dtype=jnp.bfloat16):
    """Fused SpikeBottleneck forward, NHWC in / NHWC out (hot path, no layout transposes).

    For best TPU performance Cin/Cout should be multiples of 128 (lane-dense HBM tiles);
    the bottleneck `width` is zero-padded to a multiple of 128 internally (VMEM-only dim).
    """
    n, h, w, cin = x_nhwc.shape
    width = w1_oihw.shape[0]
    cout = w3_oihw.shape[0]
    if cin != cout:
        raise ValueError("identity residual requires inplanes == planes*expansion "
                         "(downsample is None in this SpikeBottleneck path)")

    cdt = jnp.dtype(compute_dtype)
    out_dtype = x_nhwc.dtype
    wp = _rup(width, 128)                  # lane-dense bottleneck width (VMEM-only padding)

    # Weights in matmul layout, zero-padded so every matmul N/K dim is lane-dense.
    w1 = jnp.transpose(w1_oihw.reshape(width, cin), (1, 0))              # (Cin, width)
    w1 = jnp.pad(w1, ((0, 0), (0, wp - width))).astype(cdt)              # (Cin, Wp)
    w2 = jnp.transpose(w2_oihw, (2, 3, 1, 0))                            # (3,3,Ci,Co)
    w2 = jnp.pad(w2, ((0, 0), (0, 0), (0, wp - width), (0, wp - width)))
    w2 = w2.reshape(9 * wp, wp).astype(cdt)                              # im2col layout
    w3 = jnp.transpose(w3_oihw.reshape(cout, width), (1, 0))             # (width, Cout)
    w3 = jnp.pad(w3, ((0, wp - width), (0, 0))).astype(cdt)              # (Wp, Cout)

    x_c = x_nhwc.astype(cdt)               # bf16 by default: halves HBM reads; f32 MXU acc.

    # Generation-aware tile selection + VMEM budgeting.
    gen = _tpu_generation()
    cap = _vmem_capacity_bytes(gen)
    budget = int(cap * (0.35 if gen == "v7x" else 0.45))
    min_steps = 2 if gen == "v7x" else 1               # single-TC chips: biggest tile wins
    isz_c = cdt.itemsize
    isz_o = jnp.dtype(out_dtype).itemsize
    th = _pick_tile_h(n, h, w, cin, wp, cout, isz_c, isz_o, budget, min_steps)

    # H need not divide by TH: zero-pad rows (reproduces the conv's own zero padding for
    # the last real rows), slice the extra rows off afterwards.
    h_pad = _cdiv(h, th) * th
    if h_pad != h:
        x_c = jnp.pad(x_c, ((0, 0), (0, h_pad - h), (0, 0), (0, 0)))

    need = _vmem_need_bytes(th, w, cin, wp, cout, isz_c, isz_o)
    vmem_limit = int(min(max(32 << 20, 2 * need), cap - (8 << 20)))

    grid = (n, h_pad // th)
    in_specs = [
        pl.BlockSpec((1, th, w, cin), lambda b, i: (b, i, 0, 0)),
        pl.BlockSpec((1, 1, w, cin),
                     lambda b, i: (b, jnp.maximum(i * th - 1, 0), 0, 0)),
        pl.BlockSpec((1, 1, w, cin),
                     lambda b, i: (b, jnp.minimum(i * th + th, h_pad - 1), 0, 0)),
        pl.BlockSpec((cin, wp), lambda b, i: (0, 0)),
        pl.BlockSpec((9 * wp, wp), lambda b, i: (0, 0)),
        pl.BlockSpec((wp, cout), lambda b, i: (0, 0)),
    ]
    out_specs = pl.BlockSpec((1, th, w, cout), lambda b, i: (b, i, 0, 0))

    out = pl.pallas_call(
        _fused_bottleneck_kernel,
        out_shape=jax.ShapeDtypeStruct((n, h_pad, w, cout), out_dtype),
        grid=grid,
        in_specs=in_specs,
        out_specs=out_specs,
        scratch_shapes=[pltpu.VMEM((th + 2, w, wp), cdt),      # conv1 slab (+ halo rows)
                        pltpu.VMEM((th, w, 9 * wp), cdt)],      # im2col patches
        compiler_params=pltpu.CompilerParams(
            dimension_semantics=("parallel", "parallel"),
            vmem_limit_bytes=vmem_limit),
    )(x_c, x_c, x_c, w1, w2, w3)

    if h_pad != h:
        out = out[:, :h]
    return out


def spike_bottleneck_forward(x_nchw, w1, w2, w3, compute_dtype=jnp.bfloat16):
    """PyTorch-layout adapter (NCHW in / NCHW out)."""
    x = jnp.transpose(x_nchw, (0, 2, 3, 1))
    out = spike_bottleneck_forward_nhwc(x, w1, w2, w3, compute_dtype=compute_dtype)
    return jnp.transpose(out, (0, 3, 1, 2))


# ---------------------------------- reference ---------------------------------- #

def _ref_forward_nhwc(x, w1, w2, w3):
    dn = ("NHWC", "OIHW", "NHWC")
    p = jax.lax.Precision.HIGHEST
    o = jax.lax.conv_general_dilated(x, w1, (1, 1), "VALID", dimension_numbers=dn,
                                     precision=p)
    o = jnp.maximum(o, 0.0)
    o = jax.lax.conv_general_dilated(o, w2, (1, 1), ((1, 1), (1, 1)),
                                     dimension_numbers=dn, precision=p)
    o = jnp.maximum(o, 0.0)
    o = jax.lax.conv_general_dilated(o, w3, (1, 1), "VALID", dimension_numbers=dn,
                                     precision=p)
    return jnp.maximum(o + x, 0.0)


# ------------------------------------- main ------------------------------------- #

if __name__ == "__main__":
    key = jax.random.PRNGKey(0)
    kx_, k1, k2, k3 = jax.random.split(key, 4)

    # Bottleneck(inplanes=128, planes=32): width=32 (padded to 128 in VMEM),
    # out = planes*expansion = 128 -> lane-dense HBM-facing channel dims.
    batch, inplanes, planes, H, W = 2, 128, 32, 16, 16
    width = planes
    outplanes = planes * 4

    x_nhwc = jax.random.normal(kx_, (batch, H, W, inplanes), dtype=jnp.float32)
    w1 = 0.1 * jax.random.normal(k1, (width, inplanes, 1, 1), dtype=jnp.float32)
    w2 = 0.1 * jax.random.normal(k2, (width, width, 3, 3), dtype=jnp.float32)
    w3 = 0.1 * jax.random.normal(k3, (outplanes, width, 1, 1), dtype=jnp.float32)

    ref = _ref_forward_nhwc(x_nhwc, w1, w2, w3)

    # f32 compute path: tight check against the conv reference.
    out_f32 = jax.block_until_ready(
        spike_bottleneck_forward_nhwc(x_nhwc, w1, w2, w3, compute_dtype=jnp.float32))
    assert out_f32.shape == (batch, H, W, outplanes)
    assert jnp.allclose(out_f32, ref, atol=1e-3, rtol=1e-3), "f32 mismatch vs reference conv"

    # bf16 compute path (default; recommended on v6e/v7x): loose check.
    out_bf16 = jax.block_until_ready(
        spike_bottleneck_forward_nhwc(x_nhwc, w1, w2, w3))
    assert jnp.allclose(out_bf16.astype(jnp.float32), ref, atol=5e-2, rtol=5e-2), \
        "bf16 mismatch vs reference conv"

    # PyTorch-layout adapter parity (NCHW in / NCHW out).
    x_nchw = jnp.transpose(x_nhwc, (0, 3, 1, 2))
    out_nchw = jax.block_until_ready(
        spike_bottleneck_forward(x_nchw, w1, w2, w3, compute_dtype=jnp.float32))
    assert jnp.allclose(out_nchw, jnp.transpose(ref, (0, 3, 1, 2)),
                        atol=1e-3, rtol=1e-3), "NCHW adapter mismatch"

    print("KERNEL_OK")
</pallas_src>

<mosaic_0001>
module attributes {stable_mosaic.version = 11 : i64} {
  func.func @_fused_bottleneck_kernel(%arg0: i32, %arg1: i32, %arg2: memref<1x16x16x128xf32, #tpu.memory_space<vmem>>, %arg3: memref<1x1x16x128xf32, #tpu.memory_space<vmem>>, %arg4: memref<1x1x16x128xf32, #tpu.memory_space<vmem>>, %arg5: memref<128x128xf32, #tpu.memory_space<vmem>>, %arg6: memref<1152x128xf32, #tpu.memory_space<vmem>>, %arg7: memref<128x128xf32, #tpu.memory_space<vmem>>, %arg8: memref<1x16x16x128xf32, #tpu.memory_space<vmem>>, %arg9: memref<18x16x128xf32, #tpu.memory_space<vmem>>, %arg10: memref<16x16x1152xf32, #tpu.memory_space<vmem>>) attributes {dimension_semantics = [#tpu.dimension_semantics<parallel>, #tpu.dimension_semantics<parallel>], iteration_bounds = array<i64: 2, 1>, scalar_prefetch = 0 : i64, scratch_operands = 2 : i64, tpu.core_type = #tpu.core_type<tc>, window_params = [{transform_indices = @transform_0, window_bounds = array<i64: 1, 16, 16, 128>}, {transform_indices = @transform_1, window_bounds = array<i64: 1, 1, 16, 128>}, {transform_indices = @transform_2, window_bounds = array<i64: 1, 1, 16, 128>}, {pipeline_mode = #tpu.pipeline_mode<synchronous>, transform_indices = @transform_3, window_bounds = array<i64: 128, 128>}, {pipeline_mode = #tpu.pipeline_mode<synchronous>, transform_indices = @transform_4, window_bounds = array<i64: 1152, 128>}, {pipeline_mode = #tpu.pipeline_mode<synchronous>, transform_indices = @transform_5, window_bounds = array<i64: 128, 128>}, {transform_indices = @transform_6, window_bounds = array<i64: 1, 16, 16, 128>}]} {
    %c0 = arith.constant 0 : index
    %c0_0 = arith.constant 0 : index
    %c0_1 = arith.constant 0 : index
    %c0_2 = arith.constant 0 : index
    %0 = vector.load %arg2[%c0, %c0_0, %c0_1, %c0_2] : memref<1x16x16x128xf32, #tpu.memory_space<vmem>>, vector<1x16x16x128xf32>
    %1 = vector.shape_cast %0 : vector<1x16x16x128xf32> to vector<16x16x128xf32>
    %c0_3 = arith.constant 0 : index
    %c0_4 = arith.constant 0 : index
    %c0_5 = arith.constant 0 : index
    %c0_6 = arith.constant 0 : index
    %2 = vector.load %arg3[%c0_3, %c0_4, %c0_5, %c0_6] : memref<1x1x16x128xf32, #tpu.memory_space<vmem>>, vector<1x1x16x128xf32>
    %3 = vector.shape_cast %2 : vector<1x1x16x128xf32> to vector<1x16x128xf32>
    %c0_7 = arith.constant 0 : index
    %c0_8 = arith.constant 0 : index
    %c0_9 = arith.constant 0 : index
    %c0_10 = arith.constant 0 : index
    %4 = vector.load %arg4[%c0_7, %c0_8, %c0_9, %c0_10] : memref<1x1x16x128xf32, #tpu.memory_space<vmem>>, vector<1x1x16x128xf32>
    %5 = vector.shape_cast %4 : vector<1x1x16x128xf32> to vector<1x16x128xf32>
    %6 = tpu.concatenate %3, %1, %5 in 0 : vector<1x16x128xf32>, vector<16x16x128xf32>, vector<1x16x128xf32> -> vector<18x16x128xf32>
    %7 = vector.shape_cast %6 : vector<18x16x128xf32> to vector<288x128xf32>
    %c0_11 = arith.constant 0 : index
    %c0_12 = arith.constant 0 : index
    %8 = vector.load %arg5[%c0_11, %c0_12] : memref<128x128xf32, #tpu.memory_space<vmem>>, vector<128x128xf32>
    %cst = arith.constant dense<0.000000e+00> : vector<288x128xf32>
    %9 = tpu.matmul %7, %8, %cst {dimension_numbers = #tpu.dot_dimension_numbers<[1], [0], [0], [1], [0, 0, 1, 1], [], []>} : vector<288x128xf32>, vector<128x128xf32>, vector<288x128xf32> -> vector<288x128xf32>
    %cst_13 = arith.constant 0.000000e+00 : f32
    %10 = vector.broadcast %cst_13 : f32 to vector<288x128xf32>
    %11 = arith.maximumf %9, %10 : vector<288x128xf32>
    %12 = vector.shape_cast %11 : vector<288x128xf32> to vector<18x16x128xf32>
    %c0_14 = arith.constant 0 : index
    %c0_15 = arith.constant 0 : index
    %c0_16 = arith.constant 0 : index
    %13 = vector.load %arg9[%c0_14, %c0_15, %c0_16] : memref<18x16x128xf32, #tpu.memory_space<vmem>>, vector<18x16x128xf32>
    tpu.vector_store %arg9[%c0_14, %c0_15, %c0_16], %12 {strides = array<i32>} : memref<18x16x128xf32, #tpu.memory_space<vmem>>, vector<18x16x128xf32>,
    %c0_i32 = arith.constant 0 : i32
    %14 = arith.cmpi eq, %arg1, %c0_i32 : i32
    %15 = arith.extui %14 : i1 to i32
    %c0_i32_17 = arith.constant 0 : i32
    %16 = arith.cmpi ne, %15, %c0_i32_17 : i32
    scf.if %16 {
      %cst_79 = arith.constant 0.000000e+00 : f32
      %59 = vector.broadcast %cst_79 : f32 to vector<1x16x128xf32>
      %c0_80 = arith.constant 0 : index
      %c0_81 = arith.constant 0 : index
      %c0_82 = arith.constant 0 : index
      %60 = vector.load %arg9[%c0_80, %c0_81, %c0_82] : memref<18x16x128xf32, #tpu.memory_space<vmem>>, vector<1x16x128xf32>
      tpu.vector_store %arg9[%c0_80, %c0_81, %c0_82], %59 {strides = array<i32>} : memref<18x16x128xf32, #tpu.memory_space<vmem>>, vector<1x16x128xf32>,
    } else {
    }
    %c0_i32_18 = arith.constant 0 : i32
    %17 = arith.cmpi eq, %arg1, %c0_i32_18 : i32
    %18 = arith.extui %17 : i1 to i32
    %c0_i32_19 = arith.constant 0 : i32
    %19 = arith.cmpi ne, %18, %c0_i32_19 : i32
    scf.if %19 {
      %cst_79 = arith.constant 0.000000e+00 : f32
      %59 = vector.broadcast %cst_79 : f32 to vector<1x16x128xf32>
      %c17 = arith.constant 17 : index
      %c0_80 = arith.constant 0 : index
      %c0_81 = arith.constant 0 : index
      %60 = vector.load %arg9[%c17, %c0_80, %c0_81] : memref<18x16x128xf32, #tpu.memory_space<vmem>>, vector<1x16x128xf32>
      tpu.vector_store %arg9[%c17, %c0_80, %c0_81], %59 {strides = array<i32>} : memref<18x16x128xf32, #tpu.memory_space<vmem>>, vector<1x16x128xf32>,
    } else {
    }
    %cst_20 = arith.constant 0.000000e+00 : f32
    %20 = vector.broadcast %cst_20 : f32 to vector<16x1x128xf32>
    %c0_21 = arith.constant 0 : index
    %c0_22 = arith.constant 0 : index
    %c0_23 = arith.constant 0 : index
    %21 = vector.load %arg9[%c0_21, %c0_22, %c0_23] : memref<18x16x128xf32, #tpu.memory_space<vmem>>, vector<16x16x128xf32>
    %c0_24 = arith.constant 0 : index
    %c0_25 = arith.constant 0 : index
    %c0_26 = arith.constant 0 : index
    %22 = vector.load %arg10[%c0_24, %c0_25, %c0_26] : memref<16x16x1152xf32, #tpu.memory_space<vmem>>, vector<16x1x128xf32>
    tpu.vector_store %arg10[%c0_24, %c0_25, %c0_26], %20 {strides = array<i32>} : memref<16x16x1152xf32, #tpu.memory_space<vmem>>, vector<16x1x128xf32>,
    %23 = vector.extract_strided_slice %21 {offsets = [0, 0, 0], sizes = [16, 15, 128], strides = [1, 1, 1]} : vector<16x16x128xf32> to vector<16x15x128xf32>
    %c0_27 = arith.constant 0 : index
    %c1 = arith.constant 1 : index
    %c0_28 = arith.constant 0 : index
    %24 = vector.load %arg10[%c0_27, %c1, %c0_28] : memref<16x16x1152xf32, #tpu.memory_space<vmem>>, vector<16x15x128xf32>
    tpu.vector_store %arg10[%c0_27, %c1, %c0_28], %23 {strides = array<i32>} : memref<16x16x1152xf32, #tpu.memory_space<vmem>>, vector<16x15x128xf32>,
    %c0_29 = arith.constant 0 : index
    %c0_30 = arith.constant 0 : index
    %c128 = arith.constant 128 : index
    %25 = vector.load %arg10[%c0_29, %c0_30, %c128] : memref<16x16x1152xf32, #tpu.memory_space<vmem>>, vector<16x16x128xf32>
    tpu.vector_store %arg10[%c0_29, %c0_30, %c128], %21 {strides = array<i32>} : memref<16x16x1152xf32, #tpu.memory_space<vmem>>, vector<16x16x128xf32>,
    %26 = vector.extract_strided_slice %21 {offsets = [0, 1, 0], sizes = [16, 15, 128], strides = [1, 1, 1]} : vector<16x16x128xf32> to vector<16x15x128xf32>
    %c0_31 = arith.constant 0 : index
    %c0_32 = arith.constant 0 : index
    %c256 = arith.constant 256 : index
    %27 = vector.load %arg10[%c0_31, %c0_32, %c256] : memref<16x16x1152xf32, #tpu.memory_space<vmem>>, vector<16x15x128xf32>
    tpu.vector_store %arg10[%c0_31, %c0_32, %c256], %26 {strides = array<i32>} : memref<16x16x1152xf32, #tpu.memory_space<vmem>>, vector<16x15x128xf32>,
    %c0_33 = arith.constant 0 : index
    %c15 = arith.constant 15 : index
    %c256_34 = arith.constant 256 : index
    %28 = vector.load %arg10[%c0_33, %c15, %c256_34] : memref<16x16x1152xf32, #tpu.memory_space<vmem>>, vector<16x1x128xf32>
    tpu.vector_store %arg10[%c0_33, %c15, %c256_34], %20 {strides = array<i32>} : memref<16x16x1152xf32, #tpu.memory_space<vmem>>, vector<16x1x128xf32>,
    %c1_35 = arith.constant 1 : index
    %c0_36 = arith.constant 0 : index
    %c0_37 = arith.constant 0 : index
    %29 = vector.load %arg9[%c1_35, %c0_36, %c0_37] : memref<18x16x128xf32, #tpu.memory_space<vmem>>, vector<16x16x128xf32>
    %c0_38 = arith.constant 0 : index
    %c0_39 = arith.constant 0 : index
    %c384 = arith.constant 384 : index
    %30 = vector.load %arg10[%c0_38, %c0_39, %c384] : memref<16x16x1152xf32, #tpu.memory_space<vmem>>, vector<16x1x128xf32>
    tpu.vector_store %arg10[%c0_38, %c0_39, %c384], %20 {strides = array<i32>} : memref<16x16x1152xf32, #tpu.memory_space<vmem>>, vector<16x1x128xf32>,
    %31 = vector.extract_strided_slice %29 {offsets = [0, 0, 0], sizes = [16, 15, 128], strides = [1, 1, 1]} : vector<16x16x128xf32> to vector<16x15x128xf32>
    %c0_40 = arith.constant 0 : index
    %c1_41 = arith.constant 1 : index
    %c384_42 = arith.constant 384 : index
    %32 = vector.load %arg10[%c0_40, %c1_41, %c384_42] : memref<16x16x1152xf32, #tpu.memory_space<vmem>>, vector<16x15x128xf32>
    tpu.vector_store %arg10[%c0_40, %c1_41, %c384_42], %31 {strides = array<i32>} : memref<16x16x1152xf32, #tpu.memory_space<vmem>>, vector<16x15x128xf32>,
    %c0_43 = arith.constant 0 : index
    %c0_44 = arith.constant 0 : index
    %c512 = arith.constant 512 : index
    %33 = vector.load %arg10[%c0_43, %c0_44, %c512] : memref<16x16x1152xf32, #tpu.memory_space<vmem>>, vector<16x16x128xf32>
    tpu.vector_store %arg10[%c0_43, %c0_44, %c512], %29 {strides = array<i32>} : memref<16x16x1152xf32, #tpu.memory_space<vmem>>, vector<16x16x128xf32>,
    %34 = vector.extract_strided_slice %29 {offsets = [0, 1, 0], sizes = [16, 15, 128], strides = [1, 1, 1]} : vector<16x16x128xf32> to vector<16x15x128xf32>
    %c0_45 = arith.constant 0 : index
    %c0_46 = arith.constant 0 : index
    %c640 = arith.constant 640 : index
    %35 = vector.load %arg10[%c0_45, %c0_46, %c640] : memref<16x16x1152xf32, #tpu.memory_space<vmem>>, vector<16x15x128xf32>
    tpu.vector_store %arg10[%c0_45, %c0_46, %c640], %34 {strides = array<i32>} : memref<16x16x1152xf32, #tpu.memory_space<vmem>>, vector<16x15x128xf32>,
    %c0_47 = arith.constant 0 : index
    %c15_48 = arith.constant 15 : index
    %c640_49 = arith.constant 640 : index
    %36 = vector.load %arg10[%c0_47, %c15_48, %c640_49] : memref<16x16x1152xf32, #tpu.memory_space<vmem>>, vector<16x1x128xf32>
    tpu.vector_store %arg10[%c0_47, %c15_48, %c640_49], %20 {strides = array<i32>} : memref<16x16x1152xf32, #tpu.memory_space<vmem>>, vector<16x1x128xf32>,
    %c2 = arith.constant 2 : index
    %c0_50 = arith.constant 0 : index
    %c0_51 = arith.constant 0 : index
    %37 = vector.load %arg9[%c2, %c0_50, %c0_51] : memref<18x16x128xf32, #tpu.memory_space<vmem>>, vector<16x16x128xf32>
    %c0_52 = arith.constant 0 : index
    %c0_53 = arith.constant 0 : index
    %c768 = arith.constant 768 : index
    %38 = vector.load %arg10[%c0_52, %c0_53, %c768] : memref<16x16x1152xf32, #tpu.memory_space<vmem>>, vector<16x1x128xf32>
    tpu.vector_store %arg10[%c0_52, %c0_53, %c768], %20 {strides = array<i32>} : memref<16x16x1152xf32, #tpu.memory_space<vmem>>, vector<16x1x128xf32>,
    %39 = vector.extract_strided_slice %37 {offsets = [0, 0, 0], sizes = [16, 15, 128], strides = [1, 1, 1]} : vector<16x16x128xf32> to vector<16x15x128xf32>
    %c0_54 = arith.constant 0 : index
    %c1_55 = arith.constant 1 : index
    %c768_56 = arith.constant 768 : index
    %40 = vector.load %arg10[%c0_54, %c1_55, %c768_56] : memref<16x16x1152xf32, #tpu.memory_space<vmem>>, vector<16x15x128xf32>
    tpu.vector_store %arg10[%c0_54, %c1_55, %c768_56], %39 {strides = array<i32>} : memref<16x16x1152xf32, #tpu.memory_space<vmem>>, vector<16x15x128xf32>,
    %c0_57 = arith.constant 0 : index
    %c0_58 = arith.constant 0 : index
    %c896 = arith.constant 896 : index
    %41 = vector.load %arg10[%c0_57, %c0_58, %c896] : memref<16x16x1152xf32, #tpu.memory_space<vmem>>, vector<16x16x128xf32>
    tpu.vector_store %arg10[%c0_57, %c0_58, %c896], %37 {strides = array<i32>} : memref<16x16x1152xf32, #tpu.memory_space<vmem>>, vector<16x16x128xf32>,
    %42 = vector.extract_strided_slice %37 {offsets = [0, 1, 0], sizes = [16, 15, 128], strides = [1, 1, 1]} : vector<16x16x128xf32> to vector<16x15x128xf32>
    %c0_59 = arith.constant 0 : index
    %c0_60 = arith.constant 0 : index
    %c1024 = arith.constant 1024 : index
    %43 = vector.load %arg10[%c0_59, %c0_60, %c1024] : memref<16x16x1152xf32, #tpu.memory_space<vmem>>, vector<16x15x128xf32>
    tpu.vector_store %arg10[%c0_59, %c0_60, %c1024], %42 {strides = array<i32>} : memref<16x16x1152xf32, #tpu.memory_space<vmem>>, vector<16x15x128xf32>,
    %c0_61 = arith.constant 0 : index
    %c15_62 = arith.constant 15 : index
    %c1024_63 = arith.constant 1024 : index
    %44 = vector.load %arg10[%c0_61, %c15_62, %c1024_63] : memref<16x16x1152xf32, #tpu.memory_space<vmem>>, vector<16x1x128xf32>
    tpu.vector_store %arg10[%c0_61, %c15_62, %c1024_63], %20 {strides = array<i32>} : memref<16x16x1152xf32, #tpu.memory_space<vmem>>, vector<16x1x128xf32>,
    %c0_64 = arith.constant 0 : index
    %c0_65 = arith.constant 0 : index
    %c0_66 = arith.constant 0 : index
    %45 = vector.load %arg10[%c0_64, %c0_65, %c0_66] : memref<16x16x1152xf32, #tpu.memory_space<vmem>>, vector<16x16x1152xf32>
    %46 = vector.shape_cast %45 : vector<16x16x1152xf32> to vector<256x1152xf32>
    %c0_67 = arith.constant 0 : index
    %c0_68 = arith.constant 0 : index
    %47 = vector.load %arg6[%c0_67, %c0_68] : memref<1152x128xf32, #tpu.memory_space<vmem>>, vector<1152x128xf32>
    %cst_69 = arith.constant dense<0.000000e+00> : vector<256x128xf32>
    %48 = tpu.matmul %46, %47, %cst_69 {dimension_numbers = #tpu.dot_dimension_numbers<[1], [0], [0], [1], [0, 0, 1, 1], [], []>} : vector<256x1152xf32>, vector<1152x128xf32>, vector<256x128xf32> -> vector<256x128xf32>
    %cst_70 = arith.constant 0.000000e+00 : f32
    %49 = vector.broadcast %cst_70 : f32 to vector<256x128xf32>
    %50 = arith.maximumf %48, %49 : vector<256x128xf32>
    %c0_71 = arith.constant 0 : index
    %c0_72 = arith.constant 0 : index
    %51 = vector.load %arg7[%c0_71, %c0_72] : memref<128x128xf32, #tpu.memory_space<vmem>>, vector<128x128xf32>
    %cst_73 = arith.constant dense<0.000000e+00> : vector<256x128xf32>
    %52 = tpu.matmul %50, %51, %cst_73 {dimension_numbers = #tpu.dot_dimension_numbers<[1], [0], [0], [1], [0, 0, 1, 1], [], []>} : vector<256x128xf32>, vector<128x128xf32>, vector<256x128xf32> -> vector<256x128xf32>
    %53 = vector.shape_cast %1 : vector<16x16x128xf32> to vector<256x128xf32>
    %54 = arith.addf %52, %53 : vector<256x128xf32>
    %cst_74 = arith.constant 0.000000e+00 : f32
    %55 = vector.broadcast %cst_74 : f32 to vector<256x128xf32>
    %56 = arith.maximumf %54, %55 : vector<256x128xf32>
    %57 = vector.shape_cast %56 : vector<256x128xf32> to vector<1x16x16x128xf32>
    %c0_75 = arith.constant 0 : index
    %c0_76 = arith.constant 0 : index
    %c0_77 = arith.constant 0 : index
    %c0_78 = arith.constant 0 : index
    %58 = vector.load %arg8[%c0_75, %c0_76, %c0_77, %c0_78] : memref<1x16x16x128xf32, #tpu.memory_space<vmem>>, vector<1x16x16x128xf32>
    tpu.vector_store %arg8[%c0_75, %c0_76, %c0_77, %c0_78], %57 {strides = array<i32>} : memref<1x16x16x128xf32, #tpu.memory_space<vmem>>, vector<1x16x16x128xf32>,
    return
  }
  func.func @transform_0(%arg0: i32, %arg1: i32) -> (i32, i32, i32, i32) {
    %c0_i32 = arith.constant 0 : i32
    %c0_i32_0 = arith.constant 0 : i32
    %c0_i32_1 = arith.constant 0 : i32
    return %arg0, %arg1, %c0_i32, %c0_i32_0 : i32, i32, i32, i32
  }
  func.func @transform_1(%arg0: i32, %arg1: i32) -> (i32, i32, i32, i32) {
    %c16_i32 = arith.constant 16 : i32
    %0 = arith.muli %arg1, %c16_i32 : i32
    %c1_i32 = arith.constant 1 : i32
    %1 = arith.subi %0, %c1_i32 : i32
    %c0_i32 = arith.constant 0 : i32
    %2 = arith.maxsi %1, %c0_i32 : i32
    %c0_i32_0 = arith.constant 0 : i32
    %c0_i32_1 = arith.constant 0 : i32
    %c0_i32_2 = arith.constant 0 : i32
    return %arg0, %2, %c0_i32_0, %c0_i32_1 : i32, i32, i32, i32
  }
  func.func @transform_2(%arg0: i32, %arg1: i32) -> (i32, i32, i32, i32) {
    %c16_i32 = arith.constant 16 : i32
    %0 = arith.muli %arg1, %c16_i32 : i32
    %c16_i32_0 = arith.constant 16 : i32
    %1 = arith.addi %0, %c16_i32_0 : i32
    %c15_i32 = arith.constant 15 : i32
    %2 = arith.minsi %1, %c15_i32 : i32
    %c0_i32 = arith.constant 0 : i32
    %c0_i32_1 = arith.constant 0 : i32
    %c0_i32_2 = arith.constant 0 : i32
    return %arg0, %2, %c0_i32, %c0_i32_1 : i32, i32, i32, i32
  }
  func.func @transform_3(%arg0: i32, %arg1: i32) -> (i32, i32) {
    %c0_i32 = arith.constant 0 : i32
    %c0_i32_0 = arith.constant 0 : i32
    %c0_i32_1 = arith.constant 0 : i32
    return %c0_i32, %c0_i32_0 : i32, i32
  }
  func.func @transform_4(%arg0: i32, %arg1: i32) -> (i32, i32) {
    %c0_i32 = arith.constant 0 : i32
    %c0_i32_0 = arith.constant 0 : i32
    %c0_i32_1 = arith.constant 0 : i32
    return %c0_i32, %c0_i32_0 : i32, i32
  }
  func.func @transform_5(%arg0: i32, %arg1: i32) -> (i32, i32) {
    %c0_i32 = arith.constant 0 : i32
    %c0_i32_0 = arith.constant 0 : i32
    %c0_i32_1 = arith.constant 0 : i32
    return %c0_i32, %c0_i32_0 : i32, i32
  }
  func.func @transform_6(%arg0: i32, %arg1: i32) -> (i32, i32, i32, i32) {
    %c0_i32 = arith.constant 0 : i32
    %c0_i32_0 = arith.constant 0 : i32
    %c0_i32_1 = arith.constant 0 : i32
    return %arg0, %arg1, %c0_i32, %c0_i32_0 : i32, i32, i32, i32
  }
}

</mosaic_0001>

<llo_original>
// kernel: spike_bottleneck_forward_nhwc.1
$region0: #{spike_bottleneck_forward_nhwc.1}
  #allocation0 [shape = 'u32[]', space=smem, size = 0x4, offset = 0x4, fixed_abs, tag = 'smem constant byte address 0x4 - core index']
  #allocation1 [shape = 'u32[144,128]{1,0:T(1,128)}', space=vmem, size = 0x12000, scoped, tag = 'internal scratch']
  #allocation2 [shape = 'f32[18,16,128]{2,1,0:T(8,128)}', space=vmem, size = 0x24000, scoped, tag = 'scratch operand']
  #allocation3 [shape = 'f32[16,16,1152]{2,1,0:T(8,128)}', space=vmem, size = 0x120000, scoped, tag = 'scratch operand']
  %s0 = inlined_call_operand.vmem [shape: f32[2,16,16,128], index: 0, kind: input, shape index: {}, may-alias: {0,1,2}]
  %s1 = inlined_call_operand.vmem [shape: f32[2,16,16,128], index: 1, kind: input, shape index: {}, may-alias: {0,1,2}]
  %s2 = inlined_call_operand.vmem [shape: f32[2,16,16,128], index: 2, kind: input, shape index: {}, may-alias: {0,1,2}]
  %s3 = inlined_call_operand.vmem [shape: f32[128,128], index: 3, kind: input, shape index: {}]
  %s4 = inlined_call_operand.vmem [shape: f32[1152,128], index: 4, kind: input, shape index: {}]
  %s5 = inlined_call_operand.vmem [shape: f32[128,128], index: 5, kind: input, shape index: {}]
  %s6 = inlined_call_operand.hbm [shape: f32[2,16,16,128], index: 6, kind: output, shape index: {}]
  %s7 = sld [smem:[#allocation0]]
  $region61: #{spike_bottleneck_forward_nhwc.1} parent=0
    _
  %s9 = ssub.s32 1, %s7
  %s10 = scalar_select 0, %s9, %s7
  $region1: #{spike_bottleneck_forward_nhwc.1} parent=0
    #allocation4 [shape = 'u8[262144]{0}', space=vmem, size = 0x40000, scoped, tag = 'output window, operand 0']
    #allocation5 [shape = 's32[2]{0}', space=sflag, size = 0x8, scoped, tag = 'scoped memory for spike_bottleneck_forward_nhwc.1']
    %11 = vsyncpa [#allocation5], 0
    %s12 = scalar_lea.sflag [#allocation5], 1
    %13 = vsyncpa %s12, 0
    loop: start=0, step=1, limit=4
    $region2: #{spike_bottleneck_forward_nhwc.1} parent=1 // loop_pre_header
      _
    $region3: #{spike_bottleneck_forward_nhwc.1} parent=1 // loop_header
      %s15 = sphi 0, %s19
      %p16 = scmp.ge.s32.totalorder %s15, 4
      %s22 = sphi 0, %s34
      %s23 = sphi 0, %s30
      %s24 = sphi 0, %s22
      %s25 = sphi 0, %s23
      %s26 = sphi 0, %s24
      %s27 = sphi 0, %s25
      %s39 = sphi 0, %s41
      %s42 = sphi 0, %s39
      %s43 = sphi 0, %s42
      %s59 = sphi 0, %s43
      %s75 = sphi 0, %s77
      %s78 = sphi 0, %s75
      %s79 = sphi 0, %s78
      %s95 = sphi 0, %s79
      %s111 = sphi 0, %s113
      %s114 = sphi 0, %s111
      %s115 = sphi 0, %s114
      %s131 = sphi 0, %s115
      %s135 = sphi 0, %s135
      %s137 = sphi 0, %s135
      %s138 = sphi 0, %s137
      %s152 = sphi 0, %s138
      %s156 = sphi 0, %s156
      %s158 = sphi 0, %s156
      %s159 = sphi 0, %s158
      %s173 = sphi 0, %s159
      %s177 = sphi 0, %s177
      %s179 = sphi 0, %s177
      %s180 = sphi 0, %s179
      %s194 = sphi 0, %s180
      %s202 = sphi 0, %s204
      %s205 = sphi 0, %s202
      %s206 = sphi 0, %s205
      %s222 = sphi 0, %s206
    $region4: #{spike_bottleneck_forward_nhwc.1} parent=1 // loop_header_branch
      %18 = sbr.rel (%p16) target = $region8
    $region5: #{spike_bottleneck_forward_nhwc.1} parent=1 // loop_body
      %s20 = ssub.s32 %s15, 1
      %s21 = ssub.s32 %s15, 2
      %s28 = sadd.s32 1, %s23
      %p29 = scmp.ge.s32.totalorder %s28, 1
      %s30 = scalar_select %p29, 0, %s28
      %s31 = sadd.s32 1, %s22
      %s32 = scalar_select %p29, %s31, %s22
      %p33 = scmp.ge.s32.totalorder %s32, 2
      %s34 = scalar_select %p33, 0, %s32
      %s35 = ssub.s32 %s22, %s34
      %s36 = ssub.s32 %s23, %s30
      %s37 = sor.u32 %s35, %s36
      %p38 = scmp.eq.s32.totalorder %s37, 0
      %s40 = sadd.s32 %s39, 1
      %s41 = scalar_select %p38, %s39, %s40
      %p44 = pneg %p38
      %p45 = scmp.eq.s32.totalorder %s15, 1
      %p46 = por %p44, %p45
      %p47 = scmp.ne.s32.totalorder %s39, %s42
      %p48 = scmp.eq.s32.totalorder %s15, 0
      %p49 = por %p47, %p48
      %p50 = scmp.ne.s32.totalorder %s39, %s42
      %p51 = scmp.eq.s32.totalorder %s20, 1
      %p52 = por %p50, %p51
      %p53 = scmp.ne.s32.totalorder %s42, %s43
      %p54 = scmp.eq.s32.totalorder %s20, 0
      %p55 = por %p53, %p54
      %p56 = scmp.ne.s32.totalorder %s42, %s43
      %p57 = scmp.eq.s32.totalorder %s21, 1
      %p58 = por %p56, %p57
      %p60 = scmp.ne.s32.totalorder %s43, %s59
      %p61 = scmp.eq.s32.totalorder %s21, 0
      %p62 = por %p60, %p61
      %s63 = smul.u32 %s23, 16
      %s64 = ssub.s32 %s63, 1
      %p65 = scmp.gt.s32.totalorder %s64, 0
      %s66 = scalar_select %p65, %s64, 0
      %s67 = smul.u32 %s30, 16
      %s68 = ssub.s32 %s67, 1
      %p69 = scmp.gt.s32.totalorder %s68, 0
      %s70 = scalar_select %p69, %s68, 0
      %s71 = ssub.s32 %s22, %s34
      %s72 = ssub.s32 %s66, %s70
      %s73 = sor.u32 %s71, %s72
      %p74 = scmp.eq.s32.totalorder %s73, 0
      %s76 = sadd.s32 %s75, 1
      %s77 = scalar_select %p74, %s75, %s76
      %p80 = pneg %p74
      %p81 = scmp.eq.s32.totalorder %s15, 1
      %p82 = por %p80, %p81
      %p83 = scmp.ne.s32.totalorder %s75, %s78
      %p84 = scmp.eq.s32.totalorder %s15, 0
      %p85 = por %p83, %p84
      %p86 = scmp.ne.s32.totalorder %s75, %s78
      %p87 = scmp.eq.s32.totalorder %s20, 1
      %p88 = por %p86, %p87
      %p89 = scmp.ne.s32.totalorder %s78, %s79
      %p90 = scmp.eq.s32.totalorder %s20, 0
      %p91 = por %p89, %p90
      %p92 = scmp.ne.s32.totalorder %s78, %s79
      %p93 = scmp.eq.s32.totalorder %s21, 1
      %p94 = por %p92, %p93
      %p96 = scmp.ne.s32.totalorder %s79, %s95
      %p97 = scmp.eq.s32.totalorder %s21, 0
      %p98 = por %p96, %p97
      %s99 = smul.u32 %s23, 16
      %s100 = sadd.s32 %s99, 16
      %p101 = scmp.lt.s32.totalorder %s100, 15
      %s102 = scalar_select %p101, %s100, 15
      %s103 = smul.u32 %s30, 16
      %s104 = sadd.s32 %s103, 16
      %p105 = scmp.lt.s32.totalorder %s104, 15
      %s106 = scalar_select %p105, %s104, 15
      %s107 = ssub.s32 %s22, %s34
      %s108 = ssub.s32 %s102, %s106
      %s109 = sor.u32 %s107, %s108
      %p110 = scmp.eq.s32.totalorder %s109, 0
      %s112 = sadd.s32 %s111, 1
      %s113 = scalar_select %p110, %s111, %s112
      %p116 = pneg %p110
      %p117 = scmp.eq.s32.totalorder %s15, 1
      %p118 = por %p116, %p117
      %p119 = scmp.ne.s32.totalorder %s111, %s114
      %p120 = scmp.eq.s32.totalorder %s15, 0
      %p121 = por %p119, %p120
      %p122 = scmp.ne.s32.totalorder %s111, %s114
      %p123 = scmp.eq.s32.totalorder %s20, 1
      %p124 = por %p122, %p123
      %p125 = scmp.ne.s32.totalorder %s114, %s115
      %p126 = scmp.eq.s32.totalorder %s20, 0
      %p127 = por %p125, %p126
      %p128 = scmp.ne.s32.totalorder %s114, %s115
      %p129 = scmp.eq.s32.totalorder %s21, 1
      %p130 = por %p128, %p129
      %p132 = scmp.ne.s32.totalorder %s115, %s131
      %p133 = scmp.eq.s32.totalorder %s21, 0
      %p134 = por %p132, %p133
      %s136 = sadd.s32 %s135, 1
      %p139 = scmp.eq.s32.totalorder %s15, 1
      %p140 = scmp.ne.s32.totalorder %s135, %s137
      %p141 = scmp.eq.s32.totalorder %s15, 0
      %p142 = por %p140, %p141
      %p143 = scmp.ne.s32.totalorder %s135, %s137
      %p144 = scmp.eq.s32.totalorder %s20, 1
      %p145 = por %p143, %p144
      %p146 = scmp.ne.s32.totalorder %s137, %s138
      %p147 = scmp.eq.s32.totalorder %s20, 0
      %p148 = por %p146, %p147
      %p149 = scmp.ne.s32.totalorder %s137, %s138
      %p150 = scmp.eq.s32.totalorder %s21, 1
      %p151 = por %p149, %p150
      %p153 = scmp.ne.s32.totalorder %s138, %s152
      %p154 = scmp.eq.s32.totalorder %s21, 0
      %p155 = por %p153, %p154
      %s157 = sadd.s32 %s156, 1
      %p160 = scmp.eq.s32.totalorder %s15, 1
      %p161 = scmp.ne.s32.totalorder %s156, %s158
      %p162 = scmp.eq.s32.totalorder %s15, 0
      %p163 = por %p161, %p162
      %p164 = scmp.ne.s32.totalorder %s156, %s158
      %p165 = scmp.eq.s32.totalorder %s20, 1
      %p166 = por %p164, %p165
      %p167 = scmp.ne.s32.totalorder %s158, %s159
      %p168 = scmp.eq.s32.totalorder %s20, 0
      %p169 = por %p167, %p168
      %p170 = scmp.ne.s32.totalorder %s158, %s159
      %p171 = scmp.eq.s32.totalorder %s21, 1
      %p172 = por %p170, %p171
      %p174 = scmp.ne.s32.totalorder %s159, %s173
      %p175 = scmp.eq.s32.totalorder %s21, 0
      %p176 = por %p174, %p175
      %s178 = sadd.s32 %s177, 1
      %p181 = scmp.eq.s32.totalorder %s15, 1
      %p182 = scmp.ne.s32.totalorder %s177, %s179
      %p183 = scmp.eq.s32.totalorder %s15, 0
      %p184 = por %p182, %p183
      %p185 = scmp.ne.s32.totalorder %s177, %s179
      %p186 = scmp.eq.s32.totalorder %s20, 1
      %p187 = por %p185, %p186
      %p188 = scmp.ne.s32.totalorder %s179, %s180
      %p189 = scmp.eq.s32.totalorder %s20, 0
      %p190 = por %p188, %p189
      %p191 = scmp.ne.s32.totalorder %s179, %s180
      %p192 = scmp.eq.s32.totalorder %s21, 1
      %p193 = por %p191, %p192
      %p195 = scmp.ne.s32.totalorder %s180, %s194
      %p196 = scmp.eq.s32.totalorder %s21, 0
      %p197 = por %p195, %p196
      %s198 = ssub.s32 %s22, %s34
      %s199 = ssub.s32 %s23, %s30
      %s200 = sor.u32 %s198, %s199
      %p201 = scmp.eq.s32.totalorder %s200, 0
      %s203 = sadd.s32 %s202, 1
      %s204 = scalar_select %p201, %s202, %s203
      %p207 = pneg %p201
      %p208 = scmp.eq.s32.totalorder %s15, 1
      %p209 = por %p207, %p208
      %p210 = scmp.ne.s32.totalorder %s202, %s205
      %p211 = scmp.eq.s32.totalorder %s15, 0
      %p212 = por %p210, %p211
      %p213 = scmp.ne.s32.totalorder %s202, %s205
      %p214 = scmp.eq.s32.totalorder %s20, 1
      %p215 = por %p213, %p214
      %p216 = scmp.ne.s32.totalorder %s205, %s206
      %p217 = scmp.eq.s32.totalorder %s20, 0
      %p218 = por %p216, %p217
      %p219 = scmp.ne.s32.totalorder %s205, %s206
      %p220 = scmp.eq.s32.totalorder %s21, 1
      %p221 = por %p219, %p220
      %p223 = scmp.ne.s32.totalorder %s206, %s222
      %p224 = scmp.eq.s32.totalorder %s21, 0
      %p225 = por %p223, %p224
      %p226 = scmp.le.s32.totalorder 1, %s15
      %p227 = scmp.lt.s32.totalorder %s15, 3
      %p228 = pnand %p226, %p227
      %p229 = pneg %p228
      // Predicated region
      $region9: #{spike_bottleneck_forward_nhwc.1} parent=5 // pred_check
        _
      $region10: #{spike_bottleneck_forward_nhwc.1} parent=5 // pred_check_branch
        %231 = sbr.rel (%p228) target = $region12
      $region11: #{spike_bottleneck_forward_nhwc.1} parent=5 // pred_region
        %s232 = ssub.s32 %s15, 1
        // Predicated region
        $region13: #{spike_bottleneck_forward_nhwc.1} parent=11 // pred_check
          %p233 = pneg %p148
        $region14: #{spike_bottleneck_forward_nhwc.1} parent=11 // pred_check_branch
          %235 = sbr.rel (%p233) target = $region16
        $region15: #{spike_bottleneck_forward_nhwc.1} parent=11 // pred_region
          _
        $region16: #{spike_bottleneck_forward_nhwc.1} parent=11 // pred_fallthru
          _
        // Predicated region
        $region17: #{spike_bottleneck_forward_nhwc.1} parent=11 // pred_check
          %p236 = pneg %p169
        $region18: #{spike_bottleneck_forward_nhwc.1} parent=11 // pred_check_branch
          %238 = sbr.rel (%p236) target = $region20
        $region19: #{spike_bottleneck_forward_nhwc.1} parent=11 // pred_region
          _
        $region20: #{spike_bottleneck_forward_nhwc.1} parent=11 // pred_fallthru
          _
        // Predicated region
        $region21: #{spike_bottleneck_forward_nhwc.1} parent=11 // pred_check
          %p239 = pneg %p190
        $region22: #{spike_bottleneck_forward_nhwc.1} parent=11 // pred_check_branch
          %241 = sbr.rel (%p239) target = $region24
        $region23: #{spike_bottleneck_forward_nhwc.1} parent=11 // pred_region
          _
        $region24: #{spike_bottleneck_forward_nhwc.1} parent=11 // pred_fallthru
          _
      $region12: #{spike_bottleneck_forward_nhwc.1} parent=5 // pred_fallthru
        _
      %p242 = scmp.lt.s32.totalorder %s15, 2
      // Predicated region
      $region25: #{spike_bottleneck_forward_nhwc.1} parent=5 // pred_check
        %p243 = pneg %p242
      $region26: #{spike_bottleneck_forward_nhwc.1} parent=5 // pred_check_branch
        %245 = sbr.rel (%p243) target = $region28
      $region27: #{spike_bottleneck_forward_nhwc.1} parent=5 // pred_region
        // Predicated region
        $region29: #{spike_bottleneck_forward_nhwc.1} parent=27 // pred_check
          %p246 = pneg %p49
        $region30: #{spike_bottleneck_forward_nhwc.1} parent=27 // pred_check_branch
          %248 = sbr.rel (%p246) target = $region32
        $region31: #{spike_bottleneck_forward_nhwc.1} parent=27 // pred_region
          %s249 = smul.u32 16, %s23
          %p250 = scmp.lt.s32.totalorder %s22, 1
          %s251 = scalar_select %p250, %s22, 1
          %p252 = scmp.lt.s32.totalorder %s249, 15
          %s253 = scalar_select %p252, %s249, 15
          %s254 = smul.addr %s253, 2
          %s255 = smul.addr %s251, 32
          %s256 = sadd.s32 %s254, %s255
          %s257 = smul.addr %s256, 8
          %s258 = scalar_lea.vmem %s0, %s257
          %s259 = smul.u32 16, %s23
        $region32: #{spike_bottleneck_forward_nhwc.1} parent=27 // pred_fallthru
          _
        // Predicated region
        $region33: #{spike_bottleneck_forward_nhwc.1} parent=27 // pred_check
          %p260 = pneg %p85
        $region34: #{spike_bottleneck_forward_nhwc.1} parent=27 // pred_check_branch
          %262 = sbr.rel (%p260) target = $region36
        $region35: #{spike_bottleneck_forward_nhwc.1} parent=27 // pred_region
          %s263 = smul.u32 %s23, 16
          %s264 = ssub.s32 %s263, 1
          %p265 = scmp.gt.s32.totalorder %s264, 0
          %s266 = scalar_select %p265, %s264, 0
          %p267 = scmp.lt.s32.totalorder %s22, 1
          %s268 = scalar_select %p267, %s22, 1
          %p269 = scmp.lt.s32.totalorder %s266, 15
          %s270 = scalar_select %p269, %s266, 15
          %s271 = smul.addr %s270, 2
          %s272 = smul.addr %s268, 32
          %s273 = sadd.s32 %s271, %s272
          %s274 = smul.addr %s273, 8
          %s275 = scalar_lea.vmem %s1, %s274
          %s276 = smul.u32 %s23, 16
          %s277 = ssub.s32 %s276, 1
          %p278 = scmp.gt.s32.totalorder %s277, 0
          %s279 = scalar_select %p278, %s277, 0
        $region36: #{spike_bottleneck_forward_nhwc.1} parent=27 // pred_fallthru
          _
        // Predicated region
        $region37: #{spike_bottleneck_forward_nhwc.1} parent=27 // pred_check
          %p280 = pneg %p121
        $region38: #{spike_bottleneck_forward_nhwc.1} parent=27 // pred_check_branch
          %282 = sbr.rel (%p280) target = $region40
        $region39: #{spike_bottleneck_forward_nhwc.1} parent=27 // pred_region
          %s283 = smul.u32 %s23, 16
          %s284 = sadd.s32 %s283, 16
          %p285 = scmp.lt.s32.totalorder %s284, 15
          %s286 = scalar_select %p285, %s284, 15
          %p287 = scmp.lt.s32.totalorder %s22, 1
          %s288 = scalar_select %p287, %s22, 1
          %p289 = scmp.lt.s32.totalorder %s286, 15
          %s290 = scalar_select %p289, %s286, 15
          %s291 = smul.addr %s290, 2
          %s292 = smul.addr %s288, 32
          %s293 = sadd.s32 %s291, %s292
          %s294 = smul.addr %s293, 8
          %s295 = scalar_lea.vmem %s2, %s294
          %s296 = smul.u32 %s23, 16
          %s297 = sadd.s32 %s296, 16
          %p298 = scmp.lt.s32.totalorder %s297, 15
          %s299 = scalar_select %p298, %s297, 15
        $region40: #{spike_bottleneck_forward_nhwc.1} parent=27 // pred_fallthru
          _
      $region28: #{spike_bottleneck_forward_nhwc.1} parent=5 // pred_fallthru
        _
      %p300 = scmp.le.s32.totalorder 1, %s15
      %p301 = scmp.lt.s32.totalorder %s15, 3
      %p302 = pnand %p300, %p301
      %p303 = pneg %p302
      // Predicated region
      $region41: #{spike_bottleneck_forward_nhwc.1} parent=5 // pred_check
        _
      $region42: #{spike_bottleneck_forward_nhwc.1} parent=5 // pred_check_branch
        %305 = sbr.rel (%p302) target = $region44
      $region43: #{spike_bottleneck_forward_nhwc.1} parent=5 // pred_region
        %s306 = ssub.s32 %s15, 1
        %s307 = smul.u32 16, %s25
        %p308 = scmp.lt.s32.totalorder %s24, 1
        %s309 = scalar_select %p308, %s24, 1
        %p310 = scmp.lt.s32.totalorder %s307, 15
        %s311 = scalar_select %p310, %s307, 15
        %s312 = smul.addr %s311, 2
        %s313 = smul.addr %s309, 32
        %s314 = sadd.s32 %s312, %s313
        %s315 = smul.addr %s314, 8
        %s316 = scalar_lea.vmem %s0, %s315
        %p317 = pneg %p55
        %p318 = pneg %p52
        %s319 = smul.u32 %s25, 16
        %s320 = ssub.s32 %s319, 1
        %p321 = scmp.gt.s32.totalorder %s320, 0
        %s322 = scalar_select %p321, %s320, 0
        %p323 = scmp.lt.s32.totalorder %s24, 1
        %s324 = scalar_select %p323, %s24, 1
        %p325 = scmp.lt.s32.totalorder %s322, 15
        %s326 = scalar_select %p325, %s322, 15
        %s327 = smul.addr %s326, 2
        %s328 = smul.addr %s324, 32
        %s329 = sadd.s32 %s327, %s328
        %s330 = smul.addr %s329, 8
        %s331 = scalar_lea.vmem %s1, %s330
        %p332 = pneg %p91
        %p333 = pneg %p88
        %s334 = smul.u32 %s25, 16
        %s335 = sadd.s32 %s334, 16
        %p336 = scmp.lt.s32.totalorder %s335, 15
        %s337 = scalar_select %p336, %s335, 15
        %p338 = scmp.lt.s32.totalorder %s24, 1
        %s339 = scalar_select %p338, %s24, 1
        %p340 = scmp.lt.s32.totalorder %s337, 15
        %s341 = scalar_select %p340, %s337, 15
        %s342 = smul.addr %s341, 2
        %s343 = smul.addr %s339, 32
        %s344 = sadd.s32 %s342, %s343
        %s345 = smul.addr %s344, 8
        %s346 = scalar_lea.vmem %s2, %s345
        %p347 = pneg %p127
        %p348 = pneg %p124
        %p349 = pneg %p148
        %p350 = pneg %p145
        %p351 = pneg %p169
        %p352 = pneg %p166
        %p353 = pneg %p190
        %p354 = pneg %p187
        %p355 = pneg %p218
        %p356 = pneg %p215
        %s357 = sand.u32 %s205, 1
        %s358 = scalar_lea.sflag [#allocation5], %s357
        %s359 = sand.u32 %s205, 1
        %s360 = smul.addr %s359, 256
        %s361 = scalar_lea.vmem [#allocation4], %s360
        %s362 = smul.u32 16, %s25
        %p363 = scmp.lt.s32.totalorder %s24, 1
        %s364 = scalar_select %p363, %s24, 1
        %p365 = scmp.lt.s32.totalorder %s362, 15
        %s366 = scalar_select %p365, %s362, 15
        %s367 = smul.addr %s366, 2
        %s368 = smul.addr %s364, 32
        %s369 = sadd.s32 %s367, %s368
        %s370 = smul.addr %s369, 8
        %s371 = scalar_lea.vmem %s0, %s370
        %s372 = smul.u32 16, %s25
        %s373 = smul.u32 %s25, 16
        %s374 = ssub.s32 %s373, 1
        %p375 = scmp.gt.s32.totalorder %s374, 0
        %s376 = scalar_select %p375, %s374, 0
        %p377 = scmp.lt.s32.totalorder %s24, 1
        %s378 = scalar_select %p377, %s24, 1
        %p379 = scmp.lt.s32.totalorder %s376, 15
        %s380 = scalar_select %p379, %s376, 15
        %s381 = smul.addr %s380, 2
        %s382 = smul.addr %s378, 32
        %s383 = sadd.s32 %s381, %s382
        %s384 = smul.addr %s383, 8
        %s385 = scalar_lea.vmem %s1, %s384
        %s386 = smul.u32 %s25, 16
        %s387 = ssub.s32 %s386, 1
        %p388 = scmp.gt.s32.totalorder %s387, 0
        %s389 = scalar_select %p388, %s387, 0
        %s390 = smul.u32 %s25, 16
        %s391 = sadd.s32 %s390, 16
        %p392 = scmp.lt.s32.totalorder %s391, 15
        %s393 = scalar_select %p392, %s391, 15
        %p394 = scmp.lt.s32.totalorder %s24, 1
        %s395 = scalar_select %p394, %s24, 1
        %p396 = scmp.lt.s32.totalorder %s393, 15
        %s397 = scalar_select %p396, %s393, 15
        %s398 = smul.addr %s397, 2
        %s399 = smul.addr %s395, 32
        %s400 = sadd.s32 %s398, %s399
        %s401 = smul.addr %s400, 8
        %s402 = scalar_lea.vmem %s2, %s401
        %s403 = smul.u32 %s25, 16
        %s404 = sadd.s32 %s403, 16
        %p405 = scmp.lt.s32.totalorder %s404, 15
        %s406 = scalar_select %p405, %s404, 15
        %s407 = smul.u32 16, %s25
        %v408 = vld [vmem:[%s371] sm:$0xff]
        %v409 = vld [vmem:[%s371 + $0x8] sm:$0xff]
        %v410 = vld [vmem:[%s371 + $0x10] sm:$0xff]
        %v411 = vld [vmem:[%s371 + $0x18] sm:$0xff]
        %v412 = vld [vmem:[%s371 + $0x20] sm:$0xff]
        %v413 = vld [vmem:[%s371 + $0x28] sm:$0xff]
        %v414 = vld [vmem:[%s371 + $0x30] sm:$0xff]
        %v415 = vld [vmem:[%s371 + $0x38] sm:$0xff]
        %v416 = vld [vmem:[%s371 + $0x40] sm:$0xff]
        %v417 = vld [vmem:[%s371 + $0x48] sm:$0xff]
        %v418 = vld [vmem:[%s371 + $0x50] sm:$0xff]
        %v419 = vld [vmem:[%s371 + $0x58] sm:$0xff]
        %v420 = vld [vmem:[%s371 + $0x60] sm:$0xff]
        %v421 = vld [vmem:[%s371 + $0x68] sm:$0xff]
        %v422 = vld [vmem:[%s371 + $0x70] sm:$0xff]
        %v423 = vld [vmem:[%s371 + $0x78] sm:$0xff]
        %v424 = vld [vmem:[%s371 + $0x80] sm:$0xff]
        %v425 = vld [vmem:[%s371 + $0x88] sm:$0xff]
        %v426 = vld [vmem:[%s371 + $0x90] sm:$0xff]
        %v427 = vld [vmem:[%s371 + $0x98] sm:$0xff]
        %v428 = vld [vmem:[%s371 + $0xa0] sm:$0xff]
        %v429 = vld [vmem:[%s371 + $0xa8] sm:$0xff]
        %v430 = vld [vmem:[%s371 + $0xb0] sm:$0xff]
        %v431 = vld [vmem:[%s371 + $0xb8] sm:$0xff]
        %v432 = vld [vmem:[%s371 + $0xc0] sm:$0xff]
        %v433 = vld [vmem:[%s371 + $0xc8] sm:$0xff]
        %v434 = vld [vmem:[%s371 + $0xd0] sm:$0xff]
        %v435 = vld [vmem:[%s371 + $0xd8] sm:$0xff]
        %v436 = vld [vmem:[%s371 + $0xe0] sm:$0xff]
        %v437 = vld [vmem:[%s371 + $0xe8] sm:$0xff]
        %v438 = vld [vmem:[%s371 + $0xf0] sm:$0xff]
        %v439 = vld [vmem:[%s371 + $0xf8] sm:$0xff]
        %v440 = vld [vmem:[%s385] sm:$0xff]
        %v441 = vld [vmem:[%s385 + $0x8] sm:$0xff]
        %v442 = vld [vmem:[%s402] sm:$0xff]
        %v443 = vld [vmem:[%s402 + $0x8] sm:$0xff]
        %v444 = vld [vmem:[%s3] sm:$0xff]
        %v445 = vld [vmem:[%s3 + $0x8] sm:$0xff]
        %v446 = vld [vmem:[%s3 + $0x10] sm:$0xff]
        %v447 = vld [vmem:[%s3 + $0x18] sm:$0xff]
        %v448 = vld [vmem:[%s3 + $0x20] sm:$0xff]
        %v449 = vld [vmem:[%s3 + $0x28] sm:$0xff]
        %v450 = vld [vmem:[%s3 + $0x30] sm:$0xff]
        %v451 = vld [vmem:[%s3 + $0x38] sm:$0xff]
        %v452 = vld [vmem:[%s3 + $0x40] sm:$0xff]
        %v453 = vld [vmem:[%s3 + $0x48] sm:$0xff]
        %v454 = vld [vmem:[%s3 + $0x50] sm:$0xff]
        %v455 = vld [vmem:[%s3 + $0x58] sm:$0xff]
        %v456 = vld [vmem:[%s3 + $0x60] sm:$0xff]
        %v457 = vld [vmem:[%s3 + $0x68] sm:$0xff]
        %v458 = vld [vmem:[%s3 + $0x70] sm:$0xff]
        %v459 = vld [vmem:[%s3 + $0x78] sm:$0xff]
        %460 = vmatprep.subr.mxu0 0.0
        %461 = vmatpush1.msra.mxu0 %v444
        %462 = vmatprep.subr.mxu0 0.0
        %463 = vmatpush1.msra.mxu0 %v445
        %464 = vmatprep.subr.mxu0 0.0
        %465 = vmatpush1.msra.mxu0 %v446
        %466 = vmatprep.subr.mxu0 0.0
        %467 = vmatpush1.msra.mxu0 %v447
        %468 = vmatprep.subr.mxu0 0.0
        %469 = vmatpush1.msra.mxu0 %v448
        %470 = vmatprep.subr.mxu0 0.0
        %471 = vmatpush1.msra.mxu0 %v449
        %472 = vmatprep.subr.mxu0 0.0
        %473 = vmatpush1.msra.mxu0 %v450
        %474 = vmatprep.subr.mxu0 0.0
        %475 = vmatpush1.msra.mxu0 %v451
        %476 = vmatprep.subr.mxu0 0.0
        %477 = vmatpush1.msra.mxu0 %v452
        %478 = vmatprep.subr.mxu0 0.0
        %479 = vmatpush1.msra.mxu0 %v453
        %480 = vmatprep.subr.mxu0 0.0
        %481 = vmatpush1.msra.mxu0 %v454
        %482 = vmatprep.subr.mxu0 0.0
        %483 = vmatpush1.msra.mxu0 %v455
        %484 = vmatprep.subr.mxu0 0.0
        %485 = vmatpush1.msra.mxu0 %v456
        %486 = vmatprep.subr.mxu0 0.0
        %487 = vmatpush1.msra.mxu0 %v457
        %488 = vmatprep.subr.mxu0 0.0
        %489 = vmatpush1.msra.mxu0 %v458
        %490 = vmatprep.subr.mxu0 0.0
        %491 = vmatpush1.msra.mxu0 %v459
        %492 = vmatprep.subr.mxu0 0.0
        %493 = vmatpush1.msra.mxu0 0.0
        %494 = vmatprep.subr.mxu0 0.0
        %495 = vmatpush1.msra.mxu0 0.0
        %496 = vmatprep.subr.mxu0 0.0
        %497 = vmatpush1.msra.mxu0 0.0
        %498 = vmatprep.subr.mxu0 0.0
        %499 = vmatpush1.msra.mxu0 0.0
        %500 = vmatprep.subr.mxu0 0.0
        %501 = vmatpush1.msra.mxu0 0.0
        %502 = vmatprep.subr.mxu0 0.0
        %503 = vmatpush1.msra.mxu0 0.0
        %504 = vmatprep.subr.mxu0 0.0
        %505 = vmatpush1.msra.mxu0 0.0
        %506 = vmatprep.subr.mxu0 0.0
        %507 = vmatpush1.msra.mxu0 0.0
        %508 = vmatprep.subr.mxu0 0.0
        %509 = vmatpush1.msra.mxu0 0.0
        %510 = vmatprep.subr.mxu0 0.0
        %511 = vmatpush1.msra.mxu0 0.0
        %512 = vmatprep.subr.mxu0 0.0
        %513 = vmatpush1.msra.mxu0 0.0
        %514 = vmatprep.subr.mxu0 0.0
        %515 = vmatpush1.msra.mxu0 0.0
        %516 = vmatprep.subr.mxu0 0.0
        %517 = vmatpush1.msra.mxu0 0.0
        %518 = vmatprep.subr.mxu0 0.0
        %519 = vmatpush1.msra.mxu0 0.0
        %520 = vmatprep.subr.mxu0 0.0
        %521 = vmatpush1.msra.mxu0 0.0
        %522 = vmatprep.subr.mxu0 0.0
        %523 = vmatpush1.msra.mxu0 0.0
        %524 = vmatprep.mubr.f32.mxu0 0.0
        %525 = vmatmul.mubr.f32.gmra.mrb[0].mxu0 %v440
        %v526 = vpop.f32.mrb[0].mxu0
        %v527 = vadd.f32 0.0, %v526
        %v528 = vpop.f32.mrb[0].mxu0
        %529 = vmatprep.mubr.f32.mxu0 0.0
        %530 = vmatmul.mubr.f32.gmra.mrb[0].mxu0 %v441
        %v531 = vpop.f32.mrb[0].mxu0
        %v532 = vadd.f32 0.0, %v531
        %v533 = vpop.f32.mrb[0].mxu0
        %534 = vmatprep.mubr.f32.mxu0 0.0
        %535 = vmatmul.mubr.f32.gmra.mrb[0].mxu0 %v408
        %v536 = vpop.f32.mrb[0].mxu0
        %v537 = vadd.f32 0.0, %v536
        %v538 = vpop.f32.mrb[0].mxu0
        %539 = vmatprep.mubr.f32.mxu0 0.0
        %540 = vmatmul.mubr.f32.gmra.mrb[0].mxu0 %v409
        %v541 = vpop.f32.mrb[0].mxu0
        %v542 = vadd.f32 0.0, %v541
        %v543 = vpop.f32.mrb[0].mxu0
        %544 = vmatprep.mubr.f32.mxu0 0.0
        %545 = vmatmul.mubr.f32.gmra.mrb[0].mxu0 %v410
        %v546 = vpop.f32.mrb[0].mxu0
        %v547 = vadd.f32 0.0, %v546
        %v548 = vpop.f32.mrb[0].mxu0
        %549 = vmatprep.mubr.f32.mxu0 0.0
        %550 = vmatmul.mubr.f32.gmra.mrb[0].mxu0 %v411
        %v551 = vpop.f32.mrb[0].mxu0
        %v552 = vadd.f32 0.0, %v551
        %v553 = vpop.f32.mrb[0].mxu0
        %554 = vmatprep.mubr.f32.mxu0 0.0
        %555 = vmatmul.mubr.f32.gmra.mrb[0].mxu0 %v412
        %v556 = vpop.f32.mrb[0].mxu0
        %v557 = vadd.f32 0.0, %v556
        %v558 = vpop.f32.mrb[0].mxu0
        %559 = vmatprep.mubr.f32.mxu0 0.0
        %560 = vmatmul.mubr.f32.gmra.mrb[0].mxu0 %v413
        %v561 = vpop.f32.mrb[0].mxu0
        %v562 = vadd.f32 0.0, %v561
        %v563 = vpop.f32.mrb[0].mxu0
        %564 = vmatprep.mubr.f32.mxu0 0.0
        %565 = vmatmul.mubr.f32.gmra.mrb[0].mxu0 %v414
        %v566 = vpop.f32.mrb[0].mxu0
        %v567 = vadd.f32 0.0, %v566
        %v568 = vpop.f32.mrb[0].mxu0
        %569 = vmatprep.mubr.f32.mxu0 0.0
        %570 = vmatmul.mubr.f32.gmra.mrb[0].mxu0 %v415
        %v571 = vpop.f32.mrb[0].mxu0
        %v572 = vadd.f32 0.0, %v571
        %v573 = vpop.f32.mrb[0].mxu0
        %574 = vmatprep.mubr.f32.mxu0 0.0
        %575 = vmatmul.mubr.f32.gmra.mrb[0].mxu0 %v416
        %v576 = vpop.f32.mrb[0].mxu0
        %v577 = vadd.f32 0.0, %v576
        %v578 = vpop.f32.mrb[0].mxu0
        %579 = vmatprep.mubr.f32.mxu0 0.0
        %580 = vmatmul.mubr.f32.gmra.mrb[0].mxu0 %v417
        %v581 = vpop.f32.mrb[0].mxu0
        %v582 = vadd.f32 0.0, %v581
        %v583 = vpop.f32.mrb[0].mxu0
        %584 = vmatprep.mubr.f32.mxu0 0.0
        %585 = vmatmul.mubr.f32.gmra.mrb[0].mxu0 %v418
        %v586 = vpop.f32.mrb[0].mxu0
        %v587 = vadd.f32 0.0, %v586
        %v588 = vpop.f32.mrb[0].mxu0
        %589 = vmatprep.mubr.f32.mxu0 0.0
        %590 = vmatmul.mubr.f32.gmra.mrb[0].mxu0 %v419
        %v591 = vpop.f32.mrb[0].mxu0
        %v592 = vadd.f32 0.0, %v591
        %v593 = vpop.f32.mrb[0].mxu0
        %594 = vmatprep.mubr.f32.mxu0 0.0
        %595 = vmatmul.mubr.f32.gmra.mrb[0].mxu0 %v420
        %v596 = vpop.f32.mrb[0].mxu0
        %v597 = vadd.f32 0.0, %v596
        %v598 = vpop.f32.mrb[0].mxu0
        %599 = vmatprep.mubr.f32.mxu0 0.0
        %600 = vmatmul.mubr.f32.gmra.mrb[0].mxu0 %v421
        %v601 = vpop.f32.mrb[0].mxu0
        %v602 = vadd.f32 0.0, %v601
        %v603 = vpop.f32.mrb[0].mxu0
        %604 = vmatprep.mubr.f32.mxu0 0.0
        %605 = vmatmul.mubr.f32.gmra.mrb[0].mxu0 %v422
        %v606 = vpop.f32.mrb[0].mxu0
        %v607 = vadd.f32 0.0, %v606
        %v608 = vpop.f32.mrb[0].mxu0
        %609 = vmatprep.mubr.f32.mxu0 0.0
        %610 = vmatmul.mubr.f32.gmra.mrb[0].mxu0 %v423
        %v611 = vpop.f32.mrb[0].mxu0
        %v612 = vadd.f32 0.0, %v611
        %v613 = vpop.f32.mrb[0].mxu0
        %614 = vmatprep.mubr.f32.mxu0 0.0
        %615 = vmatmul.mubr.f32.gmra.mrb[0].mxu0 %v424
        %v616 = vpop.f32.mrb[0].mxu0
        %v617 = vadd.f32 0.0, %v616
        %v618 = vpop.f32.mrb[0].mxu0
        %619 = vmatprep.mubr.f32.mxu0 0.0
        %620 = vmatmul.mubr.f32.gmra.mrb[0].mxu0 %v425
        %v621 = vpop.f32.mrb[0].mxu0
        %v622 = vadd.f32 0.0, %v621
        %v623 = vpop.f32.mrb[0].mxu0
        %624 = vmatprep.mubr.f32.mxu0 0.0
        %625 = vmatmul.mubr.f32.gmra.mrb[0].mxu0 %v426
        %v626 = vpop.f32.mrb[0].mxu0
        %v627 = vadd.f32 0.0, %v626
        %v628 = vpop.f32.mrb[0].mxu0
        %629 = vmatprep.mubr.f32.mxu0 0.0
        %630 = vmatmul.mubr.f32.gmra.mrb[0].mxu0 %v427
        %v631 = vpop.f32.mrb[0].mxu0
        %v632 = vadd.f32 0.0, %v631
        %v633 = vpop.f32.mrb[0].mxu0
        %634 = vmatprep.mubr.f32.mxu0 0.0
        %635 = vmatmul.mubr.f32.gmra.mrb[0].mxu0 %v428
        %v636 = vpop.f32.mrb[0].mxu0
        %v637 = vadd.f32 0.0, %v636
        %v638 = vpop.f32.mrb[0].mxu0
        %639 = vmatprep.mubr.f32.mxu0 0.0
        %640 = vmatmul.mubr.f32.gmra.mrb[0].mxu0 %v429
        %v641 = vpop.f32.mrb[0].mxu0
        %v642 = vadd.f32 0.0, %v641
        %v643 = vpop.f32.mrb[0].mxu0
        %644 = vmatprep.mubr.f32.mxu0 0.0
        %645 = vmatmul.mubr.f32.gmra.mrb[0].mxu0 %v430
        %v646 = vpop.f32.mrb[0].mxu0
        %v647 = vadd.f32 0.0, %v646
        %v648 = vpop.f32.mrb[0].mxu0
        %649 = vmatprep.mubr.f32.mxu0 0.0
        %650 = vmatmul.mubr.f32.gmra.mrb[0].mxu0 %v431
        %v651 = vpop.f32.mrb[0].mxu0
        %v652 = vadd.f32 0.0, %v651
        %v653 = vpop.f32.mrb[0].mxu0
        %654 = vmatprep.mubr.f32.mxu0 0.0
        %655 = vmatmul.mubr.f32.gmra.mrb[0].mxu0 %v432
        %v656 = vpop.f32.mrb[0].mxu0
        %v657 = vadd.f32 0.0, %v656
        %v658 = vpop.f32.mrb[0].mxu0
        %659 = vmatprep.mubr.f32.mxu0 0.0
        %660 = vmatmul.mubr.f32.gmra.mrb[0].mxu0 %v433
        %v661 = vpop.f32.mrb[0].mxu0
        %v662 = vadd.f32 0.0, %v661
        %v663 = vpop.f32.mrb[0].mxu0
        %664 = vmatprep.mubr.f32.mxu0 0.0
        %665 = vmatmul.mubr.f32.gmra.mrb[0].mxu0 %v434
        %v666 = vpop.f32.mrb[0].mxu0
        %v667 = vadd.f32 0.0, %v666
        %v668 = vpop.f32.mrb[0].mxu0
        %669 = vmatprep.mubr.f32.mxu0 0.0
        %670 = vmatmul.mubr.f32.gmra.mrb[0].mxu0 %v435
        %v671 = vpop.f32.mrb[0].mxu0
        %v672 = vadd.f32 0.0, %v671
        %v673 = vpop.f32.mrb[0].mxu0
        %674 = vmatprep.mubr.f32.mxu0 0.0
        %675 = vmatmul.mubr.f32.gmra.mrb[0].mxu0 %v436
        %v676 = vpop.f32.mrb[0].mxu0
        %v677 = vadd.f32 0.0, %v676
        %v678 = vpop.f32.mrb[0].mxu0
        %679 = vmatprep.mubr.f32.mxu0 0.0
        %680 = vmatmul.mubr.f32.gmra.mrb[0].mxu0 %v437
        %v681 = vpop.f32.mrb[0].mxu0
        %v682 = vadd.f32 0.0, %v681
        %v683 = vpop.f32.mrb[0].mxu0
        %684 = vmatprep.mubr.f32.mxu0 0.0
        %685 = vmatmul.mubr.f32.gmra.mrb[0].mxu0 %v438
        %v686 = vpop.f32.mrb[0].mxu0
        %v687 = vadd.f32 0.0, %v686
        %v688 = vpop.f32.mrb[0].mxu0
        %689 = vmatprep.mubr.f32.mxu0 0.0
        %690 = vmatmul.mubr.f32.gmra.mrb[0].mxu0 %v439
        %v691 = vpop.f32.mrb[0].mxu0
        %v692 = vadd.f32 0.0, %v691
        %v693 = vpop.f32.mrb[0].mxu0
        %694 = vmatprep.mubr.f32.mxu0 0.0
        %695 = vmatmul.mubr.f32.gmra.mrb[0].mxu0 %v442
        %v696 = vpop.f32.mrb[0].mxu0
        %v697 = vadd.f32 0.0, %v696
        %v698 = vpop.f32.mrb[0].mxu0
        %699 = vmatprep.mubr.f32.mxu0 0.0
        %700 = vmatmul.mubr.f32.gmra.mrb[0].mxu0 %v443
        %v701 = vpop.f32.mrb[0].mxu0
        %v702 = vadd.f32 0.0, %v701
        %v703 = vpop.f32.mrb[0].mxu0
        %704 = vdwg.mxu0
        %v705 = vmax.f32 %v527, 0.0
        %v706 = vmax.f32 %v532, 0.0
        %v707 = vmax.f32 %v537, 0.0
        %v708 = vmax.f32 %v542, 0.0
        %v709 = vmax.f32 %v547, 0.0
        %v710 = vmax.f32 %v552, 0.0
        %v711 = vmax.f32 %v557, 0.0
        %v712 = vmax.f32 %v562, 0.0
        %v713 = vmax.f32 %v567, 0.0
        %v714 = vmax.f32 %v572, 0.0
        %v715 = vmax.f32 %v577, 0.0
        %v716 = vmax.f32 %v582, 0.0
        %v717 = vmax.f32 %v587, 0.0
        %v718 = vmax.f32 %v592, 0.0
        %v719 = vmax.f32 %v597, 0.0
        %v720 = vmax.f32 %v602, 0.0
        %v721 = vmax.f32 %v607, 0.0
        %v722 = vmax.f32 %v612, 0.0
        %v723 = vmax.f32 %v617, 0.0
        %v724 = vmax.f32 %v622, 0.0
        %v725 = vmax.f32 %v627, 0.0
        %v726 = vmax.f32 %v632, 0.0
        %v727 = vmax.f32 %v637, 0.0
        %v728 = vmax.f32 %v642, 0.0
        %v729 = vmax.f32 %v647, 0.0
        %v730 = vmax.f32 %v652, 0.0
        %v731 = vmax.f32 %v657, 0.0
        %v732 = vmax.f32 %v662, 0.0
        %v733 = vmax.f32 %v667, 0.0
        %v734 = vmax.f32 %v672, 0.0
        %v735 = vmax.f32 %v677, 0.0
        %v736 = vmax.f32 %v682, 0.0
        %v737 = vmax.f32 %v687, 0.0
        %v738 = vmax.f32 %v692, 0.0
        %v739 = vmax.f32 %v697, 0.0
        %v740 = vmax.f32 %v702, 0.0
        %741 = vst [vmem:[#allocation2] sm:$0xff] %v705
        %742 = vst [vmem:[#allocation2 + $0x8] sm:$0xff] %v706
        %743 = vst [vmem:[#allocation2 + $0x10] sm:$0xff] %v707
        %744 = vst [vmem:[#allocation2 + $0x18] sm:$0xff] %v708
        %745 = vst [vmem:[#allocation2 + $0x20] sm:$0xff] %v709
        %746 = vst [vmem:[#allocation2 + $0x28] sm:$0xff] %v710
        %747 = vst [vmem:[#allocation2 + $0x30] sm:$0xff] %v711
        %748 = vst [vmem:[#allocation2 + $0x38] sm:$0xff] %v712
        %749 = vst [vmem:[#allocation2 + $0x40] sm:$0xff] %v713
        %750 = vst [vmem:[#allocation2 + $0x48] sm:$0xff] %v714
        %751 = vst [vmem:[#allocation2 + $0x50] sm:$0xff] %v715
        %752 = vst [vmem:[#allocation2 + $0x58] sm:$0xff] %v716
        %753 = vst [vmem:[#allocation2 + $0x60] sm:$0xff] %v717
        %754 = vst [vmem:[#allocation2 + $0x68] sm:$0xff] %v718
        %755 = vst [vmem:[#allocation2 + $0x70] sm:$0xff] %v719
        %756 = vst [vmem:[#allocation2 + $0x78] sm:$0xff] %v720
        %757 = vst [vmem:[#allocation2 + $0x80] sm:$0xff] %v721
        %758 = vst [vmem:[#allocation2 + $0x88] sm:$0xff] %v722
        %759 = vst [vmem:[#allocation2 + $0x90] sm:$0xff] %v723
        %760 = vst [vmem:[#allocation2 + $0x98] sm:$0xff] %v724
        %761 = vst [vmem:[#allocation2 + $0xa0] sm:$0xff] %v725
        %762 = vst [vmem:[#allocation2 + $0xa8] sm:$0xff] %v726
        %763 = vst [vmem:[#allocation2 + $0xb0] sm:$0xff] %v727
        %764 = vst [vmem:[#allocation2 + $0xb8] sm:$0xff] %v728
        %765 = vst [vmem:[#allocation2 + $0xc0] sm:$0xff] %v729
        %766 = vst [vmem:[#allocation2 + $0xc8] sm:$0xff] %v730
        %767 = vst [vmem:[#allocation2 + $0xd0] sm:$0xff] %v731
        %768 = vst [vmem:[#allocation2 + $0xd8] sm:$0xff] %v732
        %769 = vst [vmem:[#allocation2 + $0xe0] sm:$0xff] %v733
        %770 = vst [vmem:[#allocation2 + $0xe8] sm:$0xff] %v734
        %771 = vst [vmem:[#allocation2 + $0xf0] sm:$0xff] %v735
        %772 = vst [vmem:[#allocation2 + $0xf8] sm:$0xff] %v736
        %773 = vst [vmem:[#allocation2 + $0x100] sm:$0xff] %v737
        %774 = vst [vmem:[#allocation2 + $0x108] sm:$0xff] %v738
        %775 = vst [vmem:[#allocation2 + $0x110] sm:$0xff] %v739
        %776 = vst [vmem:[#allocation2 + $0x118] sm:$0xff] %v740
        %p777 = scmp.eq.s32.totalorder %s25, 0
        // Predicated region
        $region45: #{spike_bottleneck_forward_nhwc.1} parent=43 // pred_check
          %p778 = pneg %p777
        $region46: #{spike_bottleneck_forward_nhwc.1} parent=43 // pred_check_branch
          %780 = sbr.rel (%p778) target = $region48
        $region47: #{spike_bottleneck_forward_nhwc.1} parent=43 // pred_region
          %781 = vst [vmem:[#allocation2] sm:$0xff] 0.0
          %782 = vst [vmem:[#allocation2 + $0x8] sm:$0xff] 0.0
          %s783 = scalar_lea.vmem [#allocation2], 272
          %784 = vst [vmem:[%s783] sm:$0xff] 0.0
          %785 = vst [vmem:[%s783 + $0x8] sm:$0xff] 0.0
        $region48: #{spike_bottleneck_forward_nhwc.1} parent=43 // pred_fallthru
          _
        %v786 = vld [vmem:[#allocation2] sm:$0xff]
        %v787 = vld [vmem:[#allocation2 + $0x8] sm:$0xff]
        %v788 = vld [vmem:[#allocation2 + $0x10] sm:$0xff]
        %v789 = vld [vmem:[#allocation2 + $0x18] sm:$0xff]
        %v790 = vld [vmem:[#allocation2 + $0x20] sm:$0xff]
        %v791 = vld [vmem:[#allocation2 + $0x28] sm:$0xff]
        %v792 = vld [vmem:[#allocation2 + $0x30] sm:$0xff]
        %v793 = vld [vmem:[#allocation2 + $0x38] sm:$0xff]
        %v794 = vld [vmem:[#allocation2 + $0x40] sm:$0xff]
        %v795 = vld [vmem:[#allocation2 + $0x48] sm:$0xff]
        %v796 = vld [vmem:[#allocation2 + $0x50] sm:$0xff]
        %v797 = vld [vmem:[#allocation2 + $0x58] sm:$0xff]
        %v798 = vld [vmem:[#allocation2 + $0x60] sm:$0xff]
        %v799 = vld [vmem:[#allocation2 + $0x68] sm:$0xff]
        %v800 = vld [vmem:[#allocation2 + $0x70] sm:$0xff]
        %v801 = vld [vmem:[#allocation2 + $0x78] sm:$0xff]
        %v802 = vld [vmem:[#allocation2 + $0x80] sm:$0xff]
        %v803 = vld [vmem:[#allocation2 + $0x88] sm:$0xff]
        %v804 = vld [vmem:[#allocation2 + $0x90] sm:$0xff]
        %v805 = vld [vmem:[#allocation2 + $0x98] sm:$0xff]
        %v806 = vld [vmem:[#allocation2 + $0xa0] sm:$0xff]
        %v807 = vld [vmem:[#allocation2 + $0xa8] sm:$0xff]
        %v808 = vld [vmem:[#allocation2 + $0xb0] sm:$0xff]
        %v809 = vld [vmem:[#allocation2 + $0xb8] sm:$0xff]
        %v810 = vld [vmem:[#allocation2 + $0xc0] sm:$0xff]
        %v811 = vld [vmem:[#allocation2 + $0xc8] sm:$0xff]
        %v812 = vld [vmem:[#allocation2 + $0xd0] sm:$0xff]
        %v813 = vld [vmem:[#allocation2 + $0xd8] sm:$0xff]
        %v814 = vld [vmem:[#allocation2 + $0xe0] sm:$0xff]
        %v815 = vld [vmem:[#allocation2 + $0xe8] sm:$0xff]
        %v816 = vld [vmem:[#allocation2 + $0xf0] sm:$0xff]
        %v817 = vld [vmem:[#allocation2 + $0xf8] sm:$0xff]
        %818 = vst [vmem:[#allocation3] sm:$0x1] 0.0
        %819 = vst [vmem:[#allocation3 + $0x90] sm:$0x1] 0.0
        %820 = vst [vmem:[#allocation3 + $0x120] sm:$0x1] 0.0
        %821 = vst [vmem:[#allocation3 + $0x1b0] sm:$0x1] 0.0
        %822 = vst [vmem:[#allocation3 + $0x240] sm:$0x1] 0.0
        %823 = vst [vmem:[#allocation3 + $0x2d0] sm:$0x1] 0.0
        %824 = vst [vmem:[#allocation3 + $0x360] sm:$0x1] 0.0
        %825 = vst [vmem:[#allocation3 + $0x3f0] sm:$0x1] 0.0
        %826 = vst [vmem:[#allocation3 + $0x480] sm:$0x1] 0.0
        %827 = vst [vmem:[#allocation3 + $0x510] sm:$0x1] 0.0
        %828 = vst [vmem:[#allocation3 + $0x5a0] sm:$0x1] 0.0
        %829 = vst [vmem:[#allocation3 + $0x630] sm:$0x1] 0.0
        %830 = vst [vmem:[#allocation3 + $0x6c0] sm:$0x1] 0.0
        %831 = vst [vmem:[#allocation3 + $0x750] sm:$0x1] 0.0
        %832 = vst [vmem:[#allocation3 + $0x7e0] sm:$0x1] 0.0
        %833 = vst [vmem:[#allocation3 + $0x870] sm:$0x1] 0.0
        %vm866 = vcmask 1040384
        %v867 = vrot.slane %v786, 7
        %v868 = vrot.slane %v787, 7
        %v869 = vsel %vm866, %v867, %v868
        %v870 = vrot.slane %v788, 7
        %v871 = vrot.slane %v789, 7
        %v872 = vsel %vm866, %v870, %v871
        %v873 = vrot.slane %v790, 7
        %v874 = vrot.slane %v791, 7
        %v875 = vsel %vm866, %v873, %v874
        %v876 = vrot.slane %v792, 7
        %v877 = vrot.slane %v793, 7
        %v878 = vsel %vm866, %v876, %v877
        %v879 = vrot.slane %v794, 7
        %v880 = vrot.slane %v795, 7
        %v881 = vsel %vm866, %v879, %v880
        %v882 = vrot.slane %v796, 7
        %v883 = vrot.slane %v797, 7
        %v884 = vsel %vm866, %v882, %v883
        %v885 = vrot.slane %v798, 7
        %v886 = vrot.slane %v799, 7
        %v887 = vsel %vm866, %v885, %v886
        %v888 = vrot.slane %v800, 7
        %v889 = vrot.slane %v801, 7
        %v890 = vsel %vm866, %v888, %v889
        %v891 = vrot.slane %v802, 7
        %v892 = vrot.slane %v803, 7
        %v893 = vsel %vm866, %v891, %v892
        %v894 = vrot.slane %v804, 7
        %v895 = vrot.slane %v805, 7
        %v896 = vsel %vm866, %v894, %v895
        %v897 = vrot.slane %v806, 7
        %v898 = vrot.slane %v807, 7
        %v899 = vsel %vm866, %v897, %v898
        %v900 = vrot.slane %v808, 7
        %v901 = vrot.slane %v809, 7
        %v902 = vsel %vm866, %v900, %v901
        %v903 = vrot.slane %v810, 7
        %v904 = vrot.slane %v811, 7
        %v905 = vsel %vm866, %v903, %v904
        %v906 = vrot.slane %v812, 7
        %v907 = vrot.slane %v813, 7
        %v908 = vsel %vm866, %v906, %v907
        %v909 = vrot.slane %v814, 7
        %v910 = vrot.slane %v815, 7
        %v911 = vsel %vm866, %v909, %v910
        %v912 = vrot.slane %v816, 7
        %v913 = vrot.slane %v817, 7
        %v914 = vsel %vm866, %v912, %v913
        %947 = vst [vmem:[#allocation3] sm:$0xfe] %v867
        %948 = vst [vmem:[#allocation3 + $0x48] sm:$0xff] %v869
        %949 = vst [vmem:[#allocation3 + $0x90] sm:$0xfe] %v870
        %950 = vst [vmem:[#allocation3 + $0xd8] sm:$0xff] %v872
        %951 = vst [vmem:[#allocation3 + $0x120] sm:$0xfe] %v873
        %952 = vst [vmem:[#allocation3 + $0x168] sm:$0xff] %v875
        %953 = vst [vmem:[#allocation3 + $0x1b0] sm:$0xfe] %v876
        %954 = vst [vmem:[#allocation3 + $0x1f8] sm:$0xff] %v878
        %955 = vst [vmem:[#allocation3 + $0x240] sm:$0xfe] %v879
        %956 = vst [vmem:[#allocation3 + $0x288] sm:$0xff] %v881
        %957 = vst [vmem:[#allocation3 + $0x2d0] sm:$0xfe] %v882
        %958 = vst [vmem:[#allocation3 + $0x318] sm:$0xff] %v884
        %959 = vst [vmem:[#allocation3 + $0x360] sm:$0xfe] %v885
        %960 = vst [vmem:[#allocation3 + $0x3a8] sm:$0xff] %v887
        %961 = vst [vmem:[#allocation3 + $0x3f0] sm:$0xfe] %v888
        %962 = vst [vmem:[#allocation3 + $0x438] sm:$0xff] %v890
        %963 = vst [vmem:[#allocation3 + $0x480] sm:$0xfe] %v891
        %964 = vst [vmem:[#allocation3 + $0x4c8] sm:$0xff] %v893
        %965 = vst [vmem:[#allocation3 + $0x510] sm:$0xfe] %v894
        %966 = vst [vmem:[#allocation3 + $0x558] sm:$0xff] %v896
        %967 = vst [vmem:[#allocation3 + $0x5a0] sm:$0xfe] %v897
        %968 = vst [vmem:[#allocation3 + $0x5e8] sm:$0xff] %v899
        %969 = vst [vmem:[#allocation3 + $0x630] sm:$0xfe] %v900
        %970 = vst [vmem:[#allocation3 + $0x678] sm:$0xff] %v902
        %971 = vst [vmem:[#allocation3 + $0x6c0] sm:$0xfe] %v903
        %972 = vst [vmem:[#allocation3 + $0x708] sm:$0xff] %v905
        %973 = vst [vmem:[#allocation3 + $0x750] sm:$0xfe] %v906
        %974 = vst [vmem:[#allocation3 + $0x798] sm:$0xff] %v908
        %975 = vst [vmem:[#allocation3 + $0x7e0] sm:$0xfe] %v909
        %976 = vst [vmem:[#allocation3 + $0x828] sm:$0xff] %v911
        %977 = vst [vmem:[#allocation3 + $0x870] sm:$0xfe] %v912
        %978 = vst [vmem:[#allocation3 + $0x8b8] sm:$0xff] %v914
        %979 = vst [vmem:[#allocation3 + $0x8] sm:$0xff] %v786
        %980 = vst [vmem:[#allocation3 + $0x50] sm:$0xff] %v787
        %981 = vst [vmem:[#allocation3 + $0x98] sm:$0xff] %v788
        %982 = vst [vmem:[#allocation3 + $0xe0] sm:$0xff] %v789
        %983 = vst [vmem:[#allocation3 + $0x128] sm:$0xff] %v790
        %984 = vst [vmem:[#allocation3 + $0x170] sm:$0xff] %v791
        %985 = vst [vmem:[#allocation3 + $0x1b8] sm:$0xff] %v792
        %986 = vst [vmem:[#allocation3 + $0x200] sm:$0xff] %v793
        %987 = vst [vmem:[#allocation3 + $0x248] sm:$0xff] %v794
        %988 = vst [vmem:[#allocation3 + $0x290] sm:$0xff] %v795
        %989 = vst [vmem:[#allocation3 + $0x2d8] sm:$0xff] %v796
        %990 = vst [vmem:[#allocation3 + $0x320] sm:$0xff] %v797
        %991 = vst [vmem:[#allocation3 + $0x368] sm:$0xff] %v798
        %992 = vst [vmem:[#allocation3 + $0x3b0] sm:$0xff] %v799
        %993 = vst [vmem:[#allocation3 + $0x3f8] sm:$0xff] %v800
        %994 = vst [vmem:[#allocation3 + $0x440] sm:$0xff] %v801
        %995 = vst [vmem:[#allocation3 + $0x488] sm:$0xff] %v802
        %996 = vst [vmem:[#allocation3 + $0x4d0] sm:$0xff] %v803
        %997 = vst [vmem:[#allocation3 + $0x518] sm:$0xff] %v804
        %998 = vst [vmem:[#allocation3 + $0x560] sm:$0xff] %v805
        %999 = vst [vmem:[#allocation3 + $0x5a8] sm:$0xff] %v806
        %1000 = vst [vmem:[#allocation3 + $0x5f0] sm:$0xff] %v807
        %1001 = vst [vmem:[#allocation3 + $0x638] sm:$0xff] %v808
        %1002 = vst [vmem:[#allocation3 + $0x680] sm:$0xff] %v809
        %1003 = vst [vmem:[#allocation3 + $0x6c8] sm:$0xff] %v810
        %1004 = vst [vmem:[#allocation3 + $0x710] sm:$0xff] %v811
        %1005 = vst [vmem:[#allocation3 + $0x758] sm:$0xff] %v812
        %1006 = vst [vmem:[#allocation3 + $0x7a0] sm:$0xff] %v813
        %1007 = vst [vmem:[#allocation3 + $0x7e8] sm:$0xff] %v814
        %1008 = vst [vmem:[#allocation3 + $0x830] sm:$0xff] %v815
        %1009 = vst [vmem:[#allocation3 + $0x878] sm:$0xff] %v816
        %1010 = vst [vmem:[#allocation3 + $0x8c0] sm:$0xff] %v817
        %vm1011 = vcmask 1046528
        %v1012 = vrot.slane %v786, 1
        %v1013 = vrot.slane %v787, 1
        %v1014 = vsel %vm1011, %v1012, %v1013
        %v1015 = vrot.slane %v788, 1
        %v1016 = vrot.slane %v789, 1
        %v1017 = vsel %vm1011, %v1015, %v1016
        %v1018 = vrot.slane %v790, 1
        %v1019 = vrot.slane %v791, 1
        %v1020 = vsel %vm1011, %v1018, %v1019
        %v1021 = vrot.slane %v792, 1
        %v1022 = vrot.slane %v793, 1
        %v1023 = vsel %vm1011, %v1021, %v1022
        %v1024 = vrot.slane %v794, 1
        %v1025 = vrot.slane %v795, 1
        %v1026 = vsel %vm1011, %v1024, %v1025
        %v1027 = vrot.slane %v796, 1
        %v1028 = vrot.slane %v797, 1
        %v1029 = vsel %vm1011, %v1027, %v1028
        %v1030 = vrot.slane %v798, 1
        %v1031 = vrot.slane %v799, 1
        %v1032 = vsel %vm1011, %v1030, %v1031
        %v1033 = vrot.slane %v800, 1
        %v1034 = vrot.slane %v801, 1
        %v1035 = vsel %vm1011, %v1033, %v1034
        %v1036 = vrot.slane %v802, 1
        %v1037 = vrot.slane %v803, 1
        %v1038 = vsel %vm1011, %v1036, %v1037
        %v1039 = vrot.slane %v804, 1
        %v1040 = vrot.slane %v805, 1
        %v1041 = vsel %vm1011, %v1039, %v1040
        %v1042 = vrot.slane %v806, 1
        %v1043 = vrot.slane %v807, 1
        %v1044 = vsel %vm1011, %v1042, %v1043
        %v1045 = vrot.slane %v808, 1
        %v1046 = vrot.slane %v809, 1
        %v1047 = vsel %vm1011, %v1045, %v1046
        %v1048 = vrot.slane %v810, 1
        %v1049 = vrot.slane %v811, 1
        %v1050 = vsel %vm1011, %v1048, %v1049
        %v1051 = vrot.slane %v812, 1
        %v1052 = vrot.slane %v813, 1
        %v1053 = vsel %vm1011, %v1051, %v1052
        %v1054 = vrot.slane %v814, 1
        %v1055 = vrot.slane %v815, 1
        %v1056 = vsel %vm1011, %v1054, %v1055
        %v1057 = vrot.slane %v816, 1
        %v1058 = vrot.slane %v817, 1
        %v1059 = vsel %vm1011, %v1057, %v1058
        %1092 = vst [vmem:[#allocation3 + $0x10] sm:$0xff] %v1014
        %1093 = vst [vmem:[#allocation3 + $0x58] sm:$0x7f] %v1013
        %1094 = vst [vmem:[#allocation3 + $0xa0] sm:$0xff] %v1017
        %1095 = vst [vmem:[#allocation3 + $0xe8] sm:$0x7f] %v1016
        %1096 = vst [vmem:[#allocation3 + $0x130] sm:$0xff] %v1020
        %1097 = vst [vmem:[#allocation3 + $0x178] sm:$0x7f] %v1019
        %1098 = vst [vmem:[#allocation3 + $0x1c0] sm:$0xff] %v1023
        %1099 = vst [vmem:[#allocation3 + $0x208] sm:$0x7f] %v1022
        %1100 = vst [vmem:[#allocation3 + $0x250] sm:$0xff] %v1026
        %1101 = vst [vmem:[#allocation3 + $0x298] sm:$0x7f] %v1025
        %1102 = vst [vmem:[#allocation3 + $0x2e0] sm:$0xff] %v1029
        %1103 = vst [vmem:[#allocation3 + $0x328] sm:$0x7f] %v1028
        %1104 = vst [vmem:[#allocation3 + $0x370] sm:$0xff] %v1032
        %1105 = vst [vmem:[#allocation3 + $0x3b8] sm:$0x7f] %v1031
        %1106 = vst [vmem:[#allocation3 + $0x400] sm:$0xff] %v1035
        %1107 = vst [vmem:[#allocation3 + $0x448] sm:$0x7f] %v1034
        %1108 = vst [vmem:[#allocation3 + $0x490] sm:$0xff] %v1038
        %1109 = vst [vmem:[#allocation3 + $0x4d8] sm:$0x7f] %v1037
        %1110 = vst [vmem:[#allocation3 + $0x520] sm:$0xff] %v1041
        %1111 = vst [vmem:[#allocation3 + $0x568] sm:$0x7f] %v1040
        %1112 = vst [vmem:[#allocation3 + $0x5b0] sm:$0xff] %v1044
        %1113 = vst [vmem:[#allocation3 + $0x5f8] sm:$0x7f] %v1043
        %1114 = vst [vmem:[#allocation3 + $0x640] sm:$0xff] %v1047
        %1115 = vst [vmem:[#allocation3 + $0x688] sm:$0x7f] %v1046
        %1116 = vst [vmem:[#allocation3 + $0x6d0] sm:$0xff] %v1050
        %1117 = vst [vmem:[#allocation3 + $0x718] sm:$0x7f] %v1049
        %1118 = vst [vmem:[#allocation3 + $0x760] sm:$0xff] %v1053
        %1119 = vst [vmem:[#allocation3 + $0x7a8] sm:$0x7f] %v1052
        %1120 = vst [vmem:[#allocation3 + $0x7f0] sm:$0xff] %v1056
        %1121 = vst [vmem:[#allocation3 + $0x838] sm:$0x7f] %v1055
        %1122 = vst [vmem:[#allocation3 + $0x880] sm:$0xff] %v1059
        %1123 = vst [vmem:[#allocation3 + $0x8c8] sm:$0x7f] %v1058
        %1124 = vst [vmem:[#allocation3 + $0x5f] sm:$0x1] 0.0
        %1125 = vst [vmem:[#allocation3 + $0xef] sm:$0x1] 0.0
        %1126 = vst [vmem:[#allocation3 + $0x17f] sm:$0x1] 0.0
        %1127 = vst [vmem:[#allocation3 + $0x20f] sm:$0x1] 0.0
        %1128 = vst [vmem:[#allocation3 + $0x29f] sm:$0x1] 0.0
        %1129 = vst [vmem:[#allocation3 + $0x32f] sm:$0x1] 0.0
        %1130 = vst [vmem:[#allocation3 + $0x3bf] sm:$0x1] 0.0
        %1131 = vst [vmem:[#allocation3 + $0x44f] sm:$0x1] 0.0
        %1132 = vst [vmem:[#allocation3 + $0x4df] sm:$0x1] 0.0
        %1133 = vst [vmem:[#allocation3 + $0x56f] sm:$0x1] 0.0
        %1134 = vst [vmem:[#allocation3 + $0x5ff] sm:$0x1] 0.0
        %1135 = vst [vmem:[#allocation3 + $0x68f] sm:$0x1] 0.0
        %1136 = vst [vmem:[#allocation3 + $0x71f] sm:$0x1] 0.0
        %1137 = vst [vmem:[#allocation3 + $0x7af] sm:$0x1] 0.0
        %1138 = vst [vmem:[#allocation3 + $0x83f] sm:$0x1] 0.0
        %1139 = vst [vmem:[#allocation3 + $0x8cf] sm:$0x1] 0.0
        %s1140 = scalar_lea.vmem [#allocation2], 16
        %v1141 = vld [vmem:[%s1140] sm:$0xff]
        %v1142 = vld [vmem:[%s1140 + $0x8] sm:$0xff]
        %v1143 = vld [vmem:[%s1140 + $0x10] sm:$0xff]
        %v1144 = vld [vmem:[%s1140 + $0x18] sm:$0xff]
        %v1145 = vld [vmem:[%s1140 + $0x20] sm:$0xff]
        %v1146 = vld [vmem:[%s1140 + $0x28] sm:$0xff]
        %v1147 = vld [vmem:[%s1140 + $0x30] sm:$0xff]
        %v1148 = vld [vmem:[%s1140 + $0x38] sm:$0xff]
        %v1149 = vld [vmem:[%s1140 + $0x40] sm:$0xff]
        %v1150 = vld [vmem:[%s1140 + $0x48] sm:$0xff]
        %v1151 = vld [vmem:[%s1140 + $0x50] sm:$0xff]
        %v1152 = vld [vmem:[%s1140 + $0x58] sm:$0xff]
        %v1153 = vld [vmem:[%s1140 + $0x60] sm:$0xff]
        %v1154 = vld [vmem:[%s1140 + $0x68] sm:$0xff]
        %v1155 = vld [vmem:[%s1140 + $0x70] sm:$0xff]
        %v1156 = vld [vmem:[%s1140 + $0x78] sm:$0xff]
        %v1157 = vld [vmem:[%s1140 + $0x80] sm:$0xff]
        %v1158 = vld [vmem:[%s1140 + $0x88] sm:$0xff]
        %v1159 = vld [vmem:[%s1140 + $0x90] sm:$0xff]
        %v1160 = vld [vmem:[%s1140 + $0x98] sm:$0xff]
        %v1161 = vld [vmem:[%s1140 + $0xa0] sm:$0xff]
        %v1162 = vld [vmem:[%s1140 + $0xa8] sm:$0xff]
        %v1163 = vld [vmem:[%s1140 + $0xb0] sm:$0xff]
        %v1164 = vld [vmem:[%s1140 + $0xb8] sm:$0xff]
        %v1165 = vld [vmem:[%s1140 + $0xc0] sm:$0xff]
        %v1166 = vld [vmem:[%s1140 + $0xc8] sm:$0xff]
        %v1167 = vld [vmem:[%s1140 + $0xd0] sm:$0xff]
        %v1168 = vld [vmem:[%s1140 + $0xd8] sm:$0xff]
        %v1169 = vld [vmem:[%s1140 + $0xe0] sm:$0xff]
        %v1170 = vld [vmem:[%s1140 + $0xe8] sm:$0xff]
        %v1171 = vld [vmem:[%s1140 + $0xf0] sm:$0xff]
        %v1172 = vld [vmem:[%s1140 + $0xf8] sm:$0xff]
        %1173 = vst [vmem:[#allocation3 + $0x18] sm:$0x1] 0.0
        %1174 = vst [vmem:[#allocation3 + $0xa8] sm:$0x1] 0.0
        %1175 = vst [vmem:[#allocation3 + $0x138] sm:$0x1] 0.0
        %1176 = vst [vmem:[#allocation3 + $0x1c8] sm:$0x1] 0.0
        %1177 = vst [vmem:[#allocation3 + $0x258] sm:$0x1] 0.0
        %1178 = vst [vmem:[#allocation3 + $0x2e8] sm:$0x1] 0.0
        %1179 = vst [vmem:[#allocation3 + $0x378] sm:$0x1] 0.0
        %1180 = vst [vmem:[#allocation3 + $0x408] sm:$0x1] 0.0
        %1181 = vst [vmem:[#allocation3 + $0x498] sm:$0x1] 0.0
        %1182 = vst [vmem:[#allocation3 + $0x528] sm:$0x1] 0.0
        %1183 = vst [vmem:[#allocation3 + $0x5b8] sm:$0x1] 0.0
        %1184 = vst [vmem:[#allocation3 + $0x648] sm:$0x1] 0.0
        %1185 = vst [vmem:[#allocation3 + $0x6d8] sm:$0x1] 0.0
        %1186 = vst [vmem:[#allocation3 + $0x768] sm:$0x1] 0.0
        %1187 = vst [vmem:[#allocation3 + $0x7f8] sm:$0x1] 0.0
        %1188 = vst [vmem:[#allocation3 + $0x888] sm:$0x1] 0.0
        %v1221 = vrot.slane %v1141, 7
        %v1222 = vrot.slane %v1142, 7
        %v1223 = vsel %vm866, %v1221, %v1222
        %v1224 = vrot.slane %v1143, 7
        %v1225 = vrot.slane %v1144, 7
        %v1226 = vsel %vm866, %v1224, %v1225
        %v1227 = vrot.slane %v1145, 7
        %v1228 = vrot.slane %v1146, 7
        %v1229 = vsel %vm866, %v1227, %v1228
        %v1230 = vrot.slane %v1147, 7
        %v1231 = vrot.slane %v1148, 7
        %v1232 = vsel %vm866, %v1230, %v1231
        %v1233 = vrot.slane %v1149, 7
        %v1234 = vrot.slane %v1150, 7
        %v1235 = vsel %vm866, %v1233, %v1234
        %v1236 = vrot.slane %v1151, 7
        %v1237 = vrot.slane %v1152, 7
        %v1238 = vsel %vm866, %v1236, %v1237
        %v1239 = vrot.slane %v1153, 7
        %v1240 = vrot.slane %v1154, 7
        %v1241 = vsel %vm866, %v1239, %v1240
        %v1242 = vrot.slane %v1155, 7
        %v1243 = vrot.slane %v1156, 7
        %v1244 = vsel %vm866, %v1242, %v1243
        %v1245 = vrot.slane %v1157, 7
        %v1246 = vrot.slane %v1158, 7
        %v1247 = vsel %vm866, %v1245, %v1246
        %v1248 = vrot.slane %v1159, 7
        %v1249 = vrot.slane %v1160, 7
        %v1250 = vsel %vm866, %v1248, %v1249
        %v1251 = vrot.slane %v1161, 7
        %v1252 = vrot.slane %v1162, 7
        %v1253 = vsel %vm866, %v1251, %v1252
        %v1254 = vrot.slane %v1163, 7
        %v1255 = vrot.slane %v1164, 7
        %v1256 = vsel %vm866, %v1254, %v1255
        %v1257 = vrot.slane %v1165, 7
        %v1258 = vrot.slane %v1166, 7
        %v1259 = vsel %vm866, %v1257, %v1258
        %v1260 = vrot.slane %v1167, 7
        %v1261 = vrot.slane %v1168, 7
        %v1262 = vsel %vm866, %v1260, %v1261
        %v1263 = vrot.slane %v1169, 7
        %v1264 = vrot.slane %v1170, 7
        %v1265 = vsel %vm866, %v1263, %v1264
        %v1266 = vrot.slane %v1171, 7
        %v1267 = vrot.slane %v1172, 7
        %v1268 = vsel %vm866, %v1266, %v1267
        %1301 = vst [vmem:[#allocation3 + $0x18] sm:$0xfe] %v1221
        %1302 = vst [vmem:[#allocation3 + $0x60] sm:$0xff] %v1223
        %1303 = vst [vmem:[#allocation3 + $0xa8] sm:$0xfe] %v1224
        %1304 = vst [vmem:[#allocation3 + $0xf0] sm:$0xff] %v1226
        %1305 = vst [vmem:[#allocation3 + $0x138] sm:$0xfe] %v1227
        %1306 = vst [vmem:[#allocation3 + $0x180] sm:$0xff] %v1229
        %1307 = vst [vmem:[#allocation3 + $0x1c8] sm:$0xfe] %v1230
        %1308 = vst [vmem:[#allocation3 + $0x210] sm:$0xff] %v1232
        %1309 = vst [vmem:[#allocation3 + $0x258] sm:$0xfe] %v1233
        %1310 = vst [vmem:[#allocation3 + $0x2a0] sm:$0xff] %v1235
        %1311 = vst [vmem:[#allocation3 + $0x2e8] sm:$0xfe] %v1236
        %1312 = vst [vmem:[#allocation3 + $0x330] sm:$0xff] %v1238
        %1313 = vst [vmem:[#allocation3 + $0x378] sm:$0xfe] %v1239
        %1314 = vst [vmem:[#allocation3 + $0x3c0] sm:$0xff] %v1241
        %1315 = vst [vmem:[#allocation3 + $0x408] sm:$0xfe] %v1242
        %1316 = vst [vmem:[#allocation3 + $0x450] sm:$0xff] %v1244
        %1317 = vst [vmem:[#allocation3 + $0x498] sm:$0xfe] %v1245
        %1318 = vst [vmem:[#allocation3 + $0x4e0] sm:$0xff] %v1247
        %1319 = vst [vmem:[#allocation3 + $0x528] sm:$0xfe] %v1248
        %1320 = vst [vmem:[#allocation3 + $0x570] sm:$0xff] %v1250
        %1321 = vst [vmem:[#allocation3 + $0x5b8] sm:$0xfe] %v1251
        %1322 = vst [vmem:[#allocation3 + $0x600] sm:$0xff] %v1253
        %1323 = vst [vmem:[#allocation3 + $0x648] sm:$0xfe] %v1254
        %1324 = vst [vmem:[#allocation3 + $0x690] sm:$0xff] %v1256
        %1325 = vst [vmem:[#allocation3 + $0x6d8] sm:$0xfe] %v1257
        %1326 = vst [vmem:[#allocation3 + $0x720] sm:$0xff] %v1259
        %1327 = vst [vmem:[#allocation3 + $0x768] sm:$0xfe] %v1260
        %1328 = vst [vmem:[#allocation3 + $0x7b0] sm:$0xff] %v1262
        %1329 = vst [vmem:[#allocation3 + $0x7f8] sm:$0xfe] %v1263
        %1330 = vst [vmem:[#allocation3 + $0x840] sm:$0xff] %v1265
        %1331 = vst [vmem:[#allocation3 + $0x888] sm:$0xfe] %v1266
        %1332 = vst [vmem:[#allocation3 + $0x8d0] sm:$0xff] %v1268
        %1333 = vst [vmem:[#allocation3 + $0x20] sm:$0xff] %v1141
        %1334 = vst [vmem:[#allocation3 + $0x68] sm:$0xff] %v1142
        %1335 = vst [vmem:[#allocation3 + $0xb0] sm:$0xff] %v1143
        %1336 = vst [vmem:[#allocation3 + $0xf8] sm:$0xff] %v1144
        %1337 = vst [vmem:[#allocation3 + $0x140] sm:$0xff] %v1145
        %1338 = vst [vmem:[#allocation3 + $0x188] sm:$0xff] %v1146
        %1339 = vst [vmem:[#allocation3 + $0x1d0] sm:$0xff] %v1147
        %1340 = vst [vmem:[#allocation3 + $0x218] sm:$0xff] %v1148
        %1341 = vst [vmem:[#allocation3 + $0x260] sm:$0xff] %v1149
        %1342 = vst [vmem:[#allocation3 + $0x2a8] sm:$0xff] %v1150
        %1343 = vst [vmem:[#allocation3 + $0x2f0] sm:$0xff] %v1151
        %1344 = vst [vmem:[#allocation3 + $0x338] sm:$0xff] %v1152
        %1345 = vst [vmem:[#allocation3 + $0x380] sm:$0xff] %v1153
        %1346 = vst [vmem:[#allocation3 + $0x3c8] sm:$0xff] %v1154
        %1347 = vst [vmem:[#allocation3 + $0x410] sm:$0xff] %v1155
        %1348 = vst [vmem:[#allocation3 + $0x458] sm:$0xff] %v1156
        %1349 = vst [vmem:[#allocation3 + $0x4a0] sm:$0xff] %v1157
        %1350 = vst [vmem:[#allocation3 + $0x4e8] sm:$0xff] %v1158
        %1351 = vst [vmem:[#allocation3 + $0x530] sm:$0xff] %v1159
        %1352 = vst [vmem:[#allocation3 + $0x578] sm:$0xff] %v1160
        %1353 = vst [vmem:[#allocation3 + $0x5c0] sm:$0xff] %v1161
        %1354 = vst [vmem:[#allocation3 + $0x608] sm:$0xff] %v1162
        %1355 = vst [vmem:[#allocation3 + $0x650] sm:$0xff] %v1163
        %1356 = vst [vmem:[#allocation3 + $0x698] sm:$0xff] %v1164
        %1357 = vst [vmem:[#allocation3 + $0x6e0] sm:$0xff] %v1165
        %1358 = vst [vmem:[#allocation3 + $0x728] sm:$0xff] %v1166
        %1359 = vst [vmem:[#allocation3 + $0x770] sm:$0xff] %v1167
        %1360 = vst [vmem:[#allocation3 + $0x7b8] sm:$0xff] %v1168
        %1361 = vst [vmem:[#allocation3 + $0x800] sm:$0xff] %v1169
        %1362 = vst [vmem:[#allocation3 + $0x848] sm:$0xff] %v1170
        %1363 = vst [vmem:[#allocation3 + $0x890] sm:$0xff] %v1171
        %1364 = vst [vmem:[#allocation3 + $0x8d8] sm:$0xff] %v1172
        %v1365 = vrot.slane %v1141, 1
        %v1366 = vrot.slane %v1142, 1
        %v1367 = vsel %vm1011, %v1365, %v1366
        %v1368 = vrot.slane %v1143, 1
        %v1369 = vrot.slane %v1144, 1
        %v1370 = vsel %vm1011, %v1368, %v1369
        %v1371 = vrot.slane %v1145, 1
        %v1372 = vrot.slane %v1146, 1
        %v1373 = vsel %vm1011, %v1371, %v1372
        %v1374 = vrot.slane %v1147, 1
        %v1375 = vrot.slane %v1148, 1
        %v1376 = vsel %vm1011, %v1374, %v1375
        %v1377 = vrot.slane %v1149, 1
        %v1378 = vrot.slane %v1150, 1
        %v1379 = vsel %vm1011, %v1377, %v1378
        %v1380 = vrot.slane %v1151, 1
        %v1381 = vrot.slane %v1152, 1
        %v1382 = vsel %vm1011, %v1380, %v1381
        %v1383 = vrot.slane %v1153, 1
        %v1384 = vrot.slane %v1154, 1
        %v1385 = vsel %vm1011, %v1383, %v1384
        %v1386 = vrot.slane %v1155, 1
        %v1387 = vrot.slane %v1156, 1
        %v1388 = vsel %vm1011, %v1386, %v1387
        %v1389 = vrot.slane %v1157, 1
        %v1390 = vrot.slane %v1158, 1
        %v1391 = vsel %vm1011, %v1389, %v1390
        %v1392 = vrot.slane %v1159, 1
        %v1393 = vrot.slane %v1160, 1
        %v1394 = vsel %vm1011, %v1392, %v1393
        %v1395 = vrot.slane %v1161, 1
        %v1396 = vrot.slane %v1162, 1
        %v1397 = vsel %vm1011, %v1395, %v1396
        %v1398 = vrot.slane %v1163, 1
        %v1399 = vrot.slane %v1164, 1
        %v1400 = vsel %vm1011, %v1398, %v1399
        %v1401 = vrot.slane %v1165, 1
        %v1402 = vrot.slane %v1166, 1
        %v1403 = vsel %vm1011, %v1401, %v1402
        %v1404 = vrot.slane %v1167, 1
        %v1405 = vrot.slane %v1168, 1
        %v1406 = vsel %vm1011, %v1404, %v1405
        %v1407 = vrot.slane %v1169, 1
        %v1408 = vrot.slane %v1170, 1
        %v1409 = vsel %vm1011, %v1407, %v1408
        %v1410 = vrot.slane %v1171, 1
        %v1411 = vrot.slane %v1172, 1
        %v1412 = vsel %vm1011, %v1410, %v1411
        %1445 = vst [vmem:[#allocation3 + $0x28] sm:$0xff] %v1367
        %1446 = vst [vmem:[#allocation3 + $0x70] sm:$0x7f] %v1366
        %1447 = vst [vmem:[#allocation3 + $0xb8] sm:$0xff] %v1370
        %1448 = vst [vmem:[#allocation3 + $0x100] sm:$0x7f] %v1369
        %1449 = vst [vmem:[#allocation3 + $0x148] sm:$0xff] %v1373
        %1450 = vst [vmem:[#allocation3 + $0x190] sm:$0x7f] %v1372
        %1451 = vst [vmem:[#allocation3 + $0x1d8] sm:$0xff] %v1376
        %1452 = vst [vmem:[#allocation3 + $0x220] sm:$0x7f] %v1375
        %1453 = vst [vmem:[#allocation3 + $0x268] sm:$0xff] %v1379
        %1454 = vst [vmem:[#allocation3 + $0x2b0] sm:$0x7f] %v1378
        %1455 = vst [vmem:[#allocation3 + $0x2f8] sm:$0xff] %v1382
        %1456 = vst [vmem:[#allocation3 + $0x340] sm:$0x7f] %v1381
        %1457 = vst [vmem:[#allocation3 + $0x388] sm:$0xff] %v1385
        %1458 = vst [vmem:[#allocation3 + $0x3d0] sm:$0x7f] %v1384
        %1459 = vst [vmem:[#allocation3 + $0x418] sm:$0xff] %v1388
        %1460 = vst [vmem:[#allocation3 + $0x460] sm:$0x7f] %v1387
        %1461 = vst [vmem:[#allocation3 + $0x4a8] sm:$0xff] %v1391
        %1462 = vst [vmem:[#allocation3 + $0x4f0] sm:$0x7f] %v1390
        %1463 = vst [vmem:[#allocation3 + $0x538] sm:$0xff] %v1394
        %1464 = vst [vmem:[#allocation3 + $0x580] sm:$0x7f] %v1393
        %1465 = vst [vmem:[#allocation3 + $0x5c8] sm:$0xff] %v1397
        %1466 = vst [vmem:[#allocation3 + $0x610] sm:$0x7f] %v1396
        %1467 = vst [vmem:[#allocation3 + $0x658] sm:$0xff] %v1400
        %1468 = vst [vmem:[#allocation3 + $0x6a0] sm:$0x7f] %v1399
        %1469 = vst [vmem:[#allocation3 + $0x6e8] sm:$0xff] %v1403
        %1470 = vst [vmem:[#allocation3 + $0x730] sm:$0x7f] %v1402
        %1471 = vst [vmem:[#allocation3 + $0x778] sm:$0xff] %v1406
        %1472 = vst [vmem:[#allocation3 + $0x7c0] sm:$0x7f] %v1405
        %1473 = vst [vmem:[#allocation3 + $0x808] sm:$0xff] %v1409
        %1474 = vst [vmem:[#allocation3 + $0x850] sm:$0x7f] %v1408
        %1475 = vst [vmem:[#allocation3 + $0x898] sm:$0xff] %v1412
        %1476 = vst [vmem:[#allocation3 + $0x8e0] sm:$0x7f] %v1411
        %1477 = vst [vmem:[#allocation3 + $0x77] sm:$0x1] 0.0
        %1478 = vst [vmem:[#allocation3 + $0x107] sm:$0x1] 0.0
        %1479 = vst [vmem:[#allocation3 + $0x197] sm:$0x1] 0.0
        %1480 = vst [vmem:[#allocation3 + $0x227] sm:$0x1] 0.0
        %1481 = vst [vmem:[#allocation3 + $0x2b7] sm:$0x1] 0.0
        %1482 = vst [vmem:[#allocation3 + $0x347] sm:$0x1] 0.0
        %1483 = vst [vmem:[#allocation3 + $0x3d7] sm:$0x1] 0.0
        %1484 = vst [vmem:[#allocation3 + $0x467] sm:$0x1] 0.0
        %1485 = vst [vmem:[#allocation3 + $0x4f7] sm:$0x1] 0.0
        %1486 = vst [vmem:[#allocation3 + $0x587] sm:$0x1] 0.0
        %1487 = vst [vmem:[#allocation3 + $0x617] sm:$0x1] 0.0
        %1488 = vst [vmem:[#allocation3 + $0x6a7] sm:$0x1] 0.0
        %1489 = vst [vmem:[#allocation3 + $0x737] sm:$0x1] 0.0
        %1490 = vst [vmem:[#allocation3 + $0x7c7] sm:$0x1] 0.0
        %1491 = vst [vmem:[#allocation3 + $0x857] sm:$0x1] 0.0
        %1492 = vst [vmem:[#allocation3 + $0x8e7] sm:$0x1] 0.0
        %s1493 = scalar_lea.vmem [#allocation2], 32
        %v1494 = vld [vmem:[%s1493] sm:$0xff]
        %v1495 = vld [vmem:[%s1493 + $0x8] sm:$0xff]
        %v1496 = vld [vmem:[%s1493 + $0x10] sm:$0xff]
        %v1497 = vld [vmem:[%s1493 + $0x18] sm:$0xff]
        %v1498 = vld [vmem:[%s1493 + $0x20] sm:$0xff]
        %v1499 = vld [vmem:[%s1493 + $0x28] sm:$0xff]
        %v1500 = vld [vmem:[%s1493 + $0x30] sm:$0xff]
        %v1501 = vld [vmem:[%s1493 + $0x38] sm:$0xff]
        %v1502 = vld [vmem:[%s1493 + $0x40] sm:$0xff]
        %v1503 = vld [vmem:[%s1493 + $0x48] sm:$0xff]
        %v1504 = vld [vmem:[%s1493 + $0x50] sm:$0xff]
        %v1505 = vld [vmem:[%s1493 + $0x58] sm:$0xff]
        %v1506 = vld [vmem:[%s1493 + $0x60] sm:$0xff]
        %v1507 = vld [vmem:[%s1493 + $0x68] sm:$0xff]
        %v1508 = vld [vmem:[%s1493 + $0x70] sm:$0xff]
        %v1509 = vld [vmem:[%s1493 + $0x78] sm:$0xff]
        %v1510 = vld [vmem:[%s1493 + $0x80] sm:$0xff]
        %v1511 = vld [vmem:[%s1493 + $0x88] sm:$0xff]
        %v1512 = vld [vmem:[%s1493 + $0x90] sm:$0xff]
        %v1513 = vld [vmem:[%s1493 + $0x98] sm:$0xff]
        %v1514 = vld [vmem:[%s1493 + $0xa0] sm:$0xff]
        %v1515 = vld [vmem:[%s1493 + $0xa8] sm:$0xff]
        %v1516 = vld [vmem:[%s1493 + $0xb0] sm:$0xff]
        %v1517 = vld [vmem:[%s1493 + $0xb8] sm:$0xff]
        %v1518 = vld [vmem:[%s1493 + $0xc0] sm:$0xff]
        %v1519 = vld [vmem:[%s1493 + $0xc8] sm:$0xff]
        %v1520 = vld [vmem:[%s1493 + $0xd0] sm:$0xff]
        %v1521 = vld [vmem:[%s1493 + $0xd8] sm:$0xff]
        %v1522 = vld [vmem:[%s1493 + $0xe0] sm:$0xff]
        %v1523 = vld [vmem:[%s1493 + $0xe8] sm:$0xff]
        %v1524 = vld [vmem:[%s1493 + $0xf0] sm:$0xff]
        %v1525 = vld [vmem:[%s1493 + $0xf8] sm:$0xff]
        %1526 = vst [vmem:[#allocation3 + $0x30] sm:$0x1] 0.0
        %1527 = vst [vmem:[#allocation3 + $0xc0] sm:$0x1] 0.0
        %1528 = vst [vmem:[#allocation3 + $0x150] sm:$0x1] 0.0
        %1529 = vst [vmem:[#allocation3 + $0x1e0] sm:$0x1] 0.0
        %1530 = vst [vmem:[#allocation3 + $0x270] sm:$0x1] 0.0
        %1531 = vst [vmem:[#allocation3 + $0x300] sm:$0x1] 0.0
        %1532 = vst [vmem:[#allocation3 + $0x390] sm:$0x1] 0.0
        %1533 = vst [vmem:[#allocation3 + $0x420] sm:$0x1] 0.0
        %1534 = vst [vmem:[#allocation3 + $0x4b0] sm:$0x1] 0.0
        %1535 = vst [vmem:[#allocation3 + $0x540] sm:$0x1] 0.0
        %1536 = vst [vmem:[#allocation3 + $0x5d0] sm:$0x1] 0.0
        %1537 = vst [vmem:[#allocation3 + $0x660] sm:$0x1] 0.0
        %1538 = vst [vmem:[#allocation3 + $0x6f0] sm:$0x1] 0.0
        %1539 = vst [vmem:[#allocation3 + $0x780] sm:$0x1] 0.0
        %1540 = vst [vmem:[#allocation3 + $0x810] sm:$0x1] 0.0
        %1541 = vst [vmem:[#allocation3 + $0x8a0] sm:$0x1] 0.0
        %v1574 = vrot.slane %v1494, 7
        %v1575 = vrot.slane %v1495, 7
        %v1576 = vsel %vm866, %v1574, %v1575
        %v1577 = vrot.slane %v1496, 7
        %v1578 = vrot.slane %v1497, 7
        %v1579 = vsel %vm866, %v1577, %v1578
        %v1580 = vrot.slane %v1498, 7
        %v1581 = vrot.slane %v1499, 7
        %v1582 = vsel %vm866, %v1580, %v1581
        %v1583 = vrot.slane %v1500, 7
        %v1584 = vrot.slane %v1501, 7
        %v1585 = vsel %vm866, %v1583, %v1584
        %v1586 = vrot.slane %v1502, 7
        %v1587 = vrot.slane %v1503, 7
        %v1588 = vsel %vm866, %v1586, %v1587
        %v1589 = vrot.slane %v1504, 7
        %v1590 = vrot.slane %v1505, 7
        %v1591 = vsel %vm866, %v1589, %v1590
        %v1592 = vrot.slane %v1506, 7
        %v1593 = vrot.slane %v1507, 7
        %v1594 = vsel %vm866, %v1592, %v1593
        %v1595 = vrot.slane %v1508, 7
        %v1596 = vrot.slane %v1509, 7
        %v1597 = vsel %vm866, %v1595, %v1596
        %v1598 = vrot.slane %v1510, 7
        %v1599 = vrot.slane %v1511, 7
        %v1600 = vsel %vm866, %v1598, %v1599
        %v1601 = vrot.slane %v1512, 7
        %v1602 = vrot.slane %v1513, 7
        %v1603 = vsel %vm866, %v1601, %v1602
        %v1604 = vrot.slane %v1514, 7
        %v1605 = vrot.slane %v1515, 7
        %v1606 = vsel %vm866, %v1604, %v1605
        %v1607 = vrot.slane %v1516, 7
        %v1608 = vrot.slane %v1517, 7
        %v1609 = vsel %vm866, %v1607, %v1608
        %v1610 = vrot.slane %v1518, 7
        %v1611 = vrot.slane %v1519, 7
        %v1612 = vsel %vm866, %v1610, %v1611
        %v1613 = vrot.slane %v1520, 7
        %v1614 = vrot.slane %v1521, 7
        %v1615 = vsel %vm866, %v1613, %v1614
        %v1616 = vrot.slane %v1522, 7
        %v1617 = vrot.slane %v1523, 7
        %v1618 = vsel %vm866, %v1616, %v1617
        %v1619 = vrot.slane %v1524, 7
        %v1620 = vrot.slane %v1525, 7
        %v1621 = vsel %vm866, %v1619, %v1620
        %1654 = vst [vmem:[#allocation3 + $0x30] sm:$0xfe] %v1574
        %1655 = vst [vmem:[#allocation3 + $0x78] sm:$0xff] %v1576
        %1656 = vst [vmem:[#allocation3 + $0xc0] sm:$0xfe] %v1577
        %1657 = vst [vmem:[#allocation3 + $0x108] sm:$0xff] %v1579
        %1658 = vst [vmem:[#allocation3 + $0x150] sm:$0xfe] %v1580
        %1659 = vst [vmem:[#allocation3 + $0x198] sm:$0xff] %v1582
        %1660 = vst [vmem:[#allocation3 + $0x1e0] sm:$0xfe] %v1583
        %1661 = vst [vmem:[#allocation3 + $0x228] sm:$0xff] %v1585
        %1662 = vst [vmem:[#allocation3 + $0x270] sm:$0xfe] %v1586
        %1663 = vst [vmem:[#allocation3 + $0x2b8] sm:$0xff] %v1588
        %1664 = vst [vmem:[#allocation3 + $0x300] sm:$0xfe] %v1589
        %1665 = vst [vmem:[#allocation3 + $0x348] sm:$0xff] %v1591
        %1666 = vst [vmem:[#allocation3 + $0x390] sm:$0xfe] %v1592
        %1667 = vst [vmem:[#allocation3 + $0x3d8] sm:$0xff] %v1594
        %1668 = vst [vmem:[#allocation3 + $0x420] sm:$0xfe] %v1595
        %1669 = vst [vmem:[#allocation3 + $0x468] sm:$0xff] %v1597
        %1670 = vst [vmem:[#allocation3 + $0x4b0] sm:$0xfe] %v1598
        %1671 = vst [vmem:[#allocation3 + $0x4f8] sm:$0xff] %v1600
        %1672 = vst [vmem:[#allocation3 + $0x540] sm:$0xfe] %v1601
        %1673 = vst [vmem:[#allocation3 + $0x588] sm:$0xff] %v1603
        %1674 = vst [vmem:[#allocation3 + $0x5d0] sm:$0xfe] %v1604
        %1675 = vst [vmem:[#allocation3 + $0x618] sm:$0xff] %v1606
        %1676 = vst [vmem:[#allocation3 + $0x660] sm:$0xfe] %v1607
        %1677 = vst [vmem:[#allocation3 + $0x6a8] sm:$0xff] %v1609
        %1678 = vst [vmem:[#allocation3 + $0x6f0] sm:$0xfe] %v1610
        %1679 = vst [vmem:[#allocation3 + $0x738] sm:$0xff] %v1612
        %1680 = vst [vmem:[#allocation3 + $0x780] sm:$0xfe] %v1613
        %1681 = vst [vmem:[#allocation3 + $0x7c8] sm:$0xff] %v1615
        %1682 = vst [vmem:[#allocation3 + $0x810] sm:$0xfe] %v1616
        %1683 = vst [vmem:[#allocation3 + $0x858] sm:$0xff] %v1618
        %1684 = vst [vmem:[#allocation3 + $0x8a0] sm:$0xfe] %v1619
        %1685 = vst [vmem:[#allocation3 + $0x8e8] sm:$0xff] %v1621
        %1686 = vst [vmem:[#allocation3 + $0x38] sm:$0xff] %v1494
        %1687 = vst [vmem:[#allocation3 + $0x80] sm:$0xff] %v1495
        %1688 = vst [vmem:[#allocation3 + $0xc8] sm:$0xff] %v1496
        %1689 = vst [vmem:[#allocation3 + $0x110] sm:$0xff] %v1497
        %1690 = vst [vmem:[#allocation3 + $0x158] sm:$0xff] %v1498
        %1691 = vst [vmem:[#allocation3 + $0x1a0] sm:$0xff] %v1499
        %1692 = vst [vmem:[#allocation3 + $0x1e8] sm:$0xff] %v1500
        %1693 = vst [vmem:[#allocation3 + $0x230] sm:$0xff] %v1501
        %1694 = vst [vmem:[#allocation3 + $0x278] sm:$0xff] %v1502
        %1695 = vst [vmem:[#allocation3 + $0x2c0] sm:$0xff] %v1503
        %1696 = vst [vmem:[#allocation3 + $0x308] sm:$0xff] %v1504
        %1697 = vst [vmem:[#allocation3 + $0x350] sm:$0xff] %v1505
        %1698 = vst [vmem:[#allocation3 + $0x398] sm:$0xff] %v1506
        %1699 = vst [vmem:[#allocation3 + $0x3e0] sm:$0xff] %v1507
        %1700 = vst [vmem:[#allocation3 + $0x428] sm:$0xff] %v1508
        %1701 = vst [vmem:[#allocation3 + $0x470] sm:$0xff] %v1509
        %1702 = vst [vmem:[#allocation3 + $0x4b8] sm:$0xff] %v1510
        %1703 = vst [vmem:[#allocation3 + $0x500] sm:$0xff] %v1511
        %1704 = vst [vmem:[#allocation3 + $0x548] sm:$0xff] %v1512
        %1705 = vst [vmem:[#allocation3 + $0x590] sm:$0xff] %v1513
        %1706 = vst [vmem:[#allocation3 + $0x5d8] sm:$0xff] %v1514
        %1707 = vst [vmem:[#allocation3 + $0x620] sm:$0xff] %v1515
        %1708 = vst [vmem:[#allocation3 + $0x668] sm:$0xff] %v1516
        %1709 = vst [vmem:[#allocation3 + $0x6b0] sm:$0xff] %v1517
        %1710 = vst [vmem:[#allocation3 + $0x6f8] sm:$0xff] %v1518
        %1711 = vst [vmem:[#allocation3 + $0x740] sm:$0xff] %v1519
        %1712 = vst [vmem:[#allocation3 + $0x788] sm:$0xff] %v1520
        %1713 = vst [vmem:[#allocation3 + $0x7d0] sm:$0xff] %v1521
        %1714 = vst [vmem:[#allocation3 + $0x818] sm:$0xff] %v1522
        %1715 = vst [vmem:[#allocation3 + $0x860] sm:$0xff] %v1523
        %1716 = vst [vmem:[#allocation3 + $0x8a8] sm:$0xff] %v1524
        %1717 = vst [vmem:[#allocation3 + $0x8f0] sm:$0xff] %v1525
        %v1718 = vrot.slane %v1494, 1
        %v1719 = vrot.slane %v1495, 1
        %v1720 = vsel %vm1011, %v1718, %v1719
        %v1721 = vrot.slane %v1496, 1
        %v1722 = vrot.slane %v1497, 1
        %v1723 = vsel %vm1011, %v1721, %v1722
        %v1724 = vrot.slane %v1498, 1
        %v1725 = vrot.slane %v1499, 1
        %v1726 = vsel %vm1011, %v1724, %v1725
        %v1727 = vrot.slane %v1500, 1
        %v1728 = vrot.slane %v1501, 1
        %v1729 = vsel %vm1011, %v1727, %v1728
        %v1730 = vrot.slane %v1502, 1
        %v1731 = vrot.slane %v1503, 1
        %v1732 = vsel %vm1011, %v1730, %v1731
        %v1733 = vrot.slane %v1504, 1
        %v1734 = vrot.slane %v1505, 1
        %v1735 = vsel %vm1011, %v1733, %v1734
        %v1736 = vrot.slane %v1506, 1
        %v1737 = vrot.slane %v1507, 1
        %v1738 = vsel %vm1011, %v1736, %v1737
        %v1739 = vrot.slane %v1508, 1
        %v1740 = vrot.slane %v1509, 1
        %v1741 = vsel %vm1011, %v1739, %v1740
        %v1742 = vrot.slane %v1510, 1
        %v1743 = vrot.slane %v1511, 1
        %v1744 = vsel %vm1011, %v1742, %v1743
        %v1745 = vrot.slane %v1512, 1
        %v1746 = vrot.slane %v1513, 1
        %v1747 = vsel %vm1011, %v1745, %v1746
        %v1748 = vrot.slane %v1514, 1
        %v1749 = vrot.slane %v1515, 1
        %v1750 = vsel %vm1011, %v1748, %v1749
        %v1751 = vrot.slane %v1516, 1
        %v1752 = vrot.slane %v1517, 1
        %v1753 = vsel %vm1011, %v1751, %v1752
        %v1754 = vrot.slane %v1518, 1
        %v1755 = vrot.slane %v1519, 1
        %v1756 = vsel %vm1011, %v1754, %v1755
        %v1757 = vrot.slane %v1520, 1
        %v1758 = vrot.slane %v1521, 1
        %v1759 = vsel %vm1011, %v1757, %v1758
        %v1760 = vrot.slane %v1522, 1
        %v1761 = vrot.slane %v1523, 1
        %v1762 = vsel %vm1011, %v1760, %v1761
        %v1763 = vrot.slane %v1524, 1
        %v1764 = vrot.slane %v1525, 1
        %v1765 = vsel %vm1011, %v1763, %v1764
        %1798 = vst [vmem:[#allocation3 + $0x40] sm:$0xff] %v1720
        %1799 = vst [vmem:[#allocation3 + $0x88] sm:$0x7f] %v1719
        %1800 = vst [vmem:[#allocation3 + $0xd0] sm:$0xff] %v1723
        %1801 = vst [vmem:[#allocation3 + $0x118] sm:$0x7f] %v1722
        %1802 = vst [vmem:[#allocation3 + $0x160] sm:$0xff] %v1726
        %1803 = vst [vmem:[#allocation3 + $0x1a8] sm:$0x7f] %v1725
        %1804 = vst [vmem:[#allocation3 + $0x1f0] sm:$0xff] %v1729
        %1805 = vst [vmem:[#allocation3 + $0x238] sm:$0x7f] %v1728
        %1806 = vst [vmem:[#allocation3 + $0x280] sm:$0xff] %v1732
        %1807 = vst [vmem:[#allocation3 + $0x2c8] sm:$0x7f] %v1731
        %1808 = vst [vmem:[#allocation3 + $0x310] sm:$0xff] %v1735
        %1809 = vst [vmem:[#allocation3 + $0x358] sm:$0x7f] %v1734
        %1810 = vst [vmem:[#allocation3 + $0x3a0] sm:$0xff] %v1738
        %1811 = vst [vmem:[#allocation3 + $0x3e8] sm:$0x7f] %v1737
        %1812 = vst [vmem:[#allocation3 + $0x430] sm:$0xff] %v1741
        %1813 = vst [vmem:[#allocation3 + $0x478] sm:$0x7f] %v1740
        %1814 = vst [vmem:[#allocation3 + $0x4c0] sm:$0xff] %v1744
        %1815 = vst [vmem:[#allocation3 + $0x508] sm:$0x7f] %v1743
        %1816 = vst [vmem:[#allocation3 + $0x550] sm:$0xff] %v1747
        %1817 = vst [vmem:[#allocation3 + $0x598] sm:$0x7f] %v1746
        %1818 = vst [vmem:[#allocation3 + $0x5e0] sm:$0xff] %v1750
        %1819 = vst [vmem:[#allocation3 + $0x628] sm:$0x7f] %v1749
        %1820 = vst [vmem:[#allocation3 + $0x670] sm:$0xff] %v1753
        %1821 = vst [vmem:[#allocation3 + $0x6b8] sm:$0x7f] %v1752
        %1822 = vst [vmem:[#allocation3 + $0x700] sm:$0xff] %v1756
        %1823 = vst [vmem:[#allocation3 + $0x748] sm:$0x7f] %v1755
        %1824 = vst [vmem:[#allocation3 + $0x790] sm:$0xff] %v1759
        %1825 = vst [vmem:[#allocation3 + $0x7d8] sm:$0x7f] %v1758
        %1826 = vst [vmem:[#allocation3 + $0x820] sm:$0xff] %v1762
        %1827 = vst [vmem:[#allocation3 + $0x868] sm:$0x7f] %v1761
        %1828 = vst [vmem:[#allocation3 + $0x8b0] sm:$0xff] %v1765
        %1829 = vst [vmem:[#allocation3 + $0x8f8] sm:$0x7f] %v1764
        %1830 = vst [vmem:[#allocation3 + $0x8f] sm:$0x1] 0.0
        %1831 = vst [vmem:[#allocation3 + $0x11f] sm:$0x1] 0.0
        %1832 = vst [vmem:[#allocation3 + $0x1af] sm:$0x1] 0.0
        %1833 = vst [vmem:[#allocation3 + $0x23f] sm:$0x1] 0.0
        %1834 = vst [vmem:[#allocation3 + $0x2cf] sm:$0x1] 0.0
        %1835 = vst [vmem:[#allocation3 + $0x35f] sm:$0x1] 0.0
        %1836 = vst [vmem:[#allocation3 + $0x3ef] sm:$0x1] 0.0
        %1837 = vst [vmem:[#allocation3 + $0x47f] sm:$0x1] 0.0
        %1838 = vst [vmem:[#allocation3 + $0x50f] sm:$0x1] 0.0
        %1839 = vst [vmem:[#allocation3 + $0x59f] sm:$0x1] 0.0
        %1840 = vst [vmem:[#allocation3 + $0x62f] sm:$0x1] 0.0
        %1841 = vst [vmem:[#allocation3 + $0x6bf] sm:$0x1] 0.0
        %1842 = vst [vmem:[#allocation3 + $0x74f] sm:$0x1] 0.0
        %1843 = vst [vmem:[#allocation3 + $0x7df] sm:$0x1] 0.0
        %1844 = vst [vmem:[#allocation3 + $0x86f] sm:$0x1] 0.0
        %1845 = vst [vmem:[#allocation3 + $0x8ff] sm:$0x1] 0.0
        %v1846 = vld [vmem:[#allocation3] sm:$0xff]
        %v1847 = vld [vmem:[#allocation3 + $0x8] sm:$0xff]
        %v1848 = vld [vmem:[#allocation3 + $0x10] sm:$0xff]
        %v1849 = vld [vmem:[#allocation3 + $0x18] sm:$0xff]
        %v1850 = vld [vmem:[#allocation3 + $0x20] sm:$0xff]
        %v1851 = vld [vmem:[#allocation3 + $0x28] sm:$0xff]
        %v1852 = vld [vmem:[#allocation3 + $0x30] sm:$0xff]
        %v1853 = vld [vmem:[#allocation3 + $0x38] sm:$0xff]
        %v1854 = vld [vmem:[#allocation3 + $0x40] sm:$0xff]
        %v1855 = vld [vmem:[#allocation3 + $0x48] sm:$0xff]
        %v1856 = vld [vmem:[#allocation3 + $0x50] sm:$0xff]
        %v1857 = vld [vmem:[#allocation3 + $0x58] sm:$0xff]
        %v1858 = vld [vmem:[#allocation3 + $0x60] sm:$0xff]
        %v1859 = vld [vmem:[#allocation3 + $0x68] sm:$0xff]
        %v1860 = vld [vmem:[#allocation3 + $0x70] sm:$0xff]
        %v1861 = vld [vmem:[#allocation3 + $0x78] sm:$0xff]
        %v1862 = vld [vmem:[#allocation3 + $0x80] sm:$0xff]
        %v1863 = vld [vmem:[#allocation3 + $0x88] sm:$0xff]
        %v1864 = vld [vmem:[#allocation3 + $0x90] sm:$0xff]
        %v1865 = vld [vmem:[#allocation3 + $0x98] sm:$0xff]
        %v1866 = vld [vmem:[#allocation3 + $0xa0] sm:$0xff]
        %v1867 = vld [vmem:[#allocation3 + $0xa8] sm:$0xff]
        %v1868 = vld [vmem:[#allocation3 + $0xb0] sm:$0xff]
        %v1869 = vld [vmem:[#allocation3 + $0xb8] sm:$0xff]
        %v1870 = vld [vmem:[#allocation3 + $0xc0] sm:$0xff]
        %v1871 = vld [vmem:[#allocation3 + $0xc8] sm:$0xff]
        %v1872 = vld [vmem:[#allocation3 + $0xd0] sm:$0xff]
        %v1873 = vld [vmem:[#allocation3 + $0xd8] sm:$0xff]
        %v1874 = vld [vmem:[#allocation3 + $0xe0] sm:$0xff]
        %v1875 = vld [vmem:[#allocation3 + $0xe8] sm:$0xff]
        %v1876 = vld [vmem:[#allocation3 + $0xf0] sm:$0xff]
        %v1877 = vld [vmem:[#allocation3 + $0xf8] sm:$0xff]
        %v1878 = vld [vmem:[#allocation3 + $0x100] sm:$0xff]
        %v1879 = vld [vmem:[#allocation3 + $0x108] sm:$0xff]
        %v1880 = vld [vmem:[#allocation3 + $0x110] sm:$0xff]
        %v1881 = vld [vmem:[#allocation3 + $0x118] sm:$0xff]
        %v1882 = vld [vmem:[#allocation3 + $0x120] sm:$0xff]
        %v1883 = vld [vmem:[#allocation3 + $0x128] sm:$0xff]
        %v1884 = vld [vmem:[#allocation3 + $0x130] sm:$0xff]
        %v1885 = vld [vmem:[#allocation3 + $0x138] sm:$0xff]
        %v1886 = vld [vmem:[#allocation3 + $0x140] sm:$0xff]
        %v1887 = vld [vmem:[#allocation3 + $0x148] sm:$0xff]
        %v1888 = vld [vmem:[#allocation3 + $0x150] sm:$0xff]
        %v1889 = vld [vmem:[#allocation3 + $0x158] sm:$0xff]
        %v1890 = vld [vmem:[#allocation3 + $0x160] sm:$0xff]
        %v1891 = vld [vmem:[#allocation3 + $0x168] sm:$0xff]
        %v1892 = vld [vmem:[#allocation3 + $0x170] sm:$0xff]
        %v1893 = vld [vmem:[#allocation3 + $0x178] sm:$0xff]
        %v1894 = vld [vmem:[#allocation3 + $0x180] sm:$0xff]
        %v1895 = vld [vmem:[#allocation3 + $0x188] sm:$0xff]
        %v1896 = vld [vmem:[#allocation3 + $0x190] sm:$0xff]
        %v1897 = vld [vmem:[#allocation3 + $0x198] sm:$0xff]
        %v1898 = vld [vmem:[#allocation3 + $0x1a0] sm:$0xff]
        %v1899 = vld [vmem:[#allocation3 + $0x1a8] sm:$0xff]
        %v1900 = vld [vmem:[#allocation3 + $0x1b0] sm:$0xff]
        %v1901 = vld [vmem:[#allocation3 + $0x1b8] sm:$0xff]
        %v1902 = vld [vmem:[#allocation3 + $0x1c0] sm:$0xff]
        %v1903 = vld [vmem:[#allocation3 + $0x1c8] sm:$0xff]
        %v1904 = vld [vmem:[#allocation3 + $0x1d0] sm:$0xff]
        %v1905 = vld [vmem:[#allocation3 + $0x1d8] sm:$0xff]
        %v1906 = vld [vmem:[#allocation3 + $0x1e0] sm:$0xff]
        %v1907 = vld [vmem:[#allocation3 + $0x1e8] sm:$0xff]
        %v1908 = vld [vmem:[#allocation3 + $0x1f0] sm:$0xff]
        %v1909 = vld [vmem:[#allocation3 + $0x1f8] sm:$0xff]
        %v1910 = vld [vmem:[#allocation3 + $0x200] sm:$0xff]
        %v1911 = vld [vmem:[#allocation3 + $0x208] sm:$0xff]
        %v1912 = vld [vmem:[#allocation3 + $0x210] sm:$0xff]
        %v1913 = vld [vmem:[#allocation3 + $0x218] sm:$0xff]
        %v1914 = vld [vmem:[#allocation3 + $0x220] sm:$0xff]
        %v1915 = vld [vmem:[#allocation3 + $0x228] sm:$0xff]
        %v1916 = vld [vmem:[#allocation3 + $0x230] sm:$0xff]
        %v1917 = vld [vmem:[#allocation3 + $0x238] sm:$0xff]
        %v1918 = vld [vmem:[#allocation3 + $0x240] sm:$0xff]
        %v1919 = vld [vmem:[#allocation3 + $0x248] sm:$0xff]
        %v1920 = vld [vmem:[#allocation3 + $0x250] sm:$0xff]
        %v1921 = vld [vmem:[#allocation3 + $0x258] sm:$0xff]
        %v1922 = vld [vmem:[#allocation3 + $0x260] sm:$0xff]
        %v1923 = vld [vmem:[#allocation3 + $0x268] sm:$0xff]
        %v1924 = vld [vmem:[#allocation3 + $0x270] sm:$0xff]
        %v1925 = vld [vmem:[#allocation3 + $0x278] sm:$0xff]
        %v1926 = vld [vmem:[#allocation3 + $0x280] sm:$0xff]
        %v1927 = vld [vmem:[#allocation3 + $0x288] sm:$0xff]
        %v1928 = vld [vmem:[#allocation3 + $0x290] sm:$0xff]
        %v1929 = vld [vmem:[#allocation3 + $0x298] sm:$0xff]
        %v1930 = vld [vmem:[#allocation3 + $0x2a0] sm:$0xff]
        %v1931 = vld [vmem:[#allocation3 + $0x2a8] sm:$0xff]
        %v1932 = vld [vmem:[#allocation3 + $0x2b0] sm:$0xff]
        %v1933 = vld [vmem:[#allocation3 + $0x2b8] sm:$0xff]
        %v1934 = vld [vmem:[#allocation3 + $0x2c0] sm:$0xff]
        %v1935 = vld [vmem:[#allocation3 + $0x2c8] sm:$0xff]
        %v1936 = vld [vmem:[#allocation3 + $0x2d0] sm:$0xff]
        %v1937 = vld [vmem:[#allocation3 + $0x2d8] sm:$0xff]
        %v1938 = vld [vmem:[#allocation3 + $0x2e0] sm:$0xff]
        %v1939 = vld [vmem:[#allocation3 + $0x2e8] sm:$0xff]
        %v1940 = vld [vmem:[#allocation3 + $0x2f0] sm:$0xff]
        %v1941 = vld [vmem:[#allocation3 + $0x2f8] sm:$0xff]
        %v1942 = vld [vmem:[#allocation3 + $0x300] sm:$0xff]
        %v1943 = vld [vmem:[#allocation3 + $0x308] sm:$0xff]
        %v1944 = vld [vmem:[#allocation3 + $0x310] sm:$0xff]
        %v1945 = vld [vmem:[#allocation3 + $0x318] sm:$0xff]
        %v1946 = vld [vmem:[#allocation3 + $0x320] sm:$0xff]
        %v1947 = vld [vmem:[#allocation3 + $0x328] sm:$0xff]
        %v1948 = vld [vmem:[#allocation3 + $0x330] sm:$0xff]
        %v1949 = vld [vmem:[#allocation3 + $0x338] sm:$0xff]
        %v1950 = vld [vmem:[#allocation3 + $0x340] sm:$0xff]
        %v1951 = vld [vmem:[#allocation3 + $0x348] sm:$0xff]
        %v1952 = vld [vmem:[#allocation3 + $0x350] sm:$0xff]
        %v1953 = vld [vmem:[#allocation3 + $0x358] sm:$0xff]
        %v1954 = vld [vmem:[#allocation3 + $0x360] sm:$0xff]
        %v1955 = vld [vmem:[#allocation3 + $0x368] sm:$0xff]
        %v1956 = vld [vmem:[#allocation3 + $0x370] sm:$0xff]
        %v1957 = vld [vmem:[#allocation3 + $0x378] sm:$0xff]
        %v1958 = vld [vmem:[#allocation3 + $0x380] sm:$0xff]
        %v1959 = vld [vmem:[#allocation3 + $0x388] sm:$0xff]
        %v1960 = vld [vmem:[#allocation3 + $0x390] sm:$0xff]
        %v1961 = vld [vmem:[#allocation3 + $0x398] sm:$0xff]
        %v1962 = vld [vmem:[#allocation3 + $0x3a0] sm:$0xff]
        %v1963 = vld [vmem:[#allocation3 + $0x3a8] sm:$0xff]
        %v1964 = vld [vmem:[#allocation3 + $0x3b0] sm:$0xff]
        %v1965 = vld [vmem:[#allocation3 + $0x3b8] sm:$0xff]
        %v1966 = vld [vmem:[#allocation3 + $0x3c0] sm:$0xff]
        %v1967 = vld [vmem:[#allocation3 + $0x3c8] sm:$0xff]
        %v1968 = vld [vmem:[#allocation3 + $0x3d0] sm:$0xff]
        %v1969 = vld [vmem:[#allocation3 + $0x3d8] sm:$0xff]
        %v1970 = vld [vmem:[#allocation3 + $0x3e0] sm:$0xff]
        %v1971 = vld [vmem:[#allocation3 + $0x3e8] sm:$0xff]
        %v1972 = vld [vmem:[#allocation3 + $0x3f0] sm:$0xff]
        %v1973 = vld [vmem:[#allocation3 + $0x3f8] sm:$0xff]
        %v1974 = vld [vmem:[#allocation3 + $0x400] sm:$0xff]
        %v1975 = vld [vmem:[#allocation3 + $0x408] sm:$0xff]
        %v1976 = vld [vmem:[#allocation3 + $0x410] sm:$0xff]
        %v1977 = vld [vmem:[#allocation3 + $0x418] sm:$0xff]
        %v1978 = vld [vmem:[#allocation3 + $0x420] sm:$0xff]
        %v1979 = vld [vmem:[#allocation3 + $0x428] sm:$0xff]
        %v1980 = vld [vmem:[#allocation3 + $0x430] sm:$0xff]
        %v1981 = vld [vmem:[#allocation3 + $0x438] sm:$0xff]
        %v1982 = vld [vmem:[#allocation3 + $0x440] sm:$0xff]
        %v1983 = vld [vmem:[#allocation3 + $0x448] sm:$0xff]
        %v1984 = vld [vmem:[#allocation3 + $0x450] sm:$0xff]
        %v1985 = vld [vmem:[#allocation3 + $0x458] sm:$0xff]
        %v1986 = vld [vmem:[#allocation3 + $0x460] sm:$0xff]
        %v1987 = vld [vmem:[#allocation3 + $0x468] sm:$0xff]
        %v1988 = vld [vmem:[#allocation3 + $0x470] sm:$0xff]
        %v1989 = vld [vmem:[#allocation3 + $0x478] sm:$0xff]
        %v1990 = vld [vmem:[#allocation3 + $0x480] sm:$0xff]
        %v1991 = vld [vmem:[#allocation3 + $0x488] sm:$0xff]
        %v1992 = vld [vmem:[#allocation3 + $0x490] sm:$0xff]
        %v1993 = vld [vmem:[#allocation3 + $0x498] sm:$0xff]
        %v1994 = vld [vmem:[#allocation3 + $0x4a0] sm:$0xff]
        %v1995 = vld [vmem:[#allocation3 + $0x4a8] sm:$0xff]
        %v1996 = vld [vmem:[#allocation3 + $0x4b0] sm:$0xff]
        %v1997 = vld [vmem:[#allocation3 + $0x4b8] sm:$0xff]
        %v1998 = vld [vmem:[#allocation3 + $0x4c0] sm:$0xff]
        %v1999 = vld [vmem:[#allocation3 + $0x4c8] sm:$0xff]
        %v2000 = vld [vmem:[#allocation3 + $0x4d0] sm:$0xff]
        %v2001 = vld [vmem:[#allocation3 + $0x4d8] sm:$0xff]
        %v2002 = vld [vmem:[#allocation3 + $0x4e0] sm:$0xff]
        %v2003 = vld [vmem:[#allocation3 + $0x4e8] sm:$0xff]
        %v2004 = vld [vmem:[#allocation3 + $0x4f0] sm:$0xff]
        %v2005 = vld [vmem:[#allocation3 + $0x4f8] sm:$0xff]
        %v2006 = vld [vmem:[#allocation3 + $0x500] sm:$0xff]
        %v2007 = vld [vmem:[#allocation3 + $0x508] sm:$0xff]
        %v2008 = vld [vmem:[#allocation3 + $0x510] sm:$0xff]
        %v2009 = vld [vmem:[#allocation3 + $0x518] sm:$0xff]
        %v2010 = vld [vmem:[#allocation3 + $0x520] sm:$0xff]
        %v2011 = vld [vmem:[#allocation3 + $0x528] sm:$0xff]
        %v2012 = vld [vmem:[#allocation3 + $0x530] sm:$0xff]
        %v2013 = vld [vmem:[#allocation3 + $0x538] sm:$0xff]
        %v2014 = vld [vmem:[#allocation3 + $0x540] sm:$0xff]
        %v2015 = vld [vmem:[#allocation3 + $0x548] sm:$0xff]
        %v2016 = vld [vmem:[#allocation3 + $0x550] sm:$0xff]
        %v2017 = vld [vmem:[#allocation3 + $0x558] sm:$0xff]
        %v2018 = vld [vmem:[#allocation3 + $0x560] sm:$0xff]
        %v2019 = vld [vmem:[#allocation3 + $0x568] sm:$0xff]
        %v2020 = vld [vmem:[#allocation3 + $0x570] sm:$0xff]
        %v2021 = vld [vmem:[#allocation3 + $0x578] sm:$0xff]
        %v2022 = vld [vmem:[#allocation3 + $0x580] sm:$0xff]
        %v2023 = vld [vmem:[#allocation3 + $0x588] sm:$0xff]
        %v2024 = vld [vmem:[#allocation3 + $0x590] sm:$0xff]
        %v2025 = vld [vmem:[#allocation3 + $0x598] sm:$0xff]
        %v2026 = vld [vmem:[#allocation3 + $0x5a0] sm:$0xff]
        %v2027 = vld [vmem:[#allocation3 + $0x5a8] sm:$0xff]
        %v2028 = vld [vmem:[#allocation3 + $0x5b0] sm:$0xff]
        %v2029 = vld [vmem:[#allocation3 + $0x5b8] sm:$0xff]
        %v2030 = vld [vmem:[#allocation3 + $0x5c0] sm:$0xff]
        %v2031 = vld [vmem:[#allocation3 + $0x5c8] sm:$0xff]
        %v2032 = vld [vmem:[#allocation3 + $0x5d0] sm:$0xff]
        %v2033 = vld [vmem:[#allocation3 + $0x5d8] sm:$0xff]
        %v2034 = vld [vmem:[#allocation3 + $0x5e0] sm:$0xff]
        %v2035 = vld [vmem:[#allocation3 + $0x5e8] sm:$0xff]
        %v2036 = vld [vmem:[#allocation3 + $0x5f0] sm:$0xff]
        %v2037 = vld [vmem:[#allocation3 + $0x5f8] sm:$0xff]
        %v2038 = vld [vmem:[#allocation3 + $0x600] sm:$0xff]
        %v2039 = vld [vmem:[#allocation3 + $0x608] sm:$0xff]
        %v2040 = vld [vmem:[#allocation3 + $0x610] sm:$0xff]
        %v2041 = vld [vmem:[#allocation3 + $0x618] sm:$0xff]
        %v2042 = vld [vmem:[#allocation3 + $0x620] sm:$0xff]
        %v2043 = vld [vmem:[#allocation3 + $0x628] sm:$0xff]
        %v2044 = vld [vmem:[#allocation3 + $0x630] sm:$0xff]
        %v2045 = vld [vmem:[#allocation3 + $0x638] sm:$0xff]
        %v2046 = vld [vmem:[#allocation3 + $0x640] sm:$0xff]
        %v2047 = vld [vmem:[#allocation3 + $0x648] sm:$0xff]
        %v2048 = vld [vmem:[#allocation3 + $0x650] sm:$0xff]
        %v2049 = vld [vmem:[#allocation3 + $0x658] sm:$0xff]
        %v2050 = vld [vmem:[#allocation3 + $0x660] sm:$0xff]
        %v2051 = vld [vmem:[#allocation3 + $0x668] sm:$0xff]
        %v2052 = vld [vmem:[#allocation3 + $0x670] sm:$0xff]
        %v2053 = vld [vmem:[#allocation3 + $0x678] sm:$0xff]
        %v2054 = vld [vmem:[#allocation3 + $0x680] sm:$0xff]
        %v2055 = vld [vmem:[#allocation3 + $0x688] sm:$0xff]
        %v2056 = vld [vmem:[#allocation3 + $0x690] sm:$0xff]
        %v2057 = vld [vmem:[#allocation3 + $0x698] sm:$0xff]
        %v2058 = vld [vmem:[#allocation3 + $0x6a0] sm:$0xff]
        %v2059 = vld [vmem:[#allocation3 + $0x6a8] sm:$0xff]
        %v2060 = vld [vmem:[#allocation3 + $0x6b0] sm:$0xff]
        %v2061 = vld [vmem:[#allocation3 + $0x6b8] sm:$0xff]
        %v2062 = vld [vmem:[#allocation3 + $0x6c0] sm:$0xff]
        %v2063 = vld [vmem:[#allocation3 + $0x6c8] sm:$0xff]
        %v2064 = vld [vmem:[#allocation3 + $0x6d0] sm:$0xff]
        %v2065 = vld [vmem:[#allocation3 + $0x6d8] sm:$0xff]
        %v2066 = vld [vmem:[#allocation3 + $0x6e0] sm:$0xff]
        %v2067 = vld [vmem:[#allocation3 + $0x6e8] sm:$0xff]
        %v2068 = vld [vmem:[#allocation3 + $0x6f0] sm:$0xff]
        %v2069 = vld [vmem:[#allocation3 + $0x6f8] sm:$0xff]
        %v2070 = vld [vmem:[#allocation3 + $0x700] sm:$0xff]
        %v2071 = vld [vmem:[#allocation3 + $0x708] sm:$0xff]
        %v2072 = vld [vmem:[#allocation3 + $0x710] sm:$0xff]
        %v2073 = vld [vmem:[#allocation3 + $0x718] sm:$0xff]
        %v2074 = vld [vmem:[#allocation3 + $0x720] sm:$0xff]
        %v2075 = vld [vmem:[#allocation3 + $0x728] sm:$0xff]
        %v2076 = vld [vmem:[#allocation3 + $0x730] sm:$0xff]
        %v2077 = vld [vmem:[#allocation3 + $0x738] sm:$0xff]
        %v2078 = vld [vmem:[#allocation3 + $0x740] sm:$0xff]
        %v2079 = vld [vmem:[#allocation3 + $0x748] sm:$0xff]
        %v2080 = vld [vmem:[#allocation3 + $0x750] sm:$0xff]
        %v2081 = vld [vmem:[#allocation3 + $0x758] sm:$0xff]
        %v2082 = vld [vmem:[#allocation3 + $0x760] sm:$0xff]
        %v2083 = vld [vmem:[#allocation3 + $0x768] sm:$0xff]
        %v2084 = vld [vmem:[#allocation3 + $0x770] sm:$0xff]
        %v2085 = vld [vmem:[#allocation3 + $0x778] sm:$0xff]
        %v2086 = vld [vmem:[#allocation3 + $0x780] sm:$0xff]
        %v2087 = vld [vmem:[#allocation3 + $0x788] sm:$0xff]
        %v2088 = vld [vmem:[#allocation3 + $0x790] sm:$0xff]
        %v2089 = vld [vmem:[#allocation3 + $0x798] sm:$0xff]
        %v2090 = vld [vmem:[#allocation3 + $0x7a0] sm:$0xff]
        %v2091 = vld [vmem:[#allocation3 + $0x7a8] sm:$0xff]
        %v2092 = vld [vmem:[#allocation3 + $0x7b0] sm:$0xff]
        %v2093 = vld [vmem:[#allocation3 + $0x7b8] sm:$0xff]
        %v2094 = vld [vmem:[#allocation3 + $0x7c0] sm:$0xff]
        %v2095 = vld [vmem:[#allocation3 + $0x7c8] sm:$0xff]
        %v2096 = vld [vmem:[#allocation3 + $0x7d0] sm:$0xff]
        %v2097 = vld [vmem:[#allocation3 + $0x7d8] sm:$0xff]
        %v2098 = vld [vmem:[#allocation3 + $0x7e0] sm:$0xff]
        %v2099 = vld [vmem:[#allocation3 + $0x7e8] sm:$0xff]
        %v2100 = vld [vmem:[#allocation3 + $0x7f0] sm:$0xff]
        %v2101 = vld [vmem:[#allocation3 + $0x7f8] sm:$0xff]
        %v2102 = vld [vmem:[#allocation3 + $0x800] sm:$0xff]
        %v2103 = vld [vmem:[#allocation3 + $0x808] sm:$0xff]
        %v2104 = vld [vmem:[#allocation3 + $0x810] sm:$0xff]
        %v2105 = vld [vmem:[#allocation3 + $0x818] sm:$0xff]
        %v2106 = vld [vmem:[#allocation3 + $0x820] sm:$0xff]
        %v2107 = vld [vmem:[#allocation3 + $0x828] sm:$0xff]
        %v2108 = vld [vmem:[#allocation3 + $0x830] sm:$0xff]
        %v2109 = vld [vmem:[#allocation3 + $0x838] sm:$0xff]
        %v2110 = vld [vmem:[#allocation3 + $0x840] sm:$0xff]
        %v2111 = vld [vmem:[#allocation3 + $0x848] sm:$0xff]
        %v2112 = vld [vmem:[#allocation3 + $0x850] sm:$0xff]
        %v2113 = vld [vmem:[#allocation3 + $0x858] sm:$0xff]
        %v2114 = vld [vmem:[#allocation3 + $0x860] sm:$0xff]
        %v2115 = vld [vmem:[#allocation3 + $0x868] sm:$0xff]
        %v2116 = vld [vmem:[#allocation3 + $0x870] sm:$0xff]
        %v2117 = vld [vmem:[#allocation3 + $0x878] sm:$0xff]
        %v2118 = vld [vmem:[#allocation3 + $0x880] sm:$0xff]
        %v2119 = vld [vmem:[#allocation3 + $0x888] sm:$0xff]
        %v2120 = vld [vmem:[#allocation3 + $0x890] sm:$0xff]
        %v2121 = vld [vmem:[#allocation3 + $0x898] sm:$0xff]
        %v2122 = vld [vmem:[#allocation3 + $0x8a0] sm:$0xff]
        %v2123 = vld [vmem:[#allocation3 + $0x8a8] sm:$0xff]
        %v2124 = vld [vmem:[#allocation3 + $0x8b0] sm:$0xff]
        %v2125 = vld [vmem:[#allocation3 + $0x8b8] sm:$0xff]
        %v2126 = vld [vmem:[#allocation3 + $0x8c0] sm:$0xff]
        %v2127 = vld [vmem:[#allocation3 + $0x8c8] sm:$0xff]
        %v2128 = vld [vmem:[#allocation3 + $0x8d0] sm:$0xff]
        %v2129 = vld [vmem:[#allocation3 + $0x8d8] sm:$0xff]
        %v2130 = vld [vmem:[#allocation3 + $0x8e0] sm:$0xff]
        %v2131 = vld [vmem:[#allocation3 + $0x8e8] sm:$0xff]
        %v2132 = vld [vmem:[#allocation3 + $0x8f0] sm:$0xff]
        %v2133 = vld [vmem:[#allocation3 + $0x8f8] sm:$0xff]
        %v2134 = vld [vmem:[%s4] sm:$0xff]
        %v2135 = vld [vmem:[%s4 + $0x8] sm:$0xff]
        %v2136 = vld [vmem:[%s4 + $0x10] sm:$0xff]
        %v2137 = vld [vmem:[%s4 + $0x18] sm:$0xff]
        %v2138 = vld [vmem:[%s4 + $0x20] sm:$0xff]
        %v2139 = vld [vmem:[%s4 + $0x28] sm:$0xff]
        %v2140 = vld [vmem:[%s4 + $0x30] sm:$0xff]
        %v2141 = vld [vmem:[%s4 + $0x38] sm:$0xff]
        %v2142 = vld [vmem:[%s4 + $0x40] sm:$0xff]
        %v2143 = vld [vmem:[%s4 + $0x48] sm:$0xff]
        %v2144 = vld [vmem:[%s4 + $0x50] sm:$0xff]
        %v2145 = vld [vmem:[%s4 + $0x58] sm:$0xff]
        %v2146 = vld [vmem:[%s4 + $0x60] sm:$0xff]
        %v2147 = vld [vmem:[%s4 + $0x68] sm:$0xff]
        %v2148 = vld [vmem:[%s4 + $0x70] sm:$0xff]
        %v2149 = vld [vmem:[%s4 + $0x78] sm:$0xff]
        %v2150 = vld [vmem:[%s4 + $0x80] sm:$0xff]
        %v2151 = vld [vmem:[%s4 + $0x88] sm:$0xff]
        %v2152 = vld [vmem:[%s4 + $0x90] sm:$0xff]
        %v2153 = vld [vmem:[%s4 + $0x98] sm:$0xff]
        %v2154 = vld [vmem:[%s4 + $0xa0] sm:$0xff]
        %v2155 = vld [vmem:[%s4 + $0xa8] sm:$0xff]
        %v2156 = vld [vmem:[%s4 + $0xb0] sm:$0xff]
        %v2157 = vld [vmem:[%s4 + $0xb8] sm:$0xff]
        %v2158 = vld [vmem:[%s4 + $0xc0] sm:$0xff]
        %v2159 = vld [vmem:[%s4 + $0xc8] sm:$0xff]
        %v2160 = vld [vmem:[%s4 + $0xd0] sm:$0xff]
        %v2161 = vld [vmem:[%s4 + $0xd8] sm:$0xff]
        %v2162 = vld [vmem:[%s4 + $0xe0] sm:$0xff]
        %v2163 = vld [vmem:[%s4 + $0xe8] sm:$0xff]
        %v2164 = vld [vmem:[%s4 + $0xf0] sm:$0xff]
        %v2165 = vld [vmem:[%s4 + $0xf8] sm:$0xff]
        %v2166 = vld [vmem:[%s4 + $0x100] sm:$0xff]
        %v2167 = vld [vmem:[%s4 + $0x108] sm:$0xff]
        %v2168 = vld [vmem:[%s4 + $0x110] sm:$0xff]
        %v2169 = vld [vmem:[%s4 + $0x118] sm:$0xff]
        %v2170 = vld [vmem:[%s4 + $0x120] sm:$0xff]
        %v2171 = vld [vmem:[%s4 + $0x128] sm:$0xff]
        %v2172 = vld [vmem:[%s4 + $0x130] sm:$0xff]
        %v2173 = vld [vmem:[%s4 + $0x138] sm:$0xff]
        %v2174 = vld [vmem:[%s4 + $0x140] sm:$0xff]
        %v2175 = vld [vmem:[%s4 + $0x148] sm:$0xff]
        %v2176 = vld [vmem:[%s4 + $0x150] sm:$0xff]
        %v2177 = vld [vmem:[%s4 + $0x158] sm:$0xff]
        %v2178 = vld [vmem:[%s4 + $0x160] sm:$0xff]
        %v2179 = vld [vmem:[%s4 + $0x168] sm:$0xff]
        %v2180 = vld [vmem:[%s4 + $0x170] sm:$0xff]
        %v2181 = vld [vmem:[%s4 + $0x178] sm:$0xff]
        %v2182 = vld [vmem:[%s4 + $0x180] sm:$0xff]
        %v2183 = vld [vmem:[%s4 + $0x188] sm:$0xff]
        %v2184 = vld [vmem:[%s4 + $0x190] sm:$0xff]
        %v2185 = vld [vmem:[%s4 + $0x198] sm:$0xff]
        %v2186 = vld [vmem:[%s4 + $0x1a0] sm:$0xff]
        %v2187 = vld [vmem:[%s4 + $0x1a8] sm:$0xff]
        %v2188 = vld [vmem:[%s4 + $0x1b0] sm:$0xff]
        %v2189 = vld [vmem:[%s4 + $0x1b8] sm:$0xff]
        %v2190 = vld [vmem:[%s4 + $0x1c0] sm:$0xff]
        %v2191 = vld [vmem:[%s4 + $0x1c8] sm:$0xff]
        %v2192 = vld [vmem:[%s4 + $0x1d0] sm:$0xff]
        %v2193 = vld [vmem:[%s4 + $0x1d8] sm:$0xff]
        %v2194 = vld [vmem:[%s4 + $0x1e0] sm:$0xff]
        %v2195 = vld [vmem:[%s4 + $0x1e8] sm:$0xff]
        %v2196 = vld [vmem:[%s4 + $0x1f0] sm:$0xff]
        %v2197 = vld [vmem:[%s4 + $0x1f8] sm:$0xff]
        %v2198 = vld [vmem:[%s4 + $0x200] sm:$0xff]
        %v2199 = vld [vmem:[%s4 + $0x208] sm:$0xff]
        %v2200 = vld [vmem:[%s4 + $0x210] sm:$0xff]
        %v2201 = vld [vmem:[%s4 + $0x218] sm:$0xff]
        %v2202 = vld [vmem:[%s4 + $0x220] sm:$0xff]
        %v2203 = vld [vmem:[%s4 + $0x228] sm:$0xff]
        %v2204 = vld [vmem:[%s4 + $0x230] sm:$0xff]
        %v2205 = vld [vmem:[%s4 + $0x238] sm:$0xff]
        %v2206 = vld [vmem:[%s4 + $0x240] sm:$0xff]
        %v2207 = vld [vmem:[%s4 + $0x248] sm:$0xff]
        %v2208 = vld [vmem:[%s4 + $0x250] sm:$0xff]
        %v2209 = vld [vmem:[%s4 + $0x258] sm:$0xff]
        %v2210 = vld [vmem:[%s4 + $0x260] sm:$0xff]
        %v2211 = vld [vmem:[%s4 + $0x268] sm:$0xff]
        %v2212 = vld [vmem:[%s4 + $0x270] sm:$0xff]
        %v2213 = vld [vmem:[%s4 + $0x278] sm:$0xff]
        %v2214 = vld [vmem:[%s4 + $0x280] sm:$0xff]
        %v2215 = vld [vmem:[%s4 + $0x288] sm:$0xff]
        %v2216 = vld [vmem:[%s4 + $0x290] sm:$0xff]
        %v2217 = vld [vmem:[%s4 + $0x298] sm:$0xff]
        %v2218 = vld [vmem:[%s4 + $0x2a0] sm:$0xff]
        %v2219 = vld [vmem:[%s4 + $0x2a8] sm:$0xff]
        %v2220 = vld [vmem:[%s4 + $0x2b0] sm:$0xff]
        %v2221 = vld [vmem:[%s4 + $0x2b8] sm:$0xff]
        %v2222 = vld [vmem:[%s4 + $0x2c0] sm:$0xff]
        %v2223 = vld [vmem:[%s4 + $0x2c8] sm:$0xff]
        %v2224 = vld [vmem:[%s4 + $0x2d0] sm:$0xff]
        %v2225 = vld [vmem:[%s4 + $0x2d8] sm:$0xff]
        %v2226 = vld [vmem:[%s4 + $0x2e0] sm:$0xff]
        %v2227 = vld [vmem:[%s4 + $0x2e8] sm:$0xff]
        %v2228 = vld [vmem:[%s4 + $0x2f0] sm:$0xff]
        %v2229 = vld [vmem:[%s4 + $0x2f8] sm:$0xff]
        %v2230 = vld [vmem:[%s4 + $0x300] sm:$0xff]
        %v2231 = vld [vmem:[%s4 + $0x308] sm:$0xff]
        %v2232 = vld [vmem:[%s4 + $0x310] sm:$0xff]
        %v2233 = vld [vmem:[%s4 + $0x318] sm:$0xff]
        %v2234 = vld [vmem:[%s4 + $0x320] sm:$0xff]
        %v2235 = vld [vmem:[%s4 + $0x328] sm:$0xff]
        %v2236 = vld [vmem:[%s4 + $0x330] sm:$0xff]
        %v2237 = vld [vmem:[%s4 + $0x338] sm:$0xff]
        %v2238 = vld [vmem:[%s4 + $0x340] sm:$0xff]
        %v2239 = vld [vmem:[%s4 + $0x348] sm:$0xff]
        %v2240 = vld [vmem:[%s4 + $0x350] sm:$0xff]
        %v2241 = vld [vmem:[%s4 + $0x358] sm:$0xff]
        %v2242 = vld [vmem:[%s4 + $0x360] sm:$0xff]
        %v2243 = vld [vmem:[%s4 + $0x368] sm:$0xff]
        %v2244 = vld [vmem:[%s4 + $0x370] sm:$0xff]
        %v2245 = vld [vmem:[%s4 + $0x378] sm:$0xff]
        %v2246 = vld [vmem:[%s4 + $0x380] sm:$0xff]
        %v2247 = vld [vmem:[%s4 + $0x388] sm:$0xff]
        %v2248 = vld [vmem:[%s4 + $0x390] sm:$0xff]
        %v2249 = vld [vmem:[%s4 + $0x398] sm:$0xff]
        %v2250 = vld [vmem:[%s4 + $0x3a0] sm:$0xff]
        %v2251 = vld [vmem:[%s4 + $0x3a8] sm:$0xff]
        %v2252 = vld [vmem:[%s4 + $0x3b0] sm:$0xff]
        %v2253 = vld [vmem:[%s4 + $0x3b8] sm:$0xff]
        %v2254 = vld [vmem:[%s4 + $0x3c0] sm:$0xff]
        %v2255 = vld [vmem:[%s4 + $0x3c8] sm:$0xff]
        %v2256 = vld [vmem:[%s4 + $0x3d0] sm:$0xff]
        %v2257 = vld [vmem:[%s4 + $0x3d8] sm:$0xff]
        %v2258 = vld [vmem:[%s4 + $0x3e0] sm:$0xff]
        %v2259 = vld [vmem:[%s4 + $0x3e8] sm:$0xff]
        %v2260 = vld [vmem:[%s4 + $0x3f0] sm:$0xff]
        %v2261 = vld [vmem:[%s4 + $0x3f8] sm:$0xff]
        %v2262 = vld [vmem:[%s4 + $0x400] sm:$0xff]
        %v2263 = vld [vmem:[%s4 + $0x408] sm:$0xff]
        %v2264 = vld [vmem:[%s4 + $0x410] sm:$0xff]
        %v2265 = vld [vmem:[%s4 + $0x418] sm:$0xff]
        %v2266 = vld [vmem:[%s4 + $0x420] sm:$0xff]
        %v2267 = vld [vmem:[%s4 + $0x428] sm:$0xff]
        %v2268 = vld [vmem:[%s4 + $0x430] sm:$0xff]
        %v2269 = vld [vmem:[%s4 + $0x438] sm:$0xff]
        %v2270 = vld [vmem:[%s4 + $0x440] sm:$0xff]
        %v2271 = vld [vmem:[%s4 + $0x448] sm:$0xff]
        %v2272 = vld [vmem:[%s4 + $0x450] sm:$0xff]
        %v2273 = vld [vmem:[%s4 + $0x458] sm:$0xff]
        %v2274 = vld [vmem:[%s4 + $0x460] sm:$0xff]
        %v2275 = vld [vmem:[%s4 + $0x468] sm:$0xff]
        %v2276 = vld [vmem:[%s4 + $0x470] sm:$0xff]
        %v2277 = vld [vmem:[%s4 + $0x478] sm:$0xff]
        %2278 = vmatprep.subr.mxu0 0.0
        %2279 = vmatpush1.msra.mxu0 %v2134
        %2280 = vmatprep.subr.mxu0 0.0
        %2281 = vmatpush1.msra.mxu0 %v2135
        %2282 = vmatprep.subr.mxu0 0.0
        %2283 = vmatpush1.msra.mxu0 %v2136
        %2284 = vmatprep.subr.mxu0 0.0
        %2285 = vmatpush1.msra.mxu0 %v2137
        %2286 = vmatprep.subr.mxu0 0.0
        %2287 = vmatpush1.msra.mxu0 %v2138
        %2288 = vmatprep.subr.mxu0 0.0
        %2289 = vmatpush1.msra.mxu0 %v2139
        %2290 = vmatprep.subr.mxu0 0.0
        %2291 = vmatpush1.msra.mxu0 %v2140
        %2292 = vmatprep.subr.mxu0 0.0
        %2293 = vmatpush1.msra.mxu0 %v2141
        %2294 = vmatprep.subr.mxu0 0.0
        %2295 = vmatpush1.msra.mxu0 %v2142
        %2296 = vmatprep.subr.mxu0 0.0
        %2297 = vmatpush1.msra.mxu0 %v2143
        %2298 = vmatprep.subr.mxu0 0.0
        %2299 = vmatpush1.msra.mxu0 %v2144
        %2300 = vmatprep.subr.mxu0 0.0
        %2301 = vmatpush1.msra.mxu0 %v2145
        %2302 = vmatprep.subr.mxu0 0.0
        %2303 = vmatpush1.msra.mxu0 %v2146
        %2304 = vmatprep.subr.mxu0 0.0
        %2305 = vmatpush1.msra.mxu0 %v2147
        %2306 = vmatprep.subr.mxu0 0.0
        %2307 = vmatpush1.msra.mxu0 %v2148
        %2308 = vmatprep.subr.mxu0 0.0
        %2309 = vmatpush1.msra.mxu0 %v2149
        %2310 = vmatprep.subr.mxu0 0.0
        %2311 = vmatpush1.msra.mxu0 %v2150
        %2312 = vmatprep.subr.mxu0 0.0
        %2313 = vmatpush1.msra.mxu0 %v2151
        %2314 = vmatprep.subr.mxu0 0.0
        %2315 = vmatpush1.msra.mxu0 %v2152
        %2316 = vmatprep.subr.mxu0 0.0
        %2317 = vmatpush1.msra.mxu0 %v2153
        %2318 = vmatprep.subr.mxu0 0.0
        %2319 = vmatpush1.msra.mxu0 %v2154
        %2320 = vmatprep.subr.mxu0 0.0
        %2321 = vmatpush1.msra.mxu0 %v2155
        %2322 = vmatprep.subr.mxu0 0.0
        %2323 = vmatpush1.msra.mxu0 %v2156
        %2324 = vmatprep.subr.mxu0 0.0
        %2325 = vmatpush1.msra.mxu0 %v2157
        %2326 = vmatprep.subr.mxu0 0.0
        %2327 = vmatpush1.msra.mxu0 %v2158
        %2328 = vmatprep.subr.mxu0 0.0
        %2329 = vmatpush1.msra.mxu0 %v2159
        %2330 = vmatprep.subr.mxu0 0.0
        %2331 = vmatpush1.msra.mxu0 %v2160
        %2332 = vmatprep.subr.mxu0 0.0
        %2333 = vmatpush1.msra.mxu0 %v2161
        %2334 = vmatprep.subr.mxu0 0.0
        %2335 = vmatpush1.msra.mxu0 %v2162
        %2336 = vmatprep.subr.mxu0 0.0
        %2337 = vmatpush1.msra.mxu0 %v2163
        %2338 = vmatprep.subr.mxu0 0.0
        %2339 = vmatpush1.msra.mxu0 %v2164
        %2340 = vmatprep.subr.mxu0 0.0
        %2341 = vmatpush1.msra.mxu0 %v2165
        %2342 = vmatprep.mubr.f32.mxu0 %v1847
        %2343 = vmatmul.mubr.f32.gmra.mrb[0].mxu0 %v1846
        %v2344 = vpop.f32.mrb[0].mxu0
        %v2345 = vadd.f32 0.0, %v2344
        %v2346 = vpop.f32.mrb[0].mxu0
        %2347 = vmatprep.mubr.f32.mxu0 %v1856
        %2348 = vmatmul.mubr.f32.gmra.mrb[0].mxu0 %v1855
        %v2349 = vpop.f32.mrb[0].mxu0
        %v2350 = vadd.f32 0.0, %v2349
        %v2351 = vpop.f32.mrb[0].mxu0
        %2352 = vmatprep.mubr.f32.mxu0 %v1865
        %2353 = vmatmul.mubr.f32.gmra.mrb[0].mxu0 %v1864
        %v2354 = vpop.f32.mrb[0].mxu0
        %v2355 = vadd.f32 0.0, %v2354
        %v2356 = vpop.f32.mrb[0].mxu0
        %2357 = vmatprep.mubr.f32.mxu0 %v1874
        %2358 = vmatmul.mubr.f32.gmra.mrb[0].mxu0 %v1873
        %v2359 = vpop.f32.mrb[0].mxu0
        %v2360 = vadd.f32 0.0, %v2359
        %v2361 = vpop.f32.mrb[0].mxu0
        %2362 = vmatprep.mubr.f32.mxu0 %v1883
        %2363 = vmatmul.mubr.f32.gmra.mrb[0].mxu0 %v1882
        %v2364 = vpop.f32.mrb[0].mxu0
        %v2365 = vadd.f32 0.0, %v2364
        %v2366 = vpop.f32.mrb[0].mxu0
        %2367 = vmatprep.mubr.f32.mxu0 %v1892
        %2368 = vmatmul.mubr.f32.gmra.mrb[0].mxu0 %v1891
        %v2369 = vpop.f32.mrb[0].mxu0
        %v2370 = vadd.f32 0.0, %v2369
        %v2371 = vpop.f32.mrb[0].mxu0
        %2372 = vmatprep.mubr.f32.mxu0 %v1901
        %2373 = vmatmul.mubr.f32.gmra.mrb[0].mxu0 %v1900
        %v2374 = vpop.f32.mrb[0].mxu0
        %v2375 = vadd.f32 0.0, %v2374
        %v2376 = vpop.f32.mrb[0].mxu0
        %2377 = vmatprep.mubr.f32.mxu0 %v1910
        %2378 = vmatmul.mubr.f32.gmra.mrb[0].mxu0 %v1909
        %v2379 = vpop.f32.mrb[0].mxu0
        %v2380 = vadd.f32 0.0, %v2379
        %v2381 = vpop.f32.mrb[0].mxu0
        %2382 = vmatprep.mubr.f32.mxu0 %v1919
        %2383 = vmatmul.mubr.f32.gmra.mrb[0].mxu0 %v1918
        %v2384 = vpop.f32.mrb[0].mxu0
        %v2385 = vadd.f32 0.0, %v2384
        %v2386 = vpop.f32.mrb[0].mxu0
        %2387 = vmatprep.mubr.f32.mxu0 %v1928
        %2388 = vmatmul.mubr.f32.gmra.mrb[0].mxu0 %v1927
        %v2389 = vpop.f32.mrb[0].mxu0
        %v2390 = vadd.f32 0.0, %v2389
        %v2391 = vpop.f32.mrb[0].mxu0
        %2392 = vmatprep.mubr.f32.mxu0 %v1937
        %2393 = vmatmul.mubr.f32.gmra.mrb[0].mxu0 %v1936
        %v2394 = vpop.f32.mrb[0].mxu0
        %v2395 = vadd.f32 0.0, %v2394
        %v2396 = vpop.f32.mrb[0].mxu0
        %2397 = vmatprep.mubr.f32.mxu0 %v1946
        %2398 = vmatmul.mubr.f32.gmra.mrb[0].mxu0 %v1945
        %v2399 = vpop.f32.mrb[0].mxu0
        %v2400 = vadd.f32 0.0, %v2399
        %v2401 = vpop.f32.mrb[0].mxu0
        %2402 = vmatprep.mubr.f32.mxu0 %v1955
        %2403 = vmatmul.mubr.f32.gmra.mrb[0].mxu0 %v1954
        %v2404 = vpop.f32.mrb[0].mxu0
        %v2405 = vadd.f32 0.0, %v2404
        %v2406 = vpop.f32.mrb[0].mxu0
        %2407 = vmatprep.mubr.f32.mxu0 %v1964
        %2408 = vmatmul.mubr.f32.gmra.mrb[0].mxu0 %v1963
        %v2409 = vpop.f32.mrb[0].mxu0
        %v2410 = vadd.f32 0.0, %v2409
        %v2411 = vpop.f32.mrb[0].mxu0
        %2412 = vmatprep.mubr.f32.mxu0 %v1973
        %2413 = vmatmul.mubr.f32.gmra.mrb[0].mxu0 %v1972
        %v2414 = vpop.f32.mrb[0].mxu0
        %v2415 = vadd.f32 0.0, %v2414
        %v2416 = vpop.f32.mrb[0].mxu0
        %2417 = vmatprep.mubr.f32.mxu0 %v1982
        %2418 = vmatmul.mubr.f32.gmra.mrb[0].mxu0 %v1981
        %v2419 = vpop.f32.mrb[0].mxu0
        %v2420 = vadd.f32 0.0, %v2419
        %v2421 = vpop.f32.mrb[0].mxu0
        %2422 = vmatprep.mubr.f32.mxu0 %v1991
        %2423 = vmatmul.mubr.f32.gmra.mrb[0].mxu0 %v1990
        %v2424 = vpop.f32.mrb[0].mxu0
        %v2425 = vadd.f32 0.0, %v2424
        %v2426 = vpop.f32.mrb[0].mxu0
        %2427 = vmatprep.mubr.f32.mxu0 %v2000
        %2428 = vmatmul.mubr.f32.gmra.mrb[0].mxu0 %v1999
        %v2429 = vpop.f32.mrb[0].mxu0
        %v2430 = vadd.f32 0.0, %v2429
        %v2431 = vpop.f32.mrb[0].mxu0
        %2432 = vmatprep.mubr.f32.mxu0 %v2009
        %2433 = vmatmul.mubr.f32.gmra.mrb[0].mxu0 %v2008
        %v2434 = vpop.f32.mrb[0].mxu0
        %v2435 = vadd.f32 0.0, %v2434
        %v2436 = vpop.f32.mrb[0].mxu0
        %2437 = vmatprep.mubr.f32.mxu0 %v2018
        %2438 = vmatmul.mubr.f32.gmra.mrb[0].mxu0 %v2017
        %v2439 = vpop.f32.mrb[0].mxu0
        %v2440 = vadd.f32 0.0, %v2439
        %v2441 = vpop.f32.mrb[0].mxu0
        %2442 = vmatprep.mubr.f32.mxu0 %v2027
        %2443 = vmatmul.mubr.f32.gmra.mrb[0].mxu0 %v2026
        %v2444 = vpop.f32.mrb[0].mxu0
        %v2445 = vadd.f32 0.0, %v2444
        %v2446 = vpop.f32.mrb[0].mxu0
        %2447 = vmatprep.mubr.f32.mxu0 %v2036
        %2448 = vmatmul.mubr.f32.gmra.mrb[0].mxu0 %v2035
        %v2449 = vpop.f32.mrb[0].mxu0
        %v2450 = vadd.f32 0.0, %v2449
        %v2451 = vpop.f32.mrb[0].mxu0
        %2452 = vmatprep.mubr.f32.mxu0 %v2045
        %2453 = vmatmul.mubr.f32.gmra.mrb[0].mxu0 %v2044
        %v2454 = vpop.f32.mrb[0].mxu0
        %v2455 = vadd.f32 0.0, %v2454
        %v2456 = vpop.f32.mrb[0].mxu0
        %2457 = vmatprep.mubr.f32.mxu0 %v2054
        %2458 = vmatmul.mubr.f32.gmra.mrb[0].mxu0 %v2053
        %v2459 = vpop.f32.mrb[0].mxu0
        %v2460 = vadd.f32 0.0, %v2459
        %v2461 = vpop.f32.mrb[0].mxu0
        %2462 = vmatprep.mubr.f32.mxu0 %v2063
        %2463 = vmatmul.mubr.f32.gmra.mrb[0].mxu0 %v2062
        %v2464 = vpop.f32.mrb[0].mxu0
        %v2465 = vadd.f32 0.0, %v2464
        %v2466 = vpop.f32.mrb[0].mxu0
        %2467 = vmatprep.mubr.f32.mxu0 %v2072
        %2468 = vmatmul.mubr.f32.gmra.mrb[0].mxu0 %v2071
        %v2469 = vpop.f32.mrb[0].mxu0
        %v2470 = vadd.f32 0.0, %v2469
        %v2471 = vpop.f32.mrb[0].mxu0
        %2472 = vmatprep.mubr.f32.mxu0 %v2081
        %2473 = vmatmul.mubr.f32.gmra.mrb[0].mxu0 %v2080
        %v2474 = vpop.f32.mrb[0].mxu0
        %v2475 = vadd.f32 0.0, %v2474
        %v2476 = vpop.f32.mrb[0].mxu0
        %2477 = vmatprep.mubr.f32.mxu0 %v2090
        %2478 = vmatmul.mubr.f32.gmra.mrb[0].mxu0 %v2089
        %v2479 = vpop.f32.mrb[0].mxu0
        %v2480 = vadd.f32 0.0, %v2479
        %v2481 = vpop.f32.mrb[0].mxu0
        %2482 = vmatprep.mubr.f32.mxu0 %v2099
        %2483 = vmatmul.mubr.f32.gmra.mrb[0].mxu0 %v2098
        %v2484 = vpop.f32.mrb[0].mxu0
        %v2485 = vadd.f32 0.0, %v2484
        %v2486 = vpop.f32.mrb[0].mxu0
        %2487 = vmatprep.mubr.f32.mxu0 %v2108
        %2488 = vmatmul.mubr.f32.gmra.mrb[0].mxu0 %v2107
        %v2489 = vpop.f32.mrb[0].mxu0
        %v2490 = vadd.f32 0.0, %v2489
        %v2491 = vpop.f32.mrb[0].mxu0
        %2492 = vmatprep.mubr.f32.mxu0 %v2117
        %2493 = vmatmul.mubr.f32.gmra.mrb[0].mxu0 %v2116
        %v2494 = vpop.f32.mrb[0].mxu0
        %v2495 = vadd.f32 0.0, %v2494
        %v2496 = vpop.f32.mrb[0].mxu0
        %2497 = vmatprep.mubr.f32.mxu0 %v2126
        %2498 = vmatmul.mubr.f32.gmra.mrb[0].mxu0 %v2125
        %v2499 = vpop.f32.mrb[0].mxu0
        %v2500 = vadd.f32 0.0, %v2499
        %v2501 = vpop.f32.mrb[0].mxu0
        %2502 = vdwg.mxu0
        %2503 = vmatprep.subr.mxu0 0.0
        %2504 = vmatpush1.msra.mxu0 %v2166
        %2505 = vmatprep.subr.mxu0 0.0
        %2506 = vmatpush1.msra.mxu0 %v2167
        %2507 = vmatprep.subr.mxu0 0.0
        %2508 = vmatpush1.msra.mxu0 %v2168
        %2509 = vmatprep.subr.mxu0 0.0
        %2510 = vmatpush1.msra.mxu0 %v2169
        %2511 = vmatprep.subr.mxu0 0.0
        %2512 = vmatpush1.msra.mxu0 %v2170
        %2513 = vmatprep.subr.mxu0 0.0
        %2514 = vmatpush1.msra.mxu0 %v2171
        %2515 = vmatprep.subr.mxu0 0.0
        %2516 = vmatpush1.msra.mxu0 %v2172
        %2517 = vmatprep.subr.mxu0 0.0
        %2518 = vmatpush1.msra.mxu0 %v2173
        %2519 = vmatprep.subr.mxu0 0.0
        %2520 = vmatpush1.msra.mxu0 %v2174
        %2521 = vmatprep.subr.mxu0 0.0
        %2522 = vmatpush1.msra.mxu0 %v2175
        %2523 = vmatprep.subr.mxu0 0.0
        %2524 = vmatpush1.msra.mxu0 %v2176
        %2525 = vmatprep.subr.mxu0 0.0
        %2526 = vmatpush1.msra.mxu0 %v2177
        %2527 = vmatprep.subr.mxu0 0.0
        %2528 = vmatpush1.msra.mxu0 %v2178
        %2529 = vmatprep.subr.mxu0 0.0
        %2530 = vmatpush1.msra.mxu0 %v2179
        %2531 = vmatprep.subr.mxu0 0.0
        %2532 = vmatpush1.msra.mxu0 %v2180
        %2533 = vmatprep.subr.mxu0 0.0
        %2534 = vmatpush1.msra.mxu0 %v2181
        %2535 = vmatprep.subr.mxu0 0.0
        %2536 = vmatpush1.msra.mxu0 %v2182
        %2537 = vmatprep.subr.mxu0 0.0
        %2538 = vmatpush1.msra.mxu0 %v2183
        %2539 = vmatprep.subr.mxu0 0.0
        %2540 = vmatpush1.msra.mxu0 %v2184
        %2541 = vmatprep.subr.mxu0 0.0
        %2542 = vmatpush1.msra.mxu0 %v2185
        %2543 = vmatprep.subr.mxu0 0.0
        %2544 = vmatpush1.msra.mxu0 %v2186
        %2545 = vmatprep.subr.mxu0 0.0
        %2546 = vmatpush1.msra.mxu0 %v2187
        %2547 = vmatprep.subr.mxu0 0.0
        %2548 = vmatpush1.msra.mxu0 %v2188
        %2549 = vmatprep.subr.mxu0 0.0
        %2550 = vmatpush1.msra.mxu0 %v2189
        %2551 = vmatprep.subr.mxu0 0.0
        %2552 = vmatpush1.msra.mxu0 %v2190
        %2553 = vmatprep.subr.mxu0 0.0
        %2554 = vmatpush1.msra.mxu0 %v2191
        %2555 = vmatprep.subr.mxu0 0.0
        %2556 = vmatpush1.msra.mxu0 %v2192
        %2557 = vmatprep.subr.mxu0 0.0
        %2558 = vmatpush1.msra.mxu0 %v2193
        %2559 = vmatprep.subr.mxu0 0.0
        %2560 = vmatpush1.msra.mxu0 %v2194
        %2561 = vmatprep.subr.mxu0 0.0
        %2562 = vmatpush1.msra.mxu0 %v2195
        %2563 = vmatprep.subr.mxu0 0.0
        %2564 = vmatpush1.msra.mxu0 %v2196
        %2565 = vmatprep.subr.mxu0 0.0
        %2566 = vmatpush1.msra.mxu0 %v2197
        %2567 = vmatprep.mubr.f32.mxu0 %v1849
        %2568 = vmatmul.mubr.f32.gmra.mrb[0].mxu0 %v1848
        %v2569 = vpop.f32.mrb[0].mxu0
        %v2570 = vadd.f32 %v2345, %v2569
        %v2571 = vpop.f32.mrb[0].mxu0
        %2572 = vmatprep.mubr.f32.mxu0 %v1858
        %2573 = vmatmul.mubr.f32.gmra.mrb[0].mxu0 %v1857
        %v2574 = vpop.f32.mrb[0].mxu0
        %v2575 = vadd.f32 %v2350, %v2574
        %v2576 = vpop.f32.mrb[0].mxu0
        %2577 = vmatprep.mubr.f32.mxu0 %v1867
        %2578 = vmatmul.mubr.f32.gmra.mrb[0].mxu0 %v1866
        %v2579 = vpop.f32.mrb[0].mxu0
        %v2580 = vadd.f32 %v2355, %v2579
        %v2581 = vpop.f32.mrb[0].mxu0
        %2582 = vmatprep.mubr.f32.mxu0 %v1876
        %2583 = vmatmul.mubr.f32.gmra.mrb[0].mxu0 %v1875
        %v2584 = vpop.f32.mrb[0].mxu0
        %v2585 = vadd.f32 %v2360, %v2584
        %v2586 = vpop.f32.mrb[0].mxu0
        %2587 = vmatprep.mubr.f32.mxu0 %v1885
        %2588 = vmatmul.mubr.f32.gmra.mrb[0].mxu0 %v1884
        %v2589 = vpop.f32.mrb[0].mxu0
        %v2590 = vadd.f32 %v2365, %v2589
        %v2591 = vpop.f32.mrb[0].mxu0
        %2592 = vmatprep.mubr.f32.mxu0 %v1894
        %2593 = vmatmul.mubr.f32.gmra.mrb[0].mxu0 %v1893
        %v2594 = vpop.f32.mrb[0].mxu0
        %v2595 = vadd.f32 %v2370, %v2594
        %v2596 = vpop.f32.mrb[0].mxu0
        %2597 = vmatprep.mubr.f32.mxu0 %v1903
        %2598 = vmatmul.mubr.f32.gmra.mrb[0].mxu0 %v1902
        %v2599 = vpop.f32.mrb[0].mxu0
        %v2600 = vadd.f32 %v2375, %v2599
        %v2601 = vpop.f32.mrb[0].mxu0
        %2602 = vmatprep.mubr.f32.mxu0 %v1912
        %2603 = vmatmul.mubr.f32.gmra.mrb[0].mxu0 %v1911
        %v2604 = vpop.f32.mrb[0].mxu0
        %v2605 = vadd.f32 %v2380, %v2604
        %v2606 = vpop.f32.mrb[0].mxu0
        %2607 = vmatprep.mubr.f32.mxu0 %v1921
        %2608 = vmatmul.mubr.f32.gmra.mrb[0].mxu0 %v1920
        %v2609 = vpop.f32.mrb[0].mxu0
        %v2610 = vadd.f32 %v2385, %v2609
        %v2611 = vpop.f32.mrb[0].mxu0
        %2612 = vmatprep.mubr.f32.mxu0 %v1930
        %2613 = vmatmul.mubr.f32.gmra.mrb[0].mxu0 %v1929
        %v2614 = vpop.f32.mrb[0].mxu0
        %v2615 = vadd.f32 %v2390, %v2614
        %v2616 = vpop.f32.mrb[0].mxu0
        %2617 = vmatprep.mubr.f32.mxu0 %v1939
        %2618 = vmatmul.mubr.f32.gmra.mrb[0].mxu0 %v1938
        %v2619 = vpop.f32.mrb[0].mxu0
        %v2620 = vadd.f32 %v2395, %v2619
        %v2621 = vpop.f32.mrb[0].mxu0
        %2622 = vmatprep.mubr.f32.mxu0 %v1948
        %2623 = vmatmul.mubr.f32.gmra.mrb[0].mxu0 %v1947
        %v2624 = vpop.f32.mrb[0].mxu0
        %v2625 = vadd.f32 %v2400, %v2624
        %v2626 = vpop.f32.mrb[0].mxu0
        %2627 = vmatprep.mubr.f32.mxu0 %v1957
        %2628 = vmatmul.mubr.f32.gmra.mrb[0].mxu0 %v1956
        %v2629 = vpop.f32.mrb[0].mxu0
        %v2630 = vadd.f32 %v2405, %v2629
        %v2631 = vpop.f32.mrb[0].mxu0
        %2632 = vmatprep.mubr.f32.mxu0 %v1966
        %2633 = vmatmul.mubr.f32.gmra.mrb[0].mxu0 %v1965
        %v2634 = vpop.f32.mrb[0].mxu0
        %v2635 = vadd.f32 %v2410, %v2634
        %v2636 = vpop.f32.mrb[0].mxu0
        %2637 = vmatprep.mubr.f32.mxu0 %v1975
        %2638 = vmatmul.mubr.f32.gmra.mrb[0].mxu0 %v1974
        %v2639 = vpop.f32.mrb[0].mxu0
        %v2640 = vadd.f32 %v2415, %v2639
        %v2641 = vpop.f32.mrb[0].mxu0
        %2642 = vmatprep.mubr.f32.mxu0 %v1984
        %2643 = vmatmul.mubr.f32.gmra.mrb[0].mxu0 %v1983
        %v2644 = vpop.f32.mrb[0].mxu0
        %v2645 = vadd.f32 %v2420, %v2644
        %v2646 = vpop.f32.mrb[0].mxu0
        %2647 = vmatprep.mubr.f32.mxu0 %v1993
        %2648 = vmatmul.mubr.f32.gmra.mrb[0].mxu0 %v1992
        %v2649 = vpop.f32.mrb[0].mxu0
        %v2650 = vadd.f32 %v2425, %v2649
        %v2651 = vpop.f32.mrb[0].mxu0
        %2652 = vmatprep.mubr.f32.mxu0 %v2002
        %2653 = vmatmul.mubr.f32.gmra.mrb[0].mxu0 %v2001
        %v2654 = vpop.f32.mrb[0].mxu0
        %v2655 = vadd.f32 %v2430, %v2654
        %v2656 = vpop.f32.mrb[0].mxu0
        %2657 = vmatprep.mubr.f32.mxu0 %v2011
        %2658 = vmatmul.mubr.f32.gmra.mrb[0].mxu0 %v2010
        %v2659 = vpop.f32.mrb[0].mxu0
        %v2660 = vadd.f32 %v2435, %v2659
        %v2661 = vpop.f32.mrb[0].mxu0
        %2662 = vmatprep.mubr.f32.mxu0 %v2020
        %2663 = vmatmul.mubr.f32.gmra.mrb[0].mxu0 %v2019
        %v2664 = vpop.f32.mrb[0].mxu0
        %v2665 = vadd.f32 %v2440, %v2664
        %v2666 = vpop.f32.mrb[0].mxu0
        %2667 = vmatprep.mubr.f32.mxu0 %v2029
        %2668 = vmatmul.mubr.f32.gmra.mrb[0].mxu0 %v2028
        %v2669 = vpop.f32.mrb[0].mxu0
        %v2670 = vadd.f32 %v2445, %v2669
        %v2671 = vpop.f32.mrb[0].mxu0
        %2672 = vmatprep.mubr.f32.mxu0 %v2038
        %2673 = vmatmul.mubr.f32.gmra.mrb[0].mxu0 %v2037
        %v2674 = vpop.f32.mrb[0].mxu0
        %v2675 = vadd.f32 %v2450, %v2674
        %v2676 = vpop.f32.mrb[0].mxu0
        %2677 = vmatprep.mubr.f32.mxu0 %v2047
        %2678 = vmatmul.mubr.f32.gmra.mrb[0].mxu0 %v2046
        %v2679 = vpop.f32.mrb[0].mxu0
        %v2680 = vadd.f32 %v2455, %v2679
        %v2681 = vpop.f32.mrb[0].mxu0
        %2682 = vmatprep.mubr.f32.mxu0 %v2056
        %2683 = vmatmul.mubr.f32.gmra.mrb[0].mxu0 %v2055
        %v2684 = vpop.f32.mrb[0].mxu0
        %v2685 = vadd.f32 %v2460, %v2684
        %v2686 = vpop.f32.mrb[0].mxu0
        %2687 = vmatprep.mubr.f32.mxu0 %v2065
        %2688 = vmatmul.mubr.f32.gmra.mrb[0].mxu0 %v2064
        %v2689 = vpop.f32.mrb[0].mxu0
        %v2690 = vadd.f32 %v2465, %v2689
        %v2691 = vpop.f32.mrb[0].mxu0
        %2692 = vmatprep.mubr.f32.mxu0 %v2074
        %2693 = vmatmul.mubr.f32.gmra.mrb[0].mxu0 %v2073
        %v2694 = vpop.f32.mrb[0].mxu0
        %v2695 = vadd.f32 %v2470, %v2694
        %v2696 = vpop.f32.mrb[0].mxu0
        %2697 = vmatprep.mubr.f32.mxu0 %v2083
        %2698 = vmatmul.mubr.f32.gmra.mrb[0].mxu0 %v2082
        %v2699 = vpop.f32.mrb[0].mxu0
        %v2700 = vadd.f32 %v2475, %v2699
        %v2701 = vpop.f32.mrb[0].mxu0
        %2702 = vmatprep.mubr.f32.mxu0 %v2092
        %2703 = vmatmul.mubr.f32.gmra.mrb[0].mxu0 %v2091
        %v2704 = vpop.f32.mrb[0].mxu0
        %v2705 = vadd.f32 %v2480, %v2704
        %v2706 = vpop.f32.mrb[0].mxu0
        %2707 = vmatprep.mubr.f32.mxu0 %v2101
        %2708 = vmatmul.mubr.f32.gmra.mrb[0].mxu0 %v2100
        %v2709 = vpop.f32.mrb[0].mxu0
        %v2710 = vadd.f32 %v2485, %v2709
        %v2711 = vpop.f32.mrb[0].mxu0
        %2712 = vmatprep.mubr.f32.mxu0 %v2110
        %2713 = vmatmul.mubr.f32.gmra.mrb[0].mxu0 %v2109
        %v2714 = vpop.f32.mrb[0].mxu0
        %v2715 = vadd.f32 %v2490, %v2714
        %v2716 = vpop.f32.mrb[0].mxu0
        %2717 = vmatprep.mubr.f32.mxu0 %v2119
        %2718 = vmatmul.mubr.f32.gmra.mrb[0].mxu0 %v2118
        %v2719 = vpop.f32.mrb[0].mxu0
        %v2720 = vadd.f32 %v2495, %v2719
        %v2721 = vpop.f32.mrb[0].mxu0
        %2722 = vmatprep.mubr.f32.mxu0 %v2128
        %2723 = vmatmul.mubr.f32.gmra.mrb[0].mxu0 %v2127
        %v2724 = vpop.f32.mrb[0].mxu0
        %v2725 = vadd.f32 %v2500, %v2724
        %v2726 = vpop.f32.mrb[0].mxu0
        %2727 = vdwg.mxu0
        %2728 = vmatprep.subr.mxu0 0.0
        %2729 = vmatpush1.msra.mxu0 %v2198
        %2730 = vmatprep.subr.mxu0 0.0
        %2731 = vmatpush1.msra.mxu0 %v2199
        %2732 = vmatprep.subr.mxu0 0.0
        %2733 = vmatpush1.msra.mxu0 %v2200
        %2734 = vmatprep.subr.mxu0 0.0
        %2735 = vmatpush1.msra.mxu0 %v2201
        %2736 = vmatprep.subr.mxu0 0.0
        %2737 = vmatpush1.msra.mxu0 %v2202
        %2738 = vmatprep.subr.mxu0 0.0
        %2739 = vmatpush1.msra.mxu0 %v2203
        %2740 = vmatprep.subr.mxu0 0.0
        %2741 = vmatpush1.msra.mxu0 %v2204
        %2742 = vmatprep.subr.mxu0 0.0
        %2743 = vmatpush1.msra.mxu0 %v2205
        %2744 = vmatprep.subr.mxu0 0.0
        %2745 = vmatpush1.msra.mxu0 %v2206
        %2746 = vmatprep.subr.mxu0 0.0
        %2747 = vmatpush1.msra.mxu0 %v2207
        %2748 = vmatprep.subr.mxu0 0.0
        %2749 = vmatpush1.msra.mxu0 %v2208
        %2750 = vmatprep.subr.mxu0 0.0
        %2751 = vmatpush1.msra.mxu0 %v2209
        %2752 = vmatprep.subr.mxu0 0.0
        %2753 = vmatpush1.msra.mxu0 %v2210
        %2754 = vmatprep.subr.mxu0 0.0
        %2755 = vmatpush1.msra.mxu0 %v2211
        %2756 = vmatprep.subr.mxu0 0.0
        %2757 = vmatpush1.msra.mxu0 %v2212
        %2758 = vmatprep.subr.mxu0 0.0
        %2759 = vmatpush1.msra.mxu0 %v2213
        %2760 = vmatprep.subr.mxu0 0.0
        %2761 = vmatpush1.msra.mxu0 %v2214
        %2762 = vmatprep.subr.mxu0 0.0
        %2763 = vmatpush1.msra.mxu0 %v2215
        %2764 = vmatprep.subr.mxu0 0.0
        %2765 = vmatpush1.msra.mxu0 %v2216
        %2766 = vmatprep.subr.mxu0 0.0
        %2767 = vmatpush1.msra.mxu0 %v2217
        %2768 = vmatprep.subr.mxu0 0.0
        %2769 = vmatpush1.msra.mxu0 %v2218
        %2770 = vmatprep.subr.mxu0 0.0
        %2771 = vmatpush1.msra.mxu0 %v2219
        %2772 = vmatprep.subr.mxu0 0.0
        %2773 = vmatpush1.msra.mxu0 %v2220
        %2774 = vmatprep.subr.mxu0 0.0
        %2775 = vmatpush1.msra.mxu0 %v2221
        %2776 = vmatprep.subr.mxu0 0.0
        %2777 = vmatpush1.msra.mxu0 %v2222
        %2778 = vmatprep.subr.mxu0 0.0
        %2779 = vmatpush1.msra.mxu0 %v2223
        %2780 = vmatprep.subr.mxu0 0.0
        %2781 = vmatpush1.msra.mxu0 %v2224
        %2782 = vmatprep.subr.mxu0 0.0
        %2783 = vmatpush1.msra.mxu0 %v2225
        %2784 = vmatprep.subr.mxu0 0.0
        %2785 = vmatpush1.msra.mxu0 %v2226
        %2786 = vmatprep.subr.mxu0 0.0
        %2787 = vmatpush1.msra.mxu0 %v2227
        %2788 = vmatprep.subr.mxu0 0.0
        %2789 = vmatpush1.msra.mxu0 %v2228
        %2790 = vmatprep.subr.mxu0 0.0
        %2791 = vmatpush1.msra.mxu0 %v2229
        %2792 = vmatprep.mubr.f32.mxu0 %v1851
        %2793 = vmatmul.mubr.f32.gmra.mrb[0].mxu0 %v1850
        %v2794 = vpop.f32.mrb[0].mxu0
        %v2795 = vadd.f32 %v2570, %v2794
        %v2796 = vpop.f32.mrb[0].mxu0
        %2797 = vmatprep.mubr.f32.mxu0 %v1860
        %2798 = vmatmul.mubr.f32.gmra.mrb[0].mxu0 %v1859
        %v2799 = vpop.f32.mrb[0].mxu0
        %v2800 = vadd.f32 %v2575, %v2799
        %v2801 = vpop.f32.mrb[0].mxu0
        %2802 = vmatprep.mubr.f32.mxu0 %v1869
        %2803 = vmatmul.mubr.f32.gmra.mrb[0].mxu0 %v1868
        %v2804 = vpop.f32.mrb[0].mxu0
        %v2805 = vadd.f32 %v2580, %v2804
        %v2806 = vpop.f32.mrb[0].mxu0
        %2807 = vmatprep.mubr.f32.mxu0 %v1878
        %2808 = vmatmul.mubr.f32.gmra.mrb[0].mxu0 %v1877
        %v2809 = vpop.f32.mrb[0].mxu0
        %v2810 = vadd.f32 %v2585, %v2809
        %v2811 = vpop.f32.mrb[0].mxu0
        %2812 = vmatprep.mubr.f32.mxu0 %v1887
        %2813 = vmatmul.mubr.f32.gmra.mrb[0].mxu0 %v1886
        %v2814 = vpop.f32.mrb[0].mxu0
        %v2815 = vadd.f32 %v2590, %v2814
        %v2816 = vpop.f32.mrb[0].mxu0
        %2817 = vmatprep.mubr.f32.mxu0 %v1896
        %2818 = vmatmul.mubr.f32.gmra.mrb[0].mxu0 %v1895
        %v2819 = vpop.f32.mrb[0].mxu0
        %v2820 = vadd.f32 %v2595, %v2819
        %v2821 = vpop.f32.mrb[0].mxu0
        %2822 = vmatprep.mubr.f32.mxu0 %v1905
        %2823 = vmatmul.mubr.f32.gmra.mrb[0].mxu0 %v1904
        %v2824 = vpop.f32.mrb[0].mxu0
        %v2825 = vadd.f32 %v2600, %v2824
        %v2826 = vpop.f32.mrb[0].mxu0
        %2827 = vmatprep.mubr.f32.mxu0 %v1914
        %2828 = vmatmul.mubr.f32.gmra.mrb[0].mxu0 %v1913
        %v2829 = vpop.f32.mrb[0].mxu0
        %v2830 = vadd.f32 %v2605, %v2829
        %v2831 = vpop.f32.mrb[0].mxu0
        %2832 = vmatprep.mubr.f32.mxu0 %v1923
        %2833 = vmatmul.mubr.f32.gmra.mrb[0].mxu0 %v1922
        %v2834 = vpop.f32.mrb[0].mxu0
        %v2835 = vadd.f32 %v2610, %v2834
        %v2836 = vpop.f32.mrb[0].mxu0
        %2837 = vmatprep.mubr.f32.mxu0 %v1932
        %2838 = vmatmul.mubr.f32.gmra.mrb[0].mxu0 %v1931
        %v2839 = vpop.f32.mrb[0].mxu0
        %v2840 = vadd.f32 %v2615, %v2839
        %v2841 = vpop.f32.mrb[0].mxu0
        %2842 = vmatprep.mubr.f32.mxu0 %v1941
        %2843 = vmatmul.mubr.f32.gmra.mrb[0].mxu0 %v1940
        %v2844 = vpop.f32.mrb[0].mxu0
        %v2845 = vadd.f32 %v2620, %v2844
        %v2846 = vpop.f32.mrb[0].mxu0
        %2847 = vmatprep.mubr.f32.mxu0 %v1950
        %2848 = vmatmul.mubr.f32.gmra.mrb[0].mxu0 %v1949
        %v2849 = vpop.f32.mrb[0].mxu0
        %v2850 = vadd.f32 %v2625, %v2849
        %v2851 = vpop.f32.mrb[0].mxu0
        %2852 = vmatprep.mubr.f32.mxu0 %v1959
        %2853 = vmatmul.mubr.f32.gmra.mrb[0].mxu0 %v1958
        %v2854 = vpop.f32.mrb[0].mxu0
        %v2855 = vadd.f32 %v2630, %v2854
        %v2856 = vpop.f32.mrb[0].mxu0
        %2857 = vmatprep.mubr.f32.mxu0 %v1968
        %2858 = vmatmul.mubr.f32.gmra.mrb[0].mxu0 %v1967
        %v2859 = vpop.f32.mrb[0].mxu0
        %v2860 = vadd.f32 %v2635, %v2859
        %v2861 = vpop.f32.mrb[0].mxu0
        %2862 = vmatprep.mubr.f32.mxu0 %v1977
        %2863 = vmatmul.mubr.f32.gmra.mrb[0].mxu0 %v1976
        %v2864 = vpop.f32.mrb[0].mxu0
        %v2865 = vadd.f32 %v2640, %v2864
        %v2866 = vpop.f32.mrb[0].mxu0
        %2867 = vmatprep.mubr.f32.mxu0 %v1986
        %2868 = vmatmul.mubr.f32.gmra.mrb[0].mxu0 %v1985
        %v2869 = vpop.f32.mrb[0].mxu0
        %v2870 = vadd.f32 %v2645, %v2869
        %v2871 = vpop.f32.mrb[0].mxu0
        %2872 = vmatprep.mubr.f32.mxu0 %v1995
        %2873 = vmatmul.mubr.f32.gmra.mrb[0].mxu0 %v1994
        %v2874 = vpop.f32.mrb[0].mxu0
        %v2875 = vadd.f32 %v2650, %v2874
        %v2876 = vpop.f32.mrb[0].mxu0
        %2877 = vmatprep.mubr.f32.mxu0 %v2004
        %2878 = vmatmul.mubr.f32.gmra.mrb[0].mxu0 %v2003
        %v2879 = vpop.f32.mrb[0].mxu0
        %v2880 = vadd.f32 %v2655, %v2879
        %v2881 = vpop.f32.mrb[0].mxu0
        %2882 = vmatprep.mubr.f32.mxu0 %v2013
        %2883 = vmatmul.mubr.f32.gmra.mrb[0].mxu0 %v2012
        %v2884 = vpop.f32.mrb[0].mxu0
        %v2885 = vadd.f32 %v2660, %v2884
        %v2886 = vpop.f32.mrb[0].mxu0
        %2887 = vmatprep.mubr.f32.mxu0 %v2022
        %2888 = vmatmul.mubr.f32.gmra.mrb[0].mxu0 %v2021
        %v2889 = vpop.f32.mrb[0].mxu0
        %v2890 = vadd.f32 %v2665, %v2889
        %v2891 = vpop.f32.mrb[0].mxu0
        %2892 = vmatprep.mubr.f32.mxu0 %v2031
        %2893 = vmatmul.mubr.f32.gmra.mrb[0].mxu0 %v2030
        %v2894 = vpop.f32.mrb[0].mxu0
        %v2895 = vadd.f32 %v2670, %v2894
        %v2896 = vpop.f32.mrb[0].mxu0
        %2897 = vmatprep.mubr.f32.mxu0 %v2040
        %2898 = vmatmul.mubr.f32.gmra.mrb[0].mxu0 %v2039
        %v2899 = vpop.f32.mrb[0].mxu0
        %v2900 = vadd.f32 %v2675, %v2899
        %v2901 = vpop.f32.mrb[0].mxu0
        %2902 = vmatprep.mubr.f32.mxu0 %v2049
        %2903 = vmatmul.mubr.f32.gmra.mrb[0].mxu0 %v2048
        %v2904 = vpop.f32.mrb[0].mxu0
        %v2905 = vadd.f32 %v2680, %v2904
        %v2906 = vpop.f32.mrb[0].mxu0
        %2907 = vmatprep.mubr.f32.mxu0 %v2058
        %2908 = vmatmul.mubr.f32.gmra.mrb[0].mxu0 %v2057
        %v2909 = vpop.f32.mrb[0].mxu0
        %v2910 = vadd.f32 %v2685, %v2909
        %v2911 = vpop.f32.mrb[0].mxu0
        %2912 = vmatprep.mubr.f32.mxu0 %v2067
        %2913 = vmatmul.mubr.f32.gmra.mrb[0].mxu0 %v2066
        %v2914 = vpop.f32.mrb[0].mxu0
        %v2915 = vadd.f32 %v2690, %v2914
        %v2916 = vpop.f32.mrb[0].mxu0
        %2917 = vmatprep.mubr.f32.mxu0 %v2076
        %2918 = vmatmul.mubr.f32.gmra.mrb[0].mxu0 %v2075
        %v2919 = vpop.f32.mrb[0].mxu0
        %v2920 = vadd.f32 %v2695, %v2919
        %v2921 = vpop.f32.mrb[0].mxu0
        %2922 = vmatprep.mubr.f32.mxu0 %v2085
        %2923 = vmatmul.mubr.f32.gmra.mrb[0].mxu0 %v2084
        %v2924 = vpop.f32.mrb[0].mxu0
        %v2925 = vadd.f32 %v2700, %v2924
        %v2926 = vpop.f32.mrb[0].mxu0
        %2927 = vmatprep.mubr.f32.mxu0 %v2094
        %2928 = vmatmul.mubr.f32.gmra.mrb[0].mxu0 %v2093
        %v2929 = vpop.f32.mrb[0].mxu0
        %v2930 = vadd.f32 %v2705, %v2929
        %v2931 = vpop.f32.mrb[0].mxu0
        %2932 = vmatprep.mubr.f32.mxu0 %v2103
        %2933 = vmatmul.mubr.f32.gmra.mrb[0].mxu0 %v2102
        %v2934 = vpop.f32.mrb[0].mxu0
        %v2935 = vadd.f32 %v2710, %v2934
        %v2936 = vpop.f32.mrb[0].mxu0
        %2937 = vmatprep.mubr.f32.mxu0 %v2112
        %2938 = vmatmul.mubr.f32.gmra.mrb[0].mxu0 %v2111
        %v2939 = vpop.f32.mrb[0].mxu0
        %v2940 = vadd.f32 %v2715, %v2939
        %v2941 = vpop.f32.mrb[0].mxu0
        %2942 = vmatprep.mubr.f32.mxu0 %v2121
        %2943 = vmatmul.mubr.f32.gmra.mrb[0].mxu0 %v2120
        %v2944 = vpop.f32.mrb[0].mxu0
        %v2945 = vadd.f32 %v2720, %v2944
        %v2946 = vpop.f32.mrb[0].mxu0
        %2947 = vmatprep.mubr.f32.mxu0 %v2130
        %2948 = vmatmul.mubr.f32.gmra.mrb[0].mxu0 %v2129
        %v2949 = vpop.f32.mrb[0].mxu0
        %v2950 = vadd.f32 %v2725, %v2949
        %v2951 = vpop.f32.mrb[0].mxu0
        %2952 = vdwg.mxu0
        %2953 = vmatprep.subr.mxu0 0.0
        %2954 = vmatpush1.msra.mxu0 %v2230
        %2955 = vmatprep.subr.mxu0 0.0
        %2956 = vmatpush1.msra.mxu0 %v2231
        %2957 = vmatprep.subr.mxu0 0.0
        %2958 = vmatpush1.msra.mxu0 %v2232
        %2959 = vmatprep.subr.mxu0 0.0
        %2960 = vmatpush1.msra.mxu0 %v2233
        %2961 = vmatprep.subr.mxu0 0.0
        %2962 = vmatpush1.msra.mxu0 %v2234
        %2963 = vmatprep.subr.mxu0 0.0
        %2964 = vmatpush1.msra.mxu0 %v2235
        %2965 = vmatprep.subr.mxu0 0.0
        %2966 = vmatpush1.msra.mxu0 %v2236
        %2967 = vmatprep.subr.mxu0 0.0
        %2968 = vmatpush1.msra.mxu0 %v2237
        %2969 = vmatprep.subr.mxu0 0.0
        %2970 = vmatpush1.msra.mxu0 %v2238
        %2971 = vmatprep.subr.mxu0 0.0
        %2972 = vmatpush1.msra.mxu0 %v2239
        %2973 = vmatprep.subr.mxu0 0.0
        %2974 = vmatpush1.msra.mxu0 %v2240
        %2975 = vmatprep.subr.mxu0 0.0
        %2976 = vmatpush1.msra.mxu0 %v2241
        %2977 = vmatprep.subr.mxu0 0.0
        %2978 = vmatpush1.msra.mxu0 %v2242
        %2979 = vmatprep.subr.mxu0 0.0
        %2980 = vmatpush1.msra.mxu0 %v2243
        %2981 = vmatprep.subr.mxu0 0.0
        %2982 = vmatpush1.msra.mxu0 %v2244
        %2983 = vmatprep.subr.mxu0 0.0
        %2984 = vmatpush1.msra.mxu0 %v2245
        %2985 = vmatprep.subr.mxu0 0.0
        %2986 = vmatpush1.msra.mxu0 %v2246
        %2987 = vmatprep.subr.mxu0 0.0
        %2988 = vmatpush1.msra.mxu0 %v2247
        %2989 = vmatprep.subr.mxu0 0.0
        %2990 = vmatpush1.msra.mxu0 %v2248
        %2991 = vmatprep.subr.mxu0 0.0
        %2992 = vmatpush1.msra.mxu0 %v2249
        %2993 = vmatprep.subr.mxu0 0.0
        %2994 = vmatpush1.msra.mxu0 %v2250
        %2995 = vmatprep.subr.mxu0 0.0
        %2996 = vmatpush1.msra.mxu0 %v2251
        %2997 = vmatprep.subr.mxu0 0.0
        %2998 = vmatpush1.msra.mxu0 %v2252
        %2999 = vmatprep.subr.mxu0 0.0
        %3000 = vmatpush1.msra.mxu0 %v2253
        %3001 = vmatprep.subr.mxu0 0.0
        %3002 = vmatpush1.msra.mxu0 %v2254
        %3003 = vmatprep.subr.mxu0 0.0
        %3004 = vmatpush1.msra.mxu0 %v2255
        %3005 = vmatprep.subr.mxu0 0.0
        %3006 = vmatpush1.msra.mxu0 %v2256
        %3007 = vmatprep.subr.mxu0 0.0
        %3008 = vmatpush1.msra.mxu0 %v2257
        %3009 = vmatprep.subr.mxu0 0.0
        %3010 = vmatpush1.msra.mxu0 %v2258
        %3011 = vmatprep.subr.mxu0 0.0
        %3012 = vmatpush1.msra.mxu0 %v2259
        %3013 = vmatprep.subr.mxu0 0.0
        %3014 = vmatpush1.msra.mxu0 %v2260
        %3015 = vmatprep.subr.mxu0 0.0
        %3016 = vmatpush1.msra.mxu0 %v2261
        %3017 = vmatprep.mubr.f32.mxu0 %v1853
        %3018 = vmatmul.mubr.f32.gmra.mrb[0].mxu0 %v1852
        %v3019 = vpop.f32.mrb[0].mxu0
        %v3020 = vadd.f32 %v2795, %v3019
        %v3021 = vpop.f32.mrb[0].mxu0
        %3022 = vmatprep.mubr.f32.mxu0 %v1862
        %3023 = vmatmul.mubr.f32.gmra.mrb[0].mxu0 %v1861
        %v3024 = vpop.f32.mrb[0].mxu0
        %v3025 = vadd.f32 %v2800, %v3024
        %v3026 = vpop.f32.mrb[0].mxu0
        %3027 = vmatprep.mubr.f32.mxu0 %v1871
        %3028 = vmatmul.mubr.f32.gmra.mrb[0].mxu0 %v1870
        %v3029 = vpop.f32.mrb[0].mxu0
        %v3030 = vadd.f32 %v2805, %v3029
        %v3031 = vpop.f32.mrb[0].mxu0
        %3032 = vmatprep.mubr.f32.mxu0 %v1880
        %3033 = vmatmul.mubr.f32.gmra.mrb[0].mxu0 %v1879
        %v3034 = vpop.f32.mrb[0].mxu0
        %v3035 = vadd.f32 %v2810, %v3034
        %v3036 = vpop.f32.mrb[0].mxu0
        %3037 = vmatprep.mubr.f32.mxu0 %v1889
        %3038 = vmatmul.mubr.f32.gmra.mrb[0].mxu0 %v1888
        %v3039 = vpop.f32.mrb[0].mxu0
        %v3040 = vadd.f32 %v2815, %v3039
        %v3041 = vpop.f32.mrb[0].mxu0
        %3042 = vmatprep.mubr.f32.mxu0 %v1898
        %3043 = vmatmul.mubr.f32.gmra.mrb[0].mxu0 %v1897
        %v3044 = vpop.f32.mrb[0].mxu0
        %v3045 = vadd.f32 %v2820, %v3044
        %v3046 = vpop.f32.mrb[0].mxu0
        %3047 = vmatprep.mubr.f32.mxu0 %v1907
        %3048 = vmatmul.mubr.f32.gmra.mrb[0].mxu0 %v1906
        %v3049 = vpop.f32.mrb[0].mxu0
        %v3050 = vadd.f32 %v2825, %v3049
        %v3051 = vpop.f32.mrb[0].mxu0
        %3052 = vmatprep.mubr.f32.mxu0 %v1916
        %3053 = vmatmul.mubr.f32.gmra.mrb[0].mxu0 %v1915
        %v3054 = vpop.f32.mrb[0].mxu0
        %v3055 = vadd.f32 %v2830, %v3054
        %v3056 = vpop.f32.mrb[0].mxu0
        %3057 = vmatprep.mubr.f32.mxu0 %v1925
        %3058 = vmatmul.mubr.f32.gmra.mrb[0].mxu0 %v1924
        %v3059 = vpop.f32.mrb[0].mxu0
        %v3060 = vadd.f32 %v2835, %v3059
        %v3061 = vpop.f32.mrb[0].mxu0
        %3062 = vmatprep.mubr.f32.mxu0 %v1934
        %3063 = vmatmul.mubr.f32.gmra.mrb[0].mxu0 %v1933
        %v3064 = vpop.f32.mrb[0].mxu0
        %v3065 = vadd.f32 %v2840, %v3064
        %v3066 = vpop.f32.mrb[0].mxu0
        %3067 = vmatprep.mubr.f32.mxu0 %v1943
        %3068 = vmatmul.mubr.f32.gmra.mrb[0].mxu0 %v1942
        %v3069 = vpop.f32.mrb[0].mxu0
        %v3070 = vadd.f32 %v2845, %v3069
        %v3071 = vpop.f32.mrb[0].mxu0
        %3072 = vmatprep.mubr.f32.mxu0 %v1952
        %3073 = vmatmul.mubr.f32.gmra.mrb[0].mxu0 %v1951
        %v3074 = vpop.f32.mrb[0].mxu0
        %v3075 = vadd.f32 %v2850, %v3074
        %v3076 = vpop.f32.mrb[0].mxu0
        %3077 = vmatprep.mubr.f32.mxu0 %v1961
        %3078 = vmatmul.mubr.f32.gmra.mrb[0].mxu0 %v1960
        %v3079 = vpop.f32.mrb[0].mxu0
        %v3080 = vadd.f32 %v2855, %v3079
        %v3081 = vpop.f32.mrb[0].mxu0
        %3082 = vmatprep.mubr.f32.mxu0 %v1970
        %3083 = vmatmul.mubr.f32.gmra.mrb[0].mxu0 %v1969
        %v3084 = vpop.f32.mrb[0].mxu0
        %v3085 = vadd.f32 %v2860, %v3084
        %v3086 = vpop.f32.mrb[0].mxu0
        %3087 = vmatprep.mubr.f32.mxu0 %v1979
        %3088 = vmatmul.mubr.f32.gmra.mrb[0].mxu0 %v1978
        %v3089 = vpop.f32.mrb[0].mxu0
        %v3090 = vadd.f32 %v2865, %v3089
        %v3091 = vpop.f32.mrb[0].mxu0
        %3092 = vmatprep.mubr.f32.mxu0 %v1988
        %3093 = vmatmul.mubr.f32.gmra.mrb[0].mxu0 %v1987
        %v3094 = vpop.f32.mrb[0].mxu0
        %v3095 = vadd.f32 %v2870, %v3094
        %v3096 = vpop.f32.mrb[0].mxu0
        %3097 = vmatprep.mubr.f32.mxu0 %v1997
        %3098 = vmatmul.mubr.f32.gmra.mrb[0].mxu0 %v1996
        %v3099 = vpop.f32.mrb[0].mxu0
        %v3100 = vadd.f32 %v2875, %v3099
        %v3101 = vpop.f32.mrb[0].mxu0
        %3102 = vmatprep.mubr.f32.mxu0 %v2006
        %3103 = vmatmul.mubr.f32.gmra.mrb[0].mxu0 %v2005
        %v3104 = vpop.f32.mrb[0].mxu0
        %v3105 = vadd.f32 %v2880, %v3104
        %v3106 = vpop.f32.mrb[0].mxu0
        %3107 = vmatprep.mubr.f32.mxu0 %v2015
        %3108 = vmatmul.mubr.f32.gmra.mrb[0].mxu0 %v2014
        %v3109 = vpop.f32.mrb[0].mxu0
        %v3110 = vadd.f32 %v2885, %v3109
        %v3111 = vpop.f32.mrb[0].mxu0
        %3112 = vmatprep.mubr.f32.mxu0 %v2024
        %3113 = vmatmul.mubr.f32.gmra.mrb[0].mxu0 %v2023
        %v3114 = vpop.f32.mrb[0].mxu0
        %v3115 = vadd.f32 %v2890, %v3114
        %v3116 = vpop.f32.mrb[0].mxu0
        %3117 = vmatprep.mubr.f32.mxu0 %v2033
        %3118 = vmatmul.mubr.f32.gmra.mrb[0].mxu0 %v2032
        %v3119 = vpop.f32.mrb[0].mxu0
        %v3120 = vadd.f32 %v2895, %v3119
        %v3121 = vpop.f32.mrb[0].mxu0
        %3122 = vmatprep.mubr.f32.mxu0 %v2042
        %3123 = vmatmul.mubr.f32.gmra.mrb[0].mxu0 %v2041
        %v3124 = vpop.f32.mrb[0].mxu0
        %v3125 = vadd.f32 %v2900, %v3124
        %v3126 = vpop.f32.mrb[0].mxu0
        %3127 = vmatprep.mubr.f32.mxu0 %v2051
        %3128 = vmatmul.mubr.f32.gmra.mrb[0].mxu0 %v2050
        %v3129 = vpop.f32.mrb[0].mxu0
        %v3130 = vadd.f32 %v2905, %v3129
        %v3131 = vpop.f32.mrb[0].mxu0
        %3132 = vmatprep.mubr.f32.mxu0 %v2060
        %3133 = vmatmul.mubr.f32.gmra.mrb[0].mxu0 %v2059
        %v3134 = vpop.f32.mrb[0].mxu0
        %v3135 = vadd.f32 %v2910, %v3134
        %v3136 = vpop.f32.mrb[0].mxu0
        %3137 = vmatprep.mubr.f32.mxu0 %v2069
        %3138 = vmatmul.mubr.f32.gmra.mrb[0].mxu0 %v2068
        %v3139 = vpop.f32.mrb[0].mxu0
        %v3140 = vadd.f32 %v2915, %v3139
        %v3141 = vpop.f32.mrb[0].mxu0
        %3142 = vmatprep.mubr.f32.mxu0 %v2078
        %3143 = vmatmul.mubr.f32.gmra.mrb[0].mxu0 %v2077
        %v3144 = vpop.f32.mrb[0].mxu0
        %v3145 = vadd.f32 %v2920, %v3144
        %v3146 = vpop.f32.mrb[0].mxu0
        %3147 = vmatprep.mubr.f32.mxu0 %v2087
        %3148 = vmatmul.mubr.f32.gmra.mrb[0].mxu0 %v2086
        %v3149 = vpop.f32.mrb[0].mxu0
        %v3150 = vadd.f32 %v2925, %v3149
        %v3151 = vpop.f32.mrb[0].mxu0
        %3152 = vmatprep.mubr.f32.mxu0 %v2096
        %3153 = vmatmul.mubr.f32.gmra.mrb[0].mxu0 %v2095
        %v3154 = vpop.f32.mrb[0].mxu0
        %v3155 = vadd.f32 %v2930, %v3154
        %v3156 = vpop.f32.mrb[0].mxu0
        %3157 = vmatprep.mubr.f32.mxu0 %v2105
        %3158 = vmatmul.mubr.f32.gmra.mrb[0].mxu0 %v2104
        %v3159 = vpop.f32.mrb[0].mxu0
        %v3160 = vadd.f32 %v2935, %v3159
        %v3161 = vpop.f32.mrb[0].mxu0
        %3162 = vmatprep.mubr.f32.mxu0 %v2114
        %3163 = vmatmul.mubr.f32.gmra.mrb[0].mxu0 %v2113
        %v3164 = vpop.f32.mrb[0].mxu0
        %v3165 = vadd.f32 %v2940, %v3164
        %v3166 = vpop.f32.mrb[0].mxu0
        %3167 = vmatprep.mubr.f32.mxu0 %v2123
        %3168 = vmatmul.mubr.f32.gmra.mrb[0].mxu0 %v2122
        %v3169 = vpop.f32.mrb[0].mxu0
        %v3170 = vadd.f32 %v2945, %v3169
        %v3171 = vpop.f32.mrb[0].mxu0
        %3172 = vmatprep.mubr.f32.mxu0 %v2132
        %3173 = vmatmul.mubr.f32.gmra.mrb[0].mxu0 %v2131
        %v3174 = vpop.f32.mrb[0].mxu0
        %v3175 = vadd.f32 %v2950, %v3174
        %v3176 = vpop.f32.mrb[0].mxu0
        %3177 = vdwg.mxu0
        %3178 = vmatprep.subr.mxu0 0.0
        %3179 = vmatpush1.msra.mxu0 %v2262
        %3180 = vmatprep.subr.mxu0 0.0
        %3181 = vmatpush1.msra.mxu0 %v2263
        %3182 = vmatprep.subr.mxu0 0.0
        %3183 = vmatpush1.msra.mxu0 %v2264
        %3184 = vmatprep.subr.mxu0 0.0
        %3185 = vmatpush1.msra.mxu0 %v2265
        %3186 = vmatprep.subr.mxu0 0.0
        %3187 = vmatpush1.msra.mxu0 %v2266
        %3188 = vmatprep.subr.mxu0 0.0
        %3189 = vmatpush1.msra.mxu0 %v2267
        %3190 = vmatprep.subr.mxu0 0.0
        %3191 = vmatpush1.msra.mxu0 %v2268
        %3192 = vmatprep.subr.mxu0 0.0
        %3193 = vmatpush1.msra.mxu0 %v2269
        %3194 = vmatprep.subr.mxu0 0.0
        %3195 = vmatpush1.msra.mxu0 %v2270
        %3196 = vmatprep.subr.mxu0 0.0
        %3197 = vmatpush1.msra.mxu0 %v2271
        %3198 = vmatprep.subr.mxu0 0.0
        %3199 = vmatpush1.msra.mxu0 %v2272
        %3200 = vmatprep.subr.mxu0 0.0
        %3201 = vmatpush1.msra.mxu0 %v2273
        %3202 = vmatprep.subr.mxu0 0.0
        %3203 = vmatpush1.msra.mxu0 %v2274
        %3204 = vmatprep.subr.mxu0 0.0
        %3205 = vmatpush1.msra.mxu0 %v2275
        %3206 = vmatprep.subr.mxu0 0.0
        %3207 = vmatpush1.msra.mxu0 %v2276
        %3208 = vmatprep.subr.mxu0 0.0
        %3209 = vmatpush1.msra.mxu0 %v2277
        %3210 = vmatprep.subr.mxu0 0.0
        %3211 = vmatpush1.msra.mxu0 0.0
        %3212 = vmatprep.subr.mxu0 0.0
        %3213 = vmatpush1.msra.mxu0 0.0
        %3214 = vmatprep.subr.mxu0 0.0
        %3215 = vmatpush1.msra.mxu0 0.0
        %3216 = vmatprep.subr.mxu0 0.0
        %3217 = vmatpush1.msra.mxu0 0.0
        %3218 = vmatprep.subr.mxu0 0.0
        %3219 = vmatpush1.msra.mxu0 0.0
        %3220 = vmatprep.subr.mxu0 0.0
        %3221 = vmatpush1.msra.mxu0 0.0
        %3222 = vmatprep.subr.mxu0 0.0
        %3223 = vmatpush1.msra.mxu0 0.0
        %3224 = vmatprep.subr.mxu0 0.0
        %3225 = vmatpush1.msra.mxu0 0.0
        %3226 = vmatprep.subr.mxu0 0.0
        %3227 = vmatpush1.msra.mxu0 0.0
        %3228 = vmatprep.subr.mxu0 0.0
        %3229 = vmatpush1.msra.mxu0 0.0
        %3230 = vmatprep.subr.mxu0 0.0
        %3231 = vmatpush1.msra.mxu0 0.0
        %3232 = vmatprep.subr.mxu0 0.0
        %3233 = vmatpush1.msra.mxu0 0.0
        %3234 = vmatprep.subr.mxu0 0.0
        %3235 = vmatpush1.msra.mxu0 0.0
        %3236 = vmatprep.subr.mxu0 0.0
        %3237 = vmatpush1.msra.mxu0 0.0
        %3238 = vmatprep.subr.mxu0 0.0
        %3239 = vmatpush1.msra.mxu0 0.0
        %3240 = vmatprep.subr.mxu0 0.0
        %3241 = vmatpush1.msra.mxu0 0.0
        %3242 = vmatprep.mubr.f32.mxu0 0.0
        %3243 = vmatmul.mubr.f32.gmra.mrb[0].mxu0 %v1854
        %v3244 = vpop.f32.mrb[0].mxu0
        %v3245 = vadd.f32 %v3020, %v3244
        %v3246 = vpop.f32.mrb[0].mxu0
        %3247 = vmatprep.mubr.f32.mxu0 0.0
        %3248 = vmatmul.mubr.f32.gmra.mrb[0].mxu0 %v1863
        %v3249 = vpop.f32.mrb[0].mxu0
        %v3250 = vadd.f32 %v3025, %v3249
        %v3251 = vpop.f32.mrb[0].mxu0
        %3252 = vmatprep.mubr.f32.mxu0 0.0
        %3253 = vmatmul.mubr.f32.gmra.mrb[0].mxu0 %v1872
        %v3254 = vpop.f32.mrb[0].mxu0
        %v3255 = vadd.f32 %v3030, %v3254
        %v3256 = vpop.f32.mrb[0].mxu0
        %3257 = vmatprep.mubr.f32.mxu0 0.0
        %3258 = vmatmul.mubr.f32.gmra.mrb[0].mxu0 %v1881
        %v3259 = vpop.f32.mrb[0].mxu0
        %v3260 = vadd.f32 %v3035, %v3259
        %v3261 = vpop.f32.mrb[0].mxu0
        %3262 = vmatprep.mubr.f32.mxu0 0.0
        %3263 = vmatmul.mubr.f32.gmra.mrb[0].mxu0 %v1890
        %v3264 = vpop.f32.mrb[0].mxu0
        %v3265 = vadd.f32 %v3040, %v3264
        %v3266 = vpop.f32.mrb[0].mxu0
        %3267 = vmatprep.mubr.f32.mxu0 0.0
        %3268 = vmatmul.mubr.f32.gmra.mrb[0].mxu0 %v1899
        %v3269 = vpop.f32.mrb[0].mxu0
        %v3270 = vadd.f32 %v3045, %v3269
        %v3271 = vpop.f32.mrb[0].mxu0
        %3272 = vmatprep.mubr.f32.mxu0 0.0
        %3273 = vmatmul.mubr.f32.gmra.mrb[0].mxu0 %v1908
        %v3274 = vpop.f32.mrb[0].mxu0
        %v3275 = vadd.f32 %v3050, %v3274
        %v3276 = vpop.f32.mrb[0].mxu0
        %3277 = vmatprep.mubr.f32.mxu0 0.0
        %3278 = vmatmul.mubr.f32.gmra.mrb[0].mxu0 %v1917
        %v3279 = vpop.f32.mrb[0].mxu0
        %v3280 = vadd.f32 %v3055, %v3279
        %v3281 = vpop.f32.mrb[0].mxu0
        %3282 = vmatprep.mubr.f32.mxu0 0.0
        %3283 = vmatmul.mubr.f32.gmra.mrb[0].mxu0 %v1926
        %v3284 = vpop.f32.mrb[0].mxu0
        %v3285 = vadd.f32 %v3060, %v3284
        %v3286 = vpop.f32.mrb[0].mxu0
        %3287 = vmatprep.mubr.f32.mxu0 0.0
        %3288 = vmatmul.mubr.f32.gmra.mrb[0].mxu0 %v1935
        %v3289 = vpop.f32.mrb[0].mxu0
        %v3290 = vadd.f32 %v3065, %v3289
        %v3291 = vpop.f32.mrb[0].mxu0
        %3292 = vmatprep.mubr.f32.mxu0 0.0
        %3293 = vmatmul.mubr.f32.gmra.mrb[0].mxu0 %v1944
        %v3294 = vpop.f32.mrb[0].mxu0
        %v3295 = vadd.f32 %v3070, %v3294
        %v3296 = vpop.f32.mrb[0].mxu0
        %3297 = vmatprep.mubr.f32.mxu0 0.0
        %3298 = vmatmul.mubr.f32.gmra.mrb[0].mxu0 %v1953
        %v3299 = vpop.f32.mrb[0].mxu0
        %v3300 = vadd.f32 %v3075, %v3299
        %v3301 = vpop.f32.mrb[0].mxu0
        %3302 = vmatprep.mubr.f32.mxu0 0.0
        %3303 = vmatmul.mubr.f32.gmra.mrb[0].mxu0 %v1962
        %v3304 = vpop.f32.mrb[0].mxu0
        %v3305 = vadd.f32 %v3080, %v3304
        %v3306 = vpop.f32.mrb[0].mxu0
        %3307 = vmatprep.mubr.f32.mxu0 0.0
        %3308 = vmatmul.mubr.f32.gmra.mrb[0].mxu0 %v1971
        %v3309 = vpop.f32.mrb[0].mxu0
        %v3310 = vadd.f32 %v3085, %v3309
        %v3311 = vpop.f32.mrb[0].mxu0
        %3312 = vmatprep.mubr.f32.mxu0 0.0
        %3313 = vmatmul.mubr.f32.gmra.mrb[0].mxu0 %v1980
        %v3314 = vpop.f32.mrb[0].mxu0
        %v3315 = vadd.f32 %v3090, %v3314
        %v3316 = vpop.f32.mrb[0].mxu0
        %3317 = vmatprep.mubr.f32.mxu0 0.0
        %3318 = vmatmul.mubr.f32.gmra.mrb[0].mxu0 %v1989
        %v3319 = vpop.f32.mrb[0].mxu0
        %v3320 = vadd.f32 %v3095, %v3319
        %v3321 = vpop.f32.mrb[0].mxu0
        %3322 = vmatprep.mubr.f32.mxu0 0.0
        %3323 = vmatmul.mubr.f32.gmra.mrb[0].mxu0 %v1998
        %v3324 = vpop.f32.mrb[0].mxu0
        %v3325 = vadd.f32 %v3100, %v3324
        %v3326 = vpop.f32.mrb[0].mxu0
        %3327 = vmatprep.mubr.f32.mxu0 0.0
        %3328 = vmatmul.mubr.f32.gmra.mrb[0].mxu0 %v2007
        %v3329 = vpop.f32.mrb[0].mxu0
        %v3330 = vadd.f32 %v3105, %v3329
        %v3331 = vpop.f32.mrb[0].mxu0
        %3332 = vmatprep.mubr.f32.mxu0 0.0
        %3333 = vmatmul.mubr.f32.gmra.mrb[0].mxu0 %v2016
        %v3334 = vpop.f32.mrb[0].mxu0
        %v3335 = vadd.f32 %v3110, %v3334
        %v3336 = vpop.f32.mrb[0].mxu0
        %3337 = vmatprep.mubr.f32.mxu0 0.0
        %3338 = vmatmul.mubr.f32.gmra.mrb[0].mxu0 %v2025
        %v3339 = vpop.f32.mrb[0].mxu0
        %v3340 = vadd.f32 %v3115, %v3339
        %v3341 = vpop.f32.mrb[0].mxu0
        %3342 = vmatprep.mubr.f32.mxu0 0.0
        %3343 = vmatmul.mubr.f32.gmra.mrb[0].mxu0 %v2034
        %v3344 = vpop.f32.mrb[0].mxu0
        %v3345 = vadd.f32 %v3120, %v3344
        %v3346 = vpop.f32.mrb[0].mxu0
        %3347 = vmatprep.mubr.f32.mxu0 0.0
        %3348 = vmatmul.mubr.f32.gmra.mrb[0].mxu0 %v2043
        %v3349 = vpop.f32.mrb[0].mxu0
        %v3350 = vadd.f32 %v3125, %v3349
        %v3351 = vpop.f32.mrb[0].mxu0
        %3352 = vmatprep.mubr.f32.mxu0 0.0
        %3353 = vmatmul.mubr.f32.gmra.mrb[0].mxu0 %v2052
        %v3354 = vpop.f32.mrb[0].mxu0
        %v3355 = vadd.f32 %v3130, %v3354
        %v3356 = vpop.f32.mrb[0].mxu0
        %3357 = vmatprep.mubr.f32.mxu0 0.0
        %3358 = vmatmul.mubr.f32.gmra.mrb[0].mxu0 %v2061
        %v3359 = vpop.f32.mrb[0].mxu0
        %v3360 = vadd.f32 %v3135, %v3359
        %v3361 = vpop.f32.mrb[0].mxu0
        %3362 = vmatprep.mubr.f32.mxu0 0.0
        %3363 = vmatmul.mubr.f32.gmra.mrb[0].mxu0 %v2070
        %v3364 = vpop.f32.mrb[0].mxu0
        %v3365 = vadd.f32 %v3140, %v3364
        %v3366 = vpop.f32.mrb[0].mxu0
        %3367 = vmatprep.mubr.f32.mxu0 0.0
        %3368 = vmatmul.mubr.f32.gmra.mrb[0].mxu0 %v2079
        %v3369 = vpop.f32.mrb[0].mxu0
        %v3370 = vadd.f32 %v3145, %v3369
        %v3371 = vpop.f32.mrb[0].mxu0
        %3372 = vmatprep.mubr.f32.mxu0 0.0
        %3373 = vmatmul.mubr.f32.gmra.mrb[0].mxu0 %v2088
        %v3374 = vpop.f32.mrb[0].mxu0
        %v3375 = vadd.f32 %v3150, %v3374
        %v3376 = vpop.f32.mrb[0].mxu0
        %3377 = vmatprep.mubr.f32.mxu0 0.0
        %3378 = vmatmul.mubr.f32.gmra.mrb[0].mxu0 %v2097
        %v3379 = vpop.f32.mrb[0].mxu0
        %v3380 = vadd.f32 %v3155, %v3379
        %v3381 = vpop.f32.mrb[0].mxu0
        %3382 = vmatprep.mubr.f32.mxu0 0.0
        %3383 = vmatmul.mubr.f32.gmra.mrb[0].mxu0 %v2106
        %v3384 = vpop.f32.mrb[0].mxu0
        %v3385 = vadd.f32 %v3160, %v3384
        %v3386 = vpop.f32.mrb[0].mxu0
        %3387 = vmatprep.mubr.f32.mxu0 0.0
        %3388 = vmatmul.mubr.f32.gmra.mrb[0].mxu0 %v2115
        %v3389 = vpop.f32.mrb[0].mxu0
        %v3390 = vadd.f32 %v3165, %v3389
        %v3391 = vpop.f32.mrb[0].mxu0
        %3392 = vmatprep.mubr.f32.mxu0 0.0
        %3393 = vmatmul.mubr.f32.gmra.mrb[0].mxu0 %v2124
        %v3394 = vpop.f32.mrb[0].mxu0
        %v3395 = vadd.f32 %v3170, %v3394
        %v3396 = vpop.f32.mrb[0].mxu0
        %3397 = vmatprep.mubr.f32.mxu0 0.0
        %3398 = vmatmul.mubr.f32.gmra.mrb[0].mxu0 %v2133
        %v3399 = vpop.f32.mrb[0].mxu0
        %v3400 = vadd.f32 %v3175, %v3399
        %v3401 = vpop.f32.mrb[0].mxu0
        %3402 = vdwg.mxu0
        %v3403 = vmax.f32 %v3245, 0.0
        %v3404 = vmax.f32 %v3250, 0.0
        %v3405 = vmax.f32 %v3255, 0.0
        %v3406 = vmax.f32 %v3260, 0.0
        %v3407 = vmax.f32 %v3265, 0.0
        %v3408 = vmax.f32 %v3270, 0.0
        %v3409 = vmax.f32 %v3275, 0.0
        %v3410 = vmax.f32 %v3280, 0.0
        %v3411 = vmax.f32 %v3285, 0.0
        %v3412 = vmax.f32 %v3290, 0.0
        %v3413 = vmax.f32 %v3295, 0.0
        %v3414 = vmax.f32 %v3300, 0.0
        %v3415 = vmax.f32 %v3305, 0.0
        %v3416 = vmax.f32 %v3310, 0.0
        %v3417 = vmax.f32 %v3315, 0.0
        %v3418 = vmax.f32 %v3320, 0.0
        %v3419 = vmax.f32 %v3325, 0.0
        %v3420 = vmax.f32 %v3330, 0.0
        %v3421 = vmax.f32 %v3335, 0.0
        %v3422 = vmax.f32 %v3340, 0.0
        %v3423 = vmax.f32 %v3345, 0.0
        %v3424 = vmax.f32 %v3350, 0.0
        %v3425 = vmax.f32 %v3355, 0.0
        %v3426 = vmax.f32 %v3360, 0.0
        %v3427 = vmax.f32 %v3365, 0.0
        %v3428 = vmax.f32 %v3370, 0.0
        %v3429 = vmax.f32 %v3375, 0.0
        %v3430 = vmax.f32 %v3380, 0.0
        %v3431 = vmax.f32 %v3385, 0.0
        %v3432 = vmax.f32 %v3390, 0.0
        %v3433 = vmax.f32 %v3395, 0.0
        %v3434 = vmax.f32 %v3400, 0.0
        %v3435 = vld [vmem:[%s5] sm:$0xff]
        %v3436 = vld [vmem:[%s5 + $0x8] sm:$0xff]
        %v3437 = vld [vmem:[%s5 + $0x10] sm:$0xff]
        %v3438 = vld [vmem:[%s5 + $0x18] sm:$0xff]
        %v3439 = vld [vmem:[%s5 + $0x20] sm:$0xff]
        %v3440 = vld [vmem:[%s5 + $0x28] sm:$0xff]
        %v3441 = vld [vmem:[%s5 + $0x30] sm:$0xff]
        %v3442 = vld [vmem:[%s5 + $0x38] sm:$0xff]
        %v3443 = vld [vmem:[%s5 + $0x40] sm:$0xff]
        %v3444 = vld [vmem:[%s5 + $0x48] sm:$0xff]
        %v3445 = vld [vmem:[%s5 + $0x50] sm:$0xff]
        %v3446 = vld [vmem:[%s5 + $0x58] sm:$0xff]
        %v3447 = vld [vmem:[%s5 + $0x60] sm:$0xff]
        %v3448 = vld [vmem:[%s5 + $0x68] sm:$0xff]
        %v3449 = vld [vmem:[%s5 + $0x70] sm:$0xff]
        %v3450 = vld [vmem:[%s5 + $0x78] sm:$0xff]
        %3451 = vmatprep.subr.mxu0 0.0
        %3452 = vmatpush1.msra.mxu0 %v3435
        %3453 = vmatprep.subr.mxu0 0.0
        %3454 = vmatpush1.msra.mxu0 %v3436
        %3455 = vmatprep.subr.mxu0 0.0
        %3456 = vmatpush1.msra.mxu0 %v3437
        %3457 = vmatprep.subr.mxu0 0.0
        %3458 = vmatpush1.msra.mxu0 %v3438
        %3459 = vmatprep.subr.mxu0 0.0
        %3460 = vmatpush1.msra.mxu0 %v3439
        %3461 = vmatprep.subr.mxu0 0.0
        %3462 = vmatpush1.msra.mxu0 %v3440
        %3463 = vmatprep.subr.mxu0 0.0
        %3464 = vmatpush1.msra.mxu0 %v3441
        %3465 = vmatprep.subr.mxu0 0.0
        %3466 = vmatpush1.msra.mxu0 %v3442
        %3467 = vmatprep.subr.mxu0 0.0
        %3468 = vmatpush1.msra.mxu0 %v3443
        %3469 = vmatprep.subr.mxu0 0.0
        %3470 = vmatpush1.msra.mxu0 %v3444
        %3471 = vmatprep.subr.mxu0 0.0
        %3472 = vmatpush1.msra.mxu0 %v3445
        %3473 = vmatprep.subr.mxu0 0.0
        %3474 = vmatpush1.msra.mxu0 %v3446
        %3475 = vmatprep.subr.mxu0 0.0
        %3476 = vmatpush1.msra.mxu0 %v3447
        %3477 = vmatprep.subr.mxu0 0.0
        %3478 = vmatpush1.msra.mxu0 %v3448
        %3479 = vmatprep.subr.mxu0 0.0
        %3480 = vmatpush1.msra.mxu0 %v3449
        %3481 = vmatprep.subr.mxu0 0.0
        %3482 = vmatpush1.msra.mxu0 %v3450
        %3483 = vmatprep.subr.mxu0 0.0
        %3484 = vmatpush1.msra.mxu0 0.0
        %3485 = vmatprep.subr.mxu0 0.0
        %3486 = vmatpush1.msra.mxu0 0.0
        %3487 = vmatprep.subr.mxu0 0.0
        %3488 = vmatpush1.msra.mxu0 0.0
        %3489 = vmatprep.subr.mxu0 0.0
        %3490 = vmatpush1.msra.mxu0 0.0
        %3491 = vmatprep.subr.mxu0 0.0
        %3492 = vmatpush1.msra.mxu0 0.0
        %3493 = vmatprep.subr.mxu0 0.0
        %3494 = vmatpush1.msra.mxu0 0.0
        %3495 = vmatprep.subr.mxu0 0.0
        %3496 = vmatpush1.msra.mxu0 0.0
        %3497 = vmatprep.subr.mxu0 0.0
        %3498 = vmatpush1.msra.mxu0 0.0
        %3499 = vmatprep.subr.mxu0 0.0
        %3500 = vmatpush1.msra.mxu0 0.0
        %3501 = vmatprep.subr.mxu0 0.0
        %3502 = vmatpush1.msra.mxu0 0.0
        %3503 = vmatprep.subr.mxu0 0.0
        %3504 = vmatpush1.msra.mxu0 0.0
        %3505 = vmatprep.subr.mxu0 0.0
        %3506 = vmatpush1.msra.mxu0 0.0
        %3507 = vmatprep.subr.mxu0 0.0
        %3508 = vmatpush1.msra.mxu0 0.0
        %3509 = vmatprep.subr.mxu0 0.0
        %3510 = vmatpush1.msra.mxu0 0.0
        %3511 = vmatprep.subr.mxu0 0.0
        %3512 = vmatpush1.msra.mxu0 0.0
        %3513 = vmatprep.subr.mxu0 0.0
        %3514 = vmatpush1.msra.mxu0 0.0
        %3515 = vmatprep.mubr.f32.mxu0 0.0
        %3516 = vmatmul.mubr.f32.gmra.mrb[0].mxu0 %v3403
        %v3517 = vpop.f32.mrb[0].mxu0
        %v3518 = vadd.f32 %v408, %v3517
        %v3519 = vpop.f32.mrb[0].mxu0
        %3520 = vmatprep.mubr.f32.mxu0 0.0
        %3521 = vmatmul.mubr.f32.gmra.mrb[0].mxu0 %v3404
        %v3522 = vpop.f32.mrb[0].mxu0
        %v3523 = vadd.f32 %v409, %v3522
        %v3524 = vpop.f32.mrb[0].mxu0
        %3525 = vmatprep.mubr.f32.mxu0 0.0
        %3526 = vmatmul.mubr.f32.gmra.mrb[0].mxu0 %v3405
        %v3527 = vpop.f32.mrb[0].mxu0
        %v3528 = vadd.f32 %v410, %v3527
        %v3529 = vpop.f32.mrb[0].mxu0
        %3530 = vmatprep.mubr.f32.mxu0 0.0
        %3531 = vmatmul.mubr.f32.gmra.mrb[0].mxu0 %v3406
        %v3532 = vpop.f32.mrb[0].mxu0
        %v3533 = vadd.f32 %v411, %v3532
        %v3534 = vpop.f32.mrb[0].mxu0
        %3535 = vmatprep.mubr.f32.mxu0 0.0
        %3536 = vmatmul.mubr.f32.gmra.mrb[0].mxu0 %v3407
        %v3537 = vpop.f32.mrb[0].mxu0
        %v3538 = vadd.f32 %v412, %v3537
        %v3539 = vpop.f32.mrb[0].mxu0
        %3540 = vmatprep.mubr.f32.mxu0 0.0
        %3541 = vmatmul.mubr.f32.gmra.mrb[0].mxu0 %v3408
        %v3542 = vpop.f32.mrb[0].mxu0
        %v3543 = vadd.f32 %v413, %v3542
        %v3544 = vpop.f32.mrb[0].mxu0
        %3545 = vmatprep.mubr.f32.mxu0 0.0
        %3546 = vmatmul.mubr.f32.gmra.mrb[0].mxu0 %v3409
        %v3547 = vpop.f32.mrb[0].mxu0
        %v3548 = vadd.f32 %v414, %v3547
        %v3549 = vpop.f32.mrb[0].mxu0
        %3550 = vmatprep.mubr.f32.mxu0 0.0
        %3551 = vmatmul.mubr.f32.gmra.mrb[0].mxu0 %v3410
        %v3552 = vpop.f32.mrb[0].mxu0
        %v3553 = vadd.f32 %v415, %v3552
        %v3554 = vpop.f32.mrb[0].mxu0
        %3555 = vmatprep.mubr.f32.mxu0 0.0
        %3556 = vmatmul.mubr.f32.gmra.mrb[0].mxu0 %v3411
        %v3557 = vpop.f32.mrb[0].mxu0
        %v3558 = vadd.f32 %v416, %v3557
        %v3559 = vpop.f32.mrb[0].mxu0
        %3560 = vmatprep.mubr.f32.mxu0 0.0
        %3561 = vmatmul.mubr.f32.gmra.mrb[0].mxu0 %v3412
        %v3562 = vpop.f32.mrb[0].mxu0
        %v3563 = vadd.f32 %v417, %v3562
        %v3564 = vpop.f32.mrb[0].mxu0
        %3565 = vmatprep.mubr.f32.mxu0 0.0
        %3566 = vmatmul.mubr.f32.gmra.mrb[0].mxu0 %v3413
        %v3567 = vpop.f32.mrb[0].mxu0
        %v3568 = vadd.f32 %v418, %v3567
        %v3569 = vpop.f32.mrb[0].mxu0
        %3570 = vmatprep.mubr.f32.mxu0 0.0
        %3571 = vmatmul.mubr.f32.gmra.mrb[0].mxu0 %v3414
        %v3572 = vpop.f32.mrb[0].mxu0
        %v3573 = vadd.f32 %v419, %v3572
        %v3574 = vpop.f32.mrb[0].mxu0
        %3575 = vmatprep.mubr.f32.mxu0 0.0
        %3576 = vmatmul.mubr.f32.gmra.mrb[0].mxu0 %v3415
        %v3577 = vpop.f32.mrb[0].mxu0
        %v3578 = vadd.f32 %v420, %v3577
        %v3579 = vpop.f32.mrb[0].mxu0
        %3580 = vmatprep.mubr.f32.mxu0 0.0
        %3581 = vmatmul.mubr.f32.gmra.mrb[0].mxu0 %v3416
        %v3582 = vpop.f32.mrb[0].mxu0
        %v3583 = vadd.f32 %v421, %v3582
        %v3584 = vpop.f32.mrb[0].mxu0
        %3585 = vmatprep.mubr.f32.mxu0 0.0
        %3586 = vmatmul.mubr.f32.gmra.mrb[0].mxu0 %v3417
        %v3587 = vpop.f32.mrb[0].mxu0
        %v3588 = vadd.f32 %v422, %v3587
        %v3589 = vpop.f32.mrb[0].mxu0
        %3590 = vmatprep.mubr.f32.mxu0 0.0
        %3591 = vmatmul.mubr.f32.gmra.mrb[0].mxu0 %v3418
        %v3592 = vpop.f32.mrb[0].mxu0
        %v3593 = vadd.f32 %v423, %v3592
        %v3594 = vpop.f32.mrb[0].mxu0
        %3595 = vmatprep.mubr.f32.mxu0 0.0
        %3596 = vmatmul.mubr.f32.gmra.mrb[0].mxu0 %v3419
        %v3597 = vpop.f32.mrb[0].mxu0
        %v3598 = vadd.f32 %v424, %v3597
        %v3599 = vpop.f32.mrb[0].mxu0
        %3600 = vmatprep.mubr.f32.mxu0 0.0
        %3601 = vmatmul.mubr.f32.gmra.mrb[0].mxu0 %v3420
        %v3602 = vpop.f32.mrb[0].mxu0
        %v3603 = vadd.f32 %v425, %v3602
        %v3604 = vpop.f32.mrb[0].mxu0
        %3605 = vmatprep.mubr.f32.mxu0 0.0
        %3606 = vmatmul.mubr.f32.gmra.mrb[0].mxu0 %v3421
        %v3607 = vpop.f32.mrb[0].mxu0
        %v3608 = vadd.f32 %v426, %v3607
        %v3609 = vpop.f32.mrb[0].mxu0
        %3610 = vmatprep.mubr.f32.mxu0 0.0
        %3611 = vmatmul.mubr.f32.gmra.mrb[0].mxu0 %v3422
        %v3612 = vpop.f32.mrb[0].mxu0
        %v3613 = vadd.f32 %v427, %v3612
        %v3614 = vpop.f32.mrb[0].mxu0
        %3615 = vmatprep.mubr.f32.mxu0 0.0
        %3616 = vmatmul.mubr.f32.gmra.mrb[0].mxu0 %v3423
        %v3617 = vpop.f32.mrb[0].mxu0
        %v3618 = vadd.f32 %v428, %v3617
        %v3619 = vpop.f32.mrb[0].mxu0
        %3620 = vmatprep.mubr.f32.mxu0 0.0
        %3621 = vmatmul.mubr.f32.gmra.mrb[0].mxu0 %v3424
        %v3622 = vpop.f32.mrb[0].mxu0
        %v3623 = vadd.f32 %v429, %v3622
        %v3624 = vpop.f32.mrb[0].mxu0
        %3625 = vmatprep.mubr.f32.mxu0 0.0
        %3626 = vmatmul.mubr.f32.gmra.mrb[0].mxu0 %v3425
        %v3627 = vpop.f32.mrb[0].mxu0
        %v3628 = vadd.f32 %v430, %v3627
        %v3629 = vpop.f32.mrb[0].mxu0
        %3630 = vmatprep.mubr.f32.mxu0 0.0
        %3631 = vmatmul.mubr.f32.gmra.mrb[0].mxu0 %v3426
        %v3632 = vpop.f32.mrb[0].mxu0
        %v3633 = vadd.f32 %v431, %v3632
        %v3634 = vpop.f32.mrb[0].mxu0
        %3635 = vmatprep.mubr.f32.mxu0 0.0
        %3636 = vmatmul.mubr.f32.gmra.mrb[0].mxu0 %v3427
        %v3637 = vpop.f32.mrb[0].mxu0
        %v3638 = vadd.f32 %v432, %v3637
        %v3639 = vpop.f32.mrb[0].mxu0
        %3640 = vmatprep.mubr.f32.mxu0 0.0
        %3641 = vmatmul.mubr.f32.gmra.mrb[0].mxu0 %v3428
        %v3642 = vpop.f32.mrb[0].mxu0
        %v3643 = vadd.f32 %v433, %v3642
        %v3644 = vpop.f32.mrb[0].mxu0
        %3645 = vmatprep.mubr.f32.mxu0 0.0
        %3646 = vmatmul.mubr.f32.gmra.mrb[0].mxu0 %v3429
        %v3647 = vpop.f32.mrb[0].mxu0
        %v3648 = vadd.f32 %v434, %v3647
        %v3649 = vpop.f32.mrb[0].mxu0
        %3650 = vmatprep.mubr.f32.mxu0 0.0
        %3651 = vmatmul.mubr.f32.gmra.mrb[0].mxu0 %v3430
        %v3652 = vpop.f32.mrb[0].mxu0
        %v3653 = vadd.f32 %v435, %v3652
        %v3654 = vpop.f32.mrb[0].mxu0
        %3655 = vmatprep.mubr.f32.mxu0 0.0
        %3656 = vmatmul.mubr.f32.gmra.mrb[0].mxu0 %v3431
        %v3657 = vpop.f32.mrb[0].mxu0
        %v3658 = vadd.f32 %v436, %v3657
        %v3659 = vpop.f32.mrb[0].mxu0
        %3660 = vmatprep.mubr.f32.mxu0 0.0
        %3661 = vmatmul.mubr.f32.gmra.mrb[0].mxu0 %v3432
        %v3662 = vpop.f32.mrb[0].mxu0
        %v3663 = vadd.f32 %v437, %v3662
        %v3664 = vpop.f32.mrb[0].mxu0
        %3665 = vmatprep.mubr.f32.mxu0 0.0
        %3666 = vmatmul.mubr.f32.gmra.mrb[0].mxu0 %v3433
        %v3667 = vpop.f32.mrb[0].mxu0
        %v3668 = vadd.f32 %v438, %v3667
        %v3669 = vpop.f32.mrb[0].mxu0
        %3670 = vmatprep.mubr.f32.mxu0 0.0
        %3671 = vmatmul.mubr.f32.gmra.mrb[0].mxu0 %v3434
        %v3672 = vpop.f32.mrb[0].mxu0
        %v3673 = vadd.f32 %v439, %v3672
        %v3674 = vpop.f32.mrb[0].mxu0
        %3675 = vdwg.mxu0
        %v3676 = vmax.f32 %v3518, 0.0
        %v3677 = vmax.f32 %v3523, 0.0
        %v3678 = vmax.f32 %v3528, 0.0
        %v3679 = vmax.f32 %v3533, 0.0
        %v3680 = vmax.f32 %v3538, 0.0
        %v3681 = vmax.f32 %v3543, 0.0
        %v3682 = vmax.f32 %v3548, 0.0
        %v3683 = vmax.f32 %v3553, 0.0
        %v3684 = vmax.f32 %v3558, 0.0
        %v3685 = vmax.f32 %v3563, 0.0
        %v3686 = vmax.f32 %v3568, 0.0
        %v3687 = vmax.f32 %v3573, 0.0
        %v3688 = vmax.f32 %v3578, 0.0
        %v3689 = vmax.f32 %v3583, 0.0
        %v3690 = vmax.f32 %v3588, 0.0
        %v3691 = vmax.f32 %v3593, 0.0
        %v3692 = vmax.f32 %v3598, 0.0
        %v3693 = vmax.f32 %v3603, 0.0
        %v3694 = vmax.f32 %v3608, 0.0
        %v3695 = vmax.f32 %v3613, 0.0
        %v3696 = vmax.f32 %v3618, 0.0
        %v3697 = vmax.f32 %v3623, 0.0
        %v3698 = vmax.f32 %v3628, 0.0
        %v3699 = vmax.f32 %v3633, 0.0
        %v3700 = vmax.f32 %v3638, 0.0
        %v3701 = vmax.f32 %v3643, 0.0
        %v3702 = vmax.f32 %v3648, 0.0
        %v3703 = vmax.f32 %v3653, 0.0
        %v3704 = vmax.f32 %v3658, 0.0
        %v3705 = vmax.f32 %v3663, 0.0
        %v3706 = vmax.f32 %v3668, 0.0
        %v3707 = vmax.f32 %v3673, 0.0
        %3708 = vst [vmem:[%s361] sm:$0xff] %v3676
        %3709 = vst [vmem:[%s361 + $0x8] sm:$0xff] %v3677
        %3710 = vst [vmem:[%s361 + $0x10] sm:$0xff] %v3678
        %3711 = vst [vmem:[%s361 + $0x18] sm:$0xff] %v3679
        %3712 = vst [vmem:[%s361 + $0x20] sm:$0xff] %v3680
        %3713 = vst [vmem:[%s361 + $0x28] sm:$0xff] %v3681
        %3714 = vst [vmem:[%s361 + $0x30] sm:$0xff] %v3682
        %3715 = vst [vmem:[%s361 + $0x38] sm:$0xff] %v3683
        %3716 = vst [vmem:[%s361 + $0x40] sm:$0xff] %v3684
        %3717 = vst [vmem:[%s361 + $0x48] sm:$0xff] %v3685
        %3718 = vst [vmem:[%s361 + $0x50] sm:$0xff] %v3686
        %3719 = vst [vmem:[%s361 + $0x58] sm:$0xff] %v3687
        %3720 = vst [vmem:[%s361 + $0x60] sm:$0xff] %v3688
        %3721 = vst [vmem:[%s361 + $0x68] sm:$0xff] %v3689
        %3722 = vst [vmem:[%s361 + $0x70] sm:$0xff] %v3690
        %3723 = vst [vmem:[%s361 + $0x78] sm:$0xff] %v3691
        %3724 = vst [vmem:[%s361 + $0x80] sm:$0xff] %v3692
        %3725 = vst [vmem:[%s361 + $0x88] sm:$0xff] %v3693
        %3726 = vst [vmem:[%s361 + $0x90] sm:$0xff] %v3694
        %3727 = vst [vmem:[%s361 + $0x98] sm:$0xff] %v3695
        %3728 = vst [vmem:[%s361 + $0xa0] sm:$0xff] %v3696
        %3729 = vst [vmem:[%s361 + $0xa8] sm:$0xff] %v3697
        %3730 = vst [vmem:[%s361 + $0xb0] sm:$0xff] %v3698
        %3731 = vst [vmem:[%s361 + $0xb8] sm:$0xff] %v3699
        %3732 = vst [vmem:[%s361 + $0xc0] sm:$0xff] %v3700
        %3733 = vst [vmem:[%s361 + $0xc8] sm:$0xff] %v3701
        %3734 = vst [vmem:[%s361 + $0xd0] sm:$0xff] %v3702
        %3735 = vst [vmem:[%s361 + $0xd8] sm:$0xff] %v3703
        %3736 = vst [vmem:[%s361 + $0xe0] sm:$0xff] %v3704
        %3737 = vst [vmem:[%s361 + $0xe8] sm:$0xff] %v3705
        %3738 = vst [vmem:[%s361 + $0xf0] sm:$0xff] %v3706
        %3739 = vst [vmem:[%s361 + $0xf8] sm:$0xff] %v3707
        %s3740 = sand.u32 %s205, 1
        %s3741 = scalar_lea.sflag [#allocation5], %s3740
        %s3742 = sand.u32 %s205, 1
        %s3743 = smul.addr %s3742, 256
        %s3744 = scalar_lea.vmem [#allocation4], %s3743
        // Predicated region
        $region49: #{spike_bottleneck_forward_nhwc.1} parent=43 // pred_check
          %p3745 = pneg %p215
        $region50: #{spike_bottleneck_forward_nhwc.1} parent=43 // pred_check_branch
          %3747 = sbr.rel (%p3745) target = $region52
        $region51: #{spike_bottleneck_forward_nhwc.1} parent=43 // pred_region
          %s3748 = smul.u32 16, %s25
          %s3750 = ssub.s32 4096, 4096
          %3751 = vsyncadd %s3741, %s3750
          %s3752 = smul.addr %s3748, 2
          %s3753 = smul.addr %s24, 32
          %s3754 = sadd.s32 %s3752, %s3753
          %s3755 = smul.addr %s3754, 128
          %s3756 = scalar_lea.hbm %s6, %s3755
          %s3757 = sshll.u32 %s3744, 4
          %s3758 = int_to_ptr.vmem [resolvable:$true] %s3757
          %3763 = dma.vmem_to_hbm [thread:$0]  %s3758, 4096, %s3756, %s3741, 128, 128, 8
        $region52: #{spike_bottleneck_forward_nhwc.1} parent=43 // pred_fallthru
          _
      $region44: #{spike_bottleneck_forward_nhwc.1} parent=5 // pred_fallthru
        _
      %p3764 = scmp.le.s32.totalorder 2, %s15
      // Predicated region
      $region53: #{spike_bottleneck_forward_nhwc.1} parent=5 // pred_check
        %p3765 = pneg %p3764
      $region54: #{spike_bottleneck_forward_nhwc.1} parent=5 // pred_check_branch
        %3767 = sbr.rel (%p3765) target = $region56
      $region55: #{spike_bottleneck_forward_nhwc.1} parent=5 // pred_region
        %s3768 = ssub.s32 %s15, 2
        // Predicated region
        $region57: #{spike_bottleneck_forward_nhwc.1} parent=55 // pred_check
          %p3769 = pneg %p221
        $region58: #{spike_bottleneck_forward_nhwc.1} parent=55 // pred_check_branch
          %3771 = sbr.rel (%p3769) target = $region60
        $region59: #{spike_bottleneck_forward_nhwc.1} parent=55 // pred_region
          %s3772 = sand.u32 %s206, 1
          %s3773 = scalar_lea.sflag [#allocation5], %s3772
          %s3774 = sand.u32 %s206, 1
          %s3775 = smul.addr %s3774, 256
          %s3776 = scalar_lea.vmem [#allocation4], %s3775
          %3777 = dma.done %s3773, 4096
        $region60: #{spike_bottleneck_forward_nhwc.1} parent=55 // pred_fallthru
          _
      $region56: #{spike_bottleneck_forward_nhwc.1} parent=5 // pred_fallthru
        _
    $region6: #{spike_bottleneck_forward_nhwc.1} parent=1 // loop_footer
      %s19 = sadd.s32 1, %s15
    $region7: #{spike_bottleneck_forward_nhwc.1} parent=1 // loop_footer_branch
      %14 = sbr.rel target = $region3
    $region8: #{spike_bottleneck_forward_nhwc.1} parent=1 // loop_exit
      _
    %3778 = vsyncpa [#allocation5], 1
    %s3779 = scalar_lea.sflag [#allocation5], 1
    %3780 = vsyncpa %s3779, 1

</llo_original>
